<compile_context>
chip_gen: v7x
topology: tpu7x:2x2x1
jax: 0.10.0
libtpu: 0.0.40
codegen_flags: <defaults>
</compile_context>

<pallas_src>
import jax
import jax.numpy as jnp
from jax.experimental import pallas as pl
from jax.experimental.pallas import tpu as pltpu

# Small hyperparameters consistent with the module.
BATCH = 2
SEQ = 8
DIM = 32
DEPTH = 2
HEADS = 4
DIM_HEAD = 8
INNER = HEADS * DIM_HEAD          # 32 -> project_out=True (to_out Linear applies)
HIDDEN = 64
SCALE = DIM_HEAD ** -0.5
LN_EPS = 1e-5                     # nn.LayerNorm default eps
# TODO(synk): nn.Dropout layers are identity here (inference semantics, dropout=0.0).


def _layer_norm(x, gamma, beta):
    mu = jnp.mean(x, axis=-1, keepdims=True)
    xc = x - mu
    var = jnp.mean(xc * xc, axis=-1, keepdims=True)
    return xc * jax.lax.rsqrt(var + LN_EPS) * gamma + beta


def _gelu(x):
    # TODO(synk): torch nn.GELU() default is the exact erf formulation; the tanh
    # approximation is used here since erf has no guaranteed Mosaic lowering.
    c = 0.7978845608028654  # sqrt(2/pi)
    return 0.5 * x * (1.0 + jnp.tanh(c * (x + 0.044715 * x * x * x)))


def _transformer_kernel(x_ref, w_qkv_ref, w_out_ref, w_ff1_ref, w_ff2_ref,
                        vec_ref, b_ff1_ref, o_ref):
    """One batch element (grid axis 0) through all DEPTH layers, fully in VMEM."""
    x = x_ref[0]                                          # (SEQ, DIM)

    for l in range(DEPTH):                                # static unroll, DEPTH is small
        w_qkv = w_qkv_ref[l]                              # (DIM, 3*INNER)
        w_out = w_out_ref[l]                              # (INNER, DIM)
        w_ff1 = w_ff1_ref[l]                              # (DIM, HIDDEN)
        w_ff2 = w_ff2_ref[l]                              # (HIDDEN, DIM)
        vecs = vec_ref[l]                                 # (6, DIM) packed vector params
        b_ff1 = b_ff1_ref[l]                              # (1, HIDDEN)
        ln1_g, ln1_b = vecs[0:1, :], vecs[1:2, :]
        ln2_g, ln2_b = vecs[2:3, :], vecs[3:4, :]
        b_out, b_ff2 = vecs[4:5, :], vecs[5:6, :]

        # ---- x = PreNorm(Attention)(x) + x ----
        xn = _layer_norm(x, ln1_g, ln1_b)
        qkv = jnp.dot(xn, w_qkv, preferred_element_type=jnp.float32)   # (SEQ, 3*INNER)

        attn_proj = None
        for h in range(HEADS):
            q = qkv[:, h * DIM_HEAD:(h + 1) * DIM_HEAD]                        # (SEQ, dh)
            k = qkv[:, INNER + h * DIM_HEAD: INNER + (h + 1) * DIM_HEAD]       # (SEQ, dh)
            v = qkv[:, 2 * INNER + h * DIM_HEAD: 2 * INNER + (h + 1) * DIM_HEAD]
            # q @ k^T without an explicit transpose (MXU contraction on last dims).
            dots = jax.lax.dot_general(
                q, k, (((1,), (1,)), ((), ())),
                preferred_element_type=jnp.float32) * SCALE                    # (SEQ, SEQ)
            m = jnp.max(dots, axis=-1, keepdims=True)
            p = jnp.exp(dots - m)
            attn = p * pl.reciprocal(jnp.sum(p, axis=-1, keepdims=True), approx=True)
            out_h = jnp.dot(attn, v, preferred_element_type=jnp.float32)       # (SEQ, dh)
            # concat(out_h) @ W_out  ==  sum_h out_h @ W_out[h*dh:(h+1)*dh, :]
            proj_h = jnp.dot(out_h, w_out[h * DIM_HEAD:(h + 1) * DIM_HEAD, :],
                             preferred_element_type=jnp.float32)               # (SEQ, DIM)
            attn_proj = proj_h if attn_proj is None else attn_proj + proj_h

        x = x + attn_proj + b_out

        # ---- x = PreNorm(FeedForward)(x) + x ----
        xn2 = _layer_norm(x, ln2_g, ln2_b)
        h1 = jnp.dot(xn2, w_ff1, preferred_element_type=jnp.float32) + b_ff1   # (SEQ, HIDDEN)
        h1 = _gelu(h1)
        ff = jnp.dot(h1, w_ff2, preferred_element_type=jnp.float32) + b_ff2    # (SEQ, DIM)
        x = x + ff

    o_ref[0] = x


def transformer_blocks_forward(x, params, register_hook=False):
    # TODO(synk): register_hook (torch autograd attention-gradient hooks) has no
    # forward-pass equivalent; ignored.
    del register_hook
    b, n, d = x.shape
    xmap = lambda i: (i, 0, 0)     # one sequence per grid step
    wmap = lambda i: (0, 0, 0)     # weights: same (whole-array) block every step

    return pl.pallas_call(
        _transformer_kernel,
        out_shape=jax.ShapeDtypeStruct((b, n, d), jnp.float32),
        grid_spec=pltpu.PrefetchScalarGridSpec(
            num_scalar_prefetch=0,
            grid=(b,),
            in_specs=[
                pl.BlockSpec((1, n, d), xmap),
                pl.BlockSpec((DEPTH, DIM, 3 * INNER), wmap),
                pl.BlockSpec((DEPTH, INNER, DIM), wmap),
                pl.BlockSpec((DEPTH, DIM, HIDDEN), wmap),
                pl.BlockSpec((DEPTH, HIDDEN, DIM), wmap),
                pl.BlockSpec((DEPTH, 6, DIM), wmap),
                pl.BlockSpec((DEPTH, 1, HIDDEN), wmap),
            ],
            out_specs=pl.BlockSpec((1, n, d), xmap),
        ),
        compiler_params=pltpu.CompilerParams(
            dimension_semantics=("parallel",)),
    )(x, params["w_qkv"], params["w_out"], params["w_ff1"], params["w_ff2"],
      params["vecs_d"], params["b_ff1"])


def init_params(key):
    """PyTorch-default-style init. Linear weights stored as (in, out)."""
    def linear(k, fan_in, fan_out, bias=True):
        kw, kb = jax.random.split(k)
        bound = float(fan_in) ** -0.5
        w = jax.random.uniform(kw, (fan_in, fan_out), jnp.float32, -bound, bound)
        bvec = (jax.random.uniform(kb, (fan_out,), jnp.float32, -bound, bound)
                if bias else None)
        return w, bvec

    layer_keys = jax.random.split(key, DEPTH)
    w_qkv, w_out, w_ff1, w_ff2, vecs, b_ff1 = [], [], [], [], [], []
    for l in range(DEPTH):
        k1, k2, k3, k4 = jax.random.split(layer_keys[l], 4)
        wq, _ = linear(k1, DIM, 3 * INNER, bias=False)     # to_qkv (bias=False)
        wo, bo = linear(k2, INNER, DIM)                    # to_out[0]
        w1, b1 = linear(k3, DIM, HIDDEN)                   # FeedForward Linear 1
        w2, b2 = linear(k4, HIDDEN, DIM)                   # FeedForward Linear 2
        ln1_g, ln1_b = jnp.ones((DIM,)), jnp.zeros((DIM,))  # LayerNorm defaults
        ln2_g, ln2_b = jnp.ones((DIM,)), jnp.zeros((DIM,))
        w_qkv.append(wq); w_out.append(wo); w_ff1.append(w1); w_ff2.append(w2)
        vecs.append(jnp.stack([ln1_g, ln1_b, ln2_g, ln2_b, bo, b2], axis=0))
        b_ff1.append(b1[None, :])
    return dict(
        w_qkv=jnp.stack(w_qkv), w_out=jnp.stack(w_out),
        w_ff1=jnp.stack(w_ff1), w_ff2=jnp.stack(w_ff2),
        vecs_d=jnp.stack(vecs), b_ff1=jnp.stack(b_ff1))


def _reference(x, params):
    """Pure-JAX reference with identical math (tanh-GELU), for a sanity check."""
    def ln(z, g, bta):
        mu = z.mean(-1, keepdims=True)
        zc = z - mu
        var = (zc * zc).mean(-1, keepdims=True)
        return zc * jax.lax.rsqrt(var + LN_EPS) * g + bta

    for l in range(DEPTH):
        vecs = params["vecs_d"][l]
        ln1_g, ln1_b, ln2_g, ln2_b, b_out, b_ff2 = (vecs[i] for i in range(6))
        xn = ln(x, ln1_g, ln1_b)
        qkv = xn @ params["w_qkv"][l]
        q, k, v = jnp.split(qkv, 3, axis=-1)
        sh = lambda t: t.reshape(t.shape[0], t.shape[1], HEADS, DIM_HEAD).transpose(0, 2, 1, 3)
        qh, kh, vh = sh(q), sh(k), sh(v)
        dots = jnp.einsum('bhid,bhjd->bhij', qh, kh) * SCALE
        attn = jax.nn.softmax(dots, axis=-1)
        out = jnp.einsum('bhij,bhjd->bhid', attn, vh)
        out = out.transpose(0, 2, 1, 3).reshape(x.shape[0], x.shape[1], INNER)
        x = x + out @ params["w_out"][l] + b_out
        xn2 = ln(x, ln2_g, ln2_b)
        h1 = xn2 @ params["w_ff1"][l] + params["b_ff1"][l][0]
        h1 = 0.5 * h1 * (1.0 + jnp.tanh(0.7978845608028654 * (h1 + 0.044715 * h1 ** 3)))
        x = x + h1 @ params["w_ff2"][l] + b_ff2
    return x


if __name__ == "__main__":
    key = jax.random.PRNGKey(0)
    k_param, k_x = jax.random.split(key)

    params = init_params(k_param)
    x = jax.random.normal(k_x, (BATCH, SEQ, DIM), jnp.float32)

    fwd = jax.jit(transformer_blocks_forward)
    out = fwd(x, params)
    jax.block_until_ready(out)

    assert out.shape == (BATCH, SEQ, DIM)
    ref = _reference(x, params)
    max_err = float(jnp.max(jnp.abs(out - ref)))
    assert max_err < 5e-2, f"mismatch vs reference: max abs err {max_err}"
    print("KERNEL_OK")
</pallas_src>

<mosaic_0001>
module attributes {stable_mosaic.version = 11 : i64} {
  func.func @_transformer_kernel(%arg0: i32, %arg1: memref<1x8x32xf32, #tpu.memory_space<vmem>>, %arg2: memref<2x32x96xf32, #tpu.memory_space<vmem>>, %arg3: memref<2x32x32xf32, #tpu.memory_space<vmem>>, %arg4: memref<2x32x64xf32, #tpu.memory_space<vmem>>, %arg5: memref<2x64x32xf32, #tpu.memory_space<vmem>>, %arg6: memref<2x6x32xf32, #tpu.memory_space<vmem>>, %arg7: memref<2x1x64xf32, #tpu.memory_space<vmem>>, %arg8: memref<1x8x32xf32, #tpu.memory_space<vmem>>) attributes {dimension_semantics = [#tpu.dimension_semantics<parallel>], iteration_bounds = array<i64: 2>, scalar_prefetch = 0 : i64, scratch_operands = 0 : i64, tpu.core_type = #tpu.core_type<tc>, window_params = [{transform_indices = @transform_0, window_bounds = array<i64: 1, 8, 32>}, {pipeline_mode = #tpu.pipeline_mode<synchronous>, transform_indices = @transform_1, window_bounds = array<i64: 2, 32, 96>}, {pipeline_mode = #tpu.pipeline_mode<synchronous>, transform_indices = @transform_2, window_bounds = array<i64: 2, 32, 32>}, {pipeline_mode = #tpu.pipeline_mode<synchronous>, transform_indices = @transform_3, window_bounds = array<i64: 2, 32, 64>}, {pipeline_mode = #tpu.pipeline_mode<synchronous>, transform_indices = @transform_4, window_bounds = array<i64: 2, 64, 32>}, {pipeline_mode = #tpu.pipeline_mode<synchronous>, transform_indices = @transform_5, window_bounds = array<i64: 2, 6, 32>}, {pipeline_mode = #tpu.pipeline_mode<synchronous>, transform_indices = @transform_6, window_bounds = array<i64: 2, 1, 64>}, {transform_indices = @transform_7, window_bounds = array<i64: 1, 8, 32>}]} {
    %c0 = arith.constant 0 : index
    %c0_0 = arith.constant 0 : index
    %c0_1 = arith.constant 0 : index
    %0 = vector.load %arg1[%c0, %c0_0, %c0_1] : memref<1x8x32xf32, #tpu.memory_space<vmem>>, vector<1x8x32xf32>
    %1 = vector.shape_cast %0 : vector<1x8x32xf32> to vector<8x32xf32>
    %c0_2 = arith.constant 0 : index
    %c0_3 = arith.constant 0 : index
    %c0_4 = arith.constant 0 : index
    %2 = vector.load %arg2[%c0_2, %c0_3, %c0_4] : memref<2x32x96xf32, #tpu.memory_space<vmem>>, vector<1x32x96xf32>
    %3 = vector.shape_cast %2 : vector<1x32x96xf32> to vector<32x96xf32>
    %c0_5 = arith.constant 0 : index
    %c0_6 = arith.constant 0 : index
    %c0_7 = arith.constant 0 : index
    %4 = vector.load %arg3[%c0_5, %c0_6, %c0_7] : memref<2x32x32xf32, #tpu.memory_space<vmem>>, vector<1x32x32xf32>
    %5 = vector.shape_cast %4 : vector<1x32x32xf32> to vector<32x32xf32>
    %c0_8 = arith.constant 0 : index
    %c0_9 = arith.constant 0 : index
    %c0_10 = arith.constant 0 : index
    %6 = vector.load %arg4[%c0_8, %c0_9, %c0_10] : memref<2x32x64xf32, #tpu.memory_space<vmem>>, vector<1x32x64xf32>
    %7 = vector.shape_cast %6 : vector<1x32x64xf32> to vector<32x64xf32>
    %c0_11 = arith.constant 0 : index
    %c0_12 = arith.constant 0 : index
    %c0_13 = arith.constant 0 : index
    %8 = vector.load %arg5[%c0_11, %c0_12, %c0_13] : memref<2x64x32xf32, #tpu.memory_space<vmem>>, vector<1x64x32xf32>
    %9 = vector.shape_cast %8 : vector<1x64x32xf32> to vector<64x32xf32>
    %c0_14 = arith.constant 0 : index
    %c0_15 = arith.constant 0 : index
    %c0_16 = arith.constant 0 : index
    %10 = vector.load %arg6[%c0_14, %c0_15, %c0_16] : memref<2x6x32xf32, #tpu.memory_space<vmem>>, vector<1x6x32xf32>
    %11 = vector.shape_cast %10 : vector<1x6x32xf32> to vector<6x32xf32>
    %c0_17 = arith.constant 0 : index
    %c0_18 = arith.constant 0 : index
    %c0_19 = arith.constant 0 : index
    %12 = vector.load %arg7[%c0_17, %c0_18, %c0_19] : memref<2x1x64xf32, #tpu.memory_space<vmem>>, vector<1x1x64xf32>
    %13 = vector.shape_cast %12 : vector<1x1x64xf32> to vector<1x64xf32>
    %14 = vector.extract_strided_slice %11 {offsets = [0, 0], sizes = [1, 32], strides = [1, 1]} : vector<6x32xf32> to vector<1x32xf32>
    %15 = vector.extract_strided_slice %11 {offsets = [1, 0], sizes = [1, 32], strides = [1, 1]} : vector<6x32xf32> to vector<1x32xf32>
    %16 = vector.extract_strided_slice %11 {offsets = [2, 0], sizes = [1, 32], strides = [1, 1]} : vector<6x32xf32> to vector<1x32xf32>
    %17 = vector.extract_strided_slice %11 {offsets = [3, 0], sizes = [1, 32], strides = [1, 1]} : vector<6x32xf32> to vector<1x32xf32>
    %18 = vector.extract_strided_slice %11 {offsets = [4, 0], sizes = [1, 32], strides = [1, 1]} : vector<6x32xf32> to vector<1x32xf32>
    %19 = vector.extract_strided_slice %11 {offsets = [5, 0], sizes = [1, 32], strides = [1, 1]} : vector<6x32xf32> to vector<1x32xf32>
    %cst = arith.constant dense<0.000000e+00> : vector<8xf32>
    %20 = vector.multi_reduction <add>, %1, %cst [1] : vector<8x32xf32> to vector<8xf32>
    %21 = vector.shape_cast %20 : vector<8xf32> to vector<8x1xf32>
    %cst_20 = arith.constant 3.200000e+01 : f32
    %22 = vector.broadcast %cst_20 : f32 to vector<8x1xf32>
    %23 = arith.divf %21, %22 : vector<8x1xf32>
    %24 = vector.broadcast %23 : vector<8x1xf32> to vector<8x32xf32>
    %25 = arith.subf %1, %24 : vector<8x32xf32>
    %26 = arith.mulf %25, %25 : vector<8x32xf32>
    %cst_21 = arith.constant dense<0.000000e+00> : vector<8xf32>
    %27 = vector.multi_reduction <add>, %26, %cst_21 [1] : vector<8x32xf32> to vector<8xf32>
    %28 = vector.shape_cast %27 : vector<8xf32> to vector<8x1xf32>
    %cst_22 = arith.constant 3.200000e+01 : f32
    %29 = vector.broadcast %cst_22 : f32 to vector<8x1xf32>
    %30 = arith.divf %28, %29 : vector<8x1xf32>
    %cst_23 = arith.constant 9.99999974E-6 : f32
    %31 = vector.broadcast %cst_23 : f32 to vector<8x1xf32>
    %32 = arith.addf %30, %31 : vector<8x1xf32>
    %33 = math.rsqrt %32 : vector<8x1xf32>
    %34 = vector.broadcast %33 : vector<8x1xf32> to vector<8x32xf32>
    %35 = arith.mulf %25, %34 : vector<8x32xf32>
    %36 = vector.broadcast %14 : vector<1x32xf32> to vector<8x32xf32>
    %37 = arith.mulf %35, %36 : vector<8x32xf32>
    %38 = vector.broadcast %15 : vector<1x32xf32> to vector<8x32xf32>
    %39 = arith.addf %37, %38 : vector<8x32xf32>
    %cst_24 = arith.constant dense<0.000000e+00> : vector<8x96xf32>
    %40 = tpu.matmul %39, %3, %cst_24 {dimension_numbers = #tpu.dot_dimension_numbers<[1], [0], [0], [1], [0, 0, 1, 1], [], []>} : vector<8x32xf32>, vector<32x96xf32>, vector<8x96xf32> -> vector<8x96xf32>
    %41 = vector.extract_strided_slice %40 {offsets = [0, 0], sizes = [8, 8], strides = [1, 1]} : vector<8x96xf32> to vector<8x8xf32>
    %42 = vector.extract_strided_slice %40 {offsets = [0, 32], sizes = [8, 8], strides = [1, 1]} : vector<8x96xf32> to vector<8x8xf32>
    %43 = vector.extract_strided_slice %40 {offsets = [0, 64], sizes = [8, 8], strides = [1, 1]} : vector<8x96xf32> to vector<8x8xf32>
    %cst_25 = arith.constant dense<0.000000e+00> : vector<8x8xf32>
    %44 = tpu.matmul %41, %42, %cst_25 {dimension_numbers = #tpu.dot_dimension_numbers<[1], [1], [0], [0], [0, 0, 1, 0], [], []>} : vector<8x8xf32>, vector<8x8xf32>, vector<8x8xf32> -> vector<8x8xf32>
    %cst_26 = arith.constant 0.353553385 : f32
    %45 = vector.broadcast %cst_26 : f32 to vector<8x8xf32>
    %46 = arith.mulf %44, %45 : vector<8x8xf32>
    %cst_27 = arith.constant dense<0xFF800000> : vector<8xf32>
    %47 = vector.multi_reduction <maximumf>, %46, %cst_27 [1] : vector<8x8xf32> to vector<8xf32>
    %48 = vector.shape_cast %47 : vector<8xf32> to vector<8x1xf32>
    %49 = vector.broadcast %48 : vector<8x1xf32> to vector<8x8xf32>
    %50 = arith.subf %46, %49 : vector<8x8xf32>
    %51 = math.exp %50 : vector<8x8xf32>
    %cst_28 = arith.constant dense<0.000000e+00> : vector<8xf32>
    %52 = vector.multi_reduction <add>, %51, %cst_28 [1] : vector<8x8xf32> to vector<8xf32>
    %53 = vector.shape_cast %52 : vector<8xf32> to vector<8x1xf32>
    %54 = tpu.reciprocal %53 {approx = true} : vector<8x1xf32> -> vector<8x1xf32>
    %55 = vector.broadcast %54 : vector<8x1xf32> to vector<8x8xf32>
    %56 = arith.mulf %51, %55 : vector<8x8xf32>
    %cst_29 = arith.constant dense<0.000000e+00> : vector<8x8xf32>
    %57 = tpu.matmul %56, %43, %cst_29 {dimension_numbers = #tpu.dot_dimension_numbers<[1], [0], [0], [1], [0, 0, 1, 1], [], []>} : vector<8x8xf32>, vector<8x8xf32>, vector<8x8xf32> -> vector<8x8xf32>
    %58 = vector.extract_strided_slice %5 {offsets = [0, 0], sizes = [8, 32], strides = [1, 1]} : vector<32x32xf32> to vector<8x32xf32>
    %cst_30 = arith.constant dense<0.000000e+00> : vector<8x32xf32>
    %59 = tpu.matmul %57, %58, %cst_30 {dimension_numbers = #tpu.dot_dimension_numbers<[1], [0], [0], [1], [0, 0, 1, 1], [], []>} : vector<8x8xf32>, vector<8x32xf32>, vector<8x32xf32> -> vector<8x32xf32>
    %60 = vector.extract_strided_slice %40 {offsets = [0, 8], sizes = [8, 8], strides = [1, 1]} : vector<8x96xf32> to vector<8x8xf32>
    %61 = vector.extract_strided_slice %40 {offsets = [0, 40], sizes = [8, 8], strides = [1, 1]} : vector<8x96xf32> to vector<8x8xf32>
    %62 = vector.extract_strided_slice %40 {offsets = [0, 72], sizes = [8, 8], strides = [1, 1]} : vector<8x96xf32> to vector<8x8xf32>
    %cst_31 = arith.constant dense<0.000000e+00> : vector<8x8xf32>
    %63 = tpu.matmul %60, %61, %cst_31 {dimension_numbers = #tpu.dot_dimension_numbers<[1], [1], [0], [0], [0, 0, 1, 0], [], []>} : vector<8x8xf32>, vector<8x8xf32>, vector<8x8xf32> -> vector<8x8xf32>
    %cst_32 = arith.constant 0.353553385 : f32
    %64 = vector.broadcast %cst_32 : f32 to vector<8x8xf32>
    %65 = arith.mulf %63, %64 : vector<8x8xf32>
    %cst_33 = arith.constant dense<0xFF800000> : vector<8xf32>
    %66 = vector.multi_reduction <maximumf>, %65, %cst_33 [1] : vector<8x8xf32> to vector<8xf32>
    %67 = vector.shape_cast %66 : vector<8xf32> to vector<8x1xf32>
    %68 = vector.broadcast %67 : vector<8x1xf32> to vector<8x8xf32>
    %69 = arith.subf %65, %68 : vector<8x8xf32>
    %70 = math.exp %69 : vector<8x8xf32>
    %cst_34 = arith.constant dense<0.000000e+00> : vector<8xf32>
    %71 = vector.multi_reduction <add>, %70, %cst_34 [1] : vector<8x8xf32> to vector<8xf32>
    %72 = vector.shape_cast %71 : vector<8xf32> to vector<8x1xf32>
    %73 = tpu.reciprocal %72 {approx = true} : vector<8x1xf32> -> vector<8x1xf32>
    %74 = vector.broadcast %73 : vector<8x1xf32> to vector<8x8xf32>
    %75 = arith.mulf %70, %74 : vector<8x8xf32>
    %cst_35 = arith.constant dense<0.000000e+00> : vector<8x8xf32>
    %76 = tpu.matmul %75, %62, %cst_35 {dimension_numbers = #tpu.dot_dimension_numbers<[1], [0], [0], [1], [0, 0, 1, 1], [], []>} : vector<8x8xf32>, vector<8x8xf32>, vector<8x8xf32> -> vector<8x8xf32>
    %77 = vector.extract_strided_slice %5 {offsets = [8, 0], sizes = [8, 32], strides = [1, 1]} : vector<32x32xf32> to vector<8x32xf32>
    %cst_36 = arith.constant dense<0.000000e+00> : vector<8x32xf32>
    %78 = tpu.matmul %76, %77, %cst_36 {dimension_numbers = #tpu.dot_dimension_numbers<[1], [0], [0], [1], [0, 0, 1, 1], [], []>} : vector<8x8xf32>, vector<8x32xf32>, vector<8x32xf32> -> vector<8x32xf32>
    %79 = arith.addf %59, %78 : vector<8x32xf32>
    %80 = vector.extract_strided_slice %40 {offsets = [0, 16], sizes = [8, 8], strides = [1, 1]} : vector<8x96xf32> to vector<8x8xf32>
    %81 = vector.extract_strided_slice %40 {offsets = [0, 48], sizes = [8, 8], strides = [1, 1]} : vector<8x96xf32> to vector<8x8xf32>
    %82 = vector.extract_strided_slice %40 {offsets = [0, 80], sizes = [8, 8], strides = [1, 1]} : vector<8x96xf32> to vector<8x8xf32>
    %cst_37 = arith.constant dense<0.000000e+00> : vector<8x8xf32>
    %83 = tpu.matmul %80, %81, %cst_37 {dimension_numbers = #tpu.dot_dimension_numbers<[1], [1], [0], [0], [0, 0, 1, 0], [], []>} : vector<8x8xf32>, vector<8x8xf32>, vector<8x8xf32> -> vector<8x8xf32>
    %cst_38 = arith.constant 0.353553385 : f32
    %84 = vector.broadcast %cst_38 : f32 to vector<8x8xf32>
    %85 = arith.mulf %83, %84 : vector<8x8xf32>
    %cst_39 = arith.constant dense<0xFF800000> : vector<8xf32>
    %86 = vector.multi_reduction <maximumf>, %85, %cst_39 [1] : vector<8x8xf32> to vector<8xf32>
    %87 = vector.shape_cast %86 : vector<8xf32> to vector<8x1xf32>
    %88 = vector.broadcast %87 : vector<8x1xf32> to vector<8x8xf32>
    %89 = arith.subf %85, %88 : vector<8x8xf32>
    %90 = math.exp %89 : vector<8x8xf32>
    %cst_40 = arith.constant dense<0.000000e+00> : vector<8xf32>
    %91 = vector.multi_reduction <add>, %90, %cst_40 [1] : vector<8x8xf32> to vector<8xf32>
    %92 = vector.shape_cast %91 : vector<8xf32> to vector<8x1xf32>
    %93 = tpu.reciprocal %92 {approx = true} : vector<8x1xf32> -> vector<8x1xf32>
    %94 = vector.broadcast %93 : vector<8x1xf32> to vector<8x8xf32>
    %95 = arith.mulf %90, %94 : vector<8x8xf32>
    %cst_41 = arith.constant dense<0.000000e+00> : vector<8x8xf32>
    %96 = tpu.matmul %95, %82, %cst_41 {dimension_numbers = #tpu.dot_dimension_numbers<[1], [0], [0], [1], [0, 0, 1, 1], [], []>} : vector<8x8xf32>, vector<8x8xf32>, vector<8x8xf32> -> vector<8x8xf32>
    %97 = vector.extract_strided_slice %5 {offsets = [16, 0], sizes = [8, 32], strides = [1, 1]} : vector<32x32xf32> to vector<8x32xf32>
    %cst_42 = arith.constant dense<0.000000e+00> : vector<8x32xf32>
    %98 = tpu.matmul %96, %97, %cst_42 {dimension_numbers = #tpu.dot_dimension_numbers<[1], [0], [0], [1], [0, 0, 1, 1], [], []>} : vector<8x8xf32>, vector<8x32xf32>, vector<8x32xf32> -> vector<8x32xf32>
    %99 = arith.addf %79, %98 : vector<8x32xf32>
    %100 = vector.extract_strided_slice %40 {offsets = [0, 24], sizes = [8, 8], strides = [1, 1]} : vector<8x96xf32> to vector<8x8xf32>
    %101 = vector.extract_strided_slice %40 {offsets = [0, 56], sizes = [8, 8], strides = [1, 1]} : vector<8x96xf32> to vector<8x8xf32>
    %102 = vector.extract_strided_slice %40 {offsets = [0, 88], sizes = [8, 8], strides = [1, 1]} : vector<8x96xf32> to vector<8x8xf32>
    %cst_43 = arith.constant dense<0.000000e+00> : vector<8x8xf32>
    %103 = tpu.matmul %100, %101, %cst_43 {dimension_numbers = #tpu.dot_dimension_numbers<[1], [1], [0], [0], [0, 0, 1, 0], [], []>} : vector<8x8xf32>, vector<8x8xf32>, vector<8x8xf32> -> vector<8x8xf32>
    %cst_44 = arith.constant 0.353553385 : f32
    %104 = vector.broadcast %cst_44 : f32 to vector<8x8xf32>
    %105 = arith.mulf %103, %104 : vector<8x8xf32>
    %cst_45 = arith.constant dense<0xFF800000> : vector<8xf32>
    %106 = vector.multi_reduction <maximumf>, %105, %cst_45 [1] : vector<8x8xf32> to vector<8xf32>
    %107 = vector.shape_cast %106 : vector<8xf32> to vector<8x1xf32>
    %108 = vector.broadcast %107 : vector<8x1xf32> to vector<8x8xf32>
    %109 = arith.subf %105, %108 : vector<8x8xf32>
    %110 = math.exp %109 : vector<8x8xf32>
    %cst_46 = arith.constant dense<0.000000e+00> : vector<8xf32>
    %111 = vector.multi_reduction <add>, %110, %cst_46 [1] : vector<8x8xf32> to vector<8xf32>
    %112 = vector.shape_cast %111 : vector<8xf32> to vector<8x1xf32>
    %113 = tpu.reciprocal %112 {approx = true} : vector<8x1xf32> -> vector<8x1xf32>
    %114 = vector.broadcast %113 : vector<8x1xf32> to vector<8x8xf32>
    %115 = arith.mulf %110, %114 : vector<8x8xf32>
    %cst_47 = arith.constant dense<0.000000e+00> : vector<8x8xf32>
    %116 = tpu.matmul %115, %102, %cst_47 {dimension_numbers = #tpu.dot_dimension_numbers<[1], [0], [0], [1], [0, 0, 1, 1], [], []>} : vector<8x8xf32>, vector<8x8xf32>, vector<8x8xf32> -> vector<8x8xf32>
    %117 = vector.extract_strided_slice %5 {offsets = [24, 0], sizes = [8, 32], strides = [1, 1]} : vector<32x32xf32> to vector<8x32xf32>
    %cst_48 = arith.constant dense<0.000000e+00> : vector<8x32xf32>
    %118 = tpu.matmul %116, %117, %cst_48 {dimension_numbers = #tpu.dot_dimension_numbers<[1], [0], [0], [1], [0, 0, 1, 1], [], []>} : vector<8x8xf32>, vector<8x32xf32>, vector<8x32xf32> -> vector<8x32xf32>
    %119 = arith.addf %99, %118 : vector<8x32xf32>
    %120 = arith.addf %1, %119 : vector<8x32xf32>
    %121 = vector.broadcast %18 : vector<1x32xf32> to vector<8x32xf32>
    %122 = arith.addf %120, %121 : vector<8x32xf32>
    %cst_49 = arith.constant dense<0.000000e+00> : vector<8xf32>
    %123 = vector.multi_reduction <add>, %122, %cst_49 [1] : vector<8x32xf32> to vector<8xf32>
    %124 = vector.shape_cast %123 : vector<8xf32> to vector<8x1xf32>
    %cst_50 = arith.constant 3.200000e+01 : f32
    %125 = vector.broadcast %cst_50 : f32 to vector<8x1xf32>
    %126 = arith.divf %124, %125 : vector<8x1xf32>
    %127 = vector.broadcast %126 : vector<8x1xf32> to vector<8x32xf32>
    %128 = arith.subf %122, %127 : vector<8x32xf32>
    %129 = arith.mulf %128, %128 : vector<8x32xf32>
    %cst_51 = arith.constant dense<0.000000e+00> : vector<8xf32>
    %130 = vector.multi_reduction <add>, %129, %cst_51 [1] : vector<8x32xf32> to vector<8xf32>
    %131 = vector.shape_cast %130 : vector<8xf32> to vector<8x1xf32>
    %cst_52 = arith.constant 3.200000e+01 : f32
    %132 = vector.broadcast %cst_52 : f32 to vector<8x1xf32>
    %133 = arith.divf %131, %132 : vector<8x1xf32>
    %cst_53 = arith.constant 9.99999974E-6 : f32
    %134 = vector.broadcast %cst_53 : f32 to vector<8x1xf32>
    %135 = arith.addf %133, %134 : vector<8x1xf32>
    %136 = math.rsqrt %135 : vector<8x1xf32>
    %137 = vector.broadcast %136 : vector<8x1xf32> to vector<8x32xf32>
    %138 = arith.mulf %128, %137 : vector<8x32xf32>
    %139 = vector.broadcast %16 : vector<1x32xf32> to vector<8x32xf32>
    %140 = arith.mulf %138, %139 : vector<8x32xf32>
    %141 = vector.broadcast %17 : vector<1x32xf32> to vector<8x32xf32>
    %142 = arith.addf %140, %141 : vector<8x32xf32>
    %cst_54 = arith.constant dense<0.000000e+00> : vector<8x64xf32>
    %143 = tpu.matmul %142, %7, %cst_54 {dimension_numbers = #tpu.dot_dimension_numbers<[1], [0], [0], [1], [0, 0, 1, 1], [], []>} : vector<8x32xf32>, vector<32x64xf32>, vector<8x64xf32> -> vector<8x64xf32>
    %144 = vector.broadcast %13 : vector<1x64xf32> to vector<8x64xf32>
    %145 = arith.addf %143, %144 : vector<8x64xf32>
    %cst_55 = arith.constant 5.000000e-01 : f32
    %146 = vector.broadcast %cst_55 : f32 to vector<8x64xf32>
    %147 = arith.mulf %146, %145 : vector<8x64xf32>
    %cst_56 = arith.constant 4.471500e-02 : f32
    %148 = vector.broadcast %cst_56 : f32 to vector<8x64xf32>
    %149 = arith.mulf %148, %145 : vector<8x64xf32>
    %150 = arith.mulf %149, %145 : vector<8x64xf32>
    %151 = arith.mulf %150, %145 : vector<8x64xf32>
    %152 = arith.addf %145, %151 : vector<8x64xf32>
    %cst_57 = arith.constant 0.797884583 : f32
    %153 = vector.broadcast %cst_57 : f32 to vector<8x64xf32>
    %154 = arith.mulf %153, %152 : vector<8x64xf32>
    %155 = math.tanh %154 : vector<8x64xf32>
    %cst_58 = arith.constant 1.000000e+00 : f32
    %156 = vector.broadcast %cst_58 : f32 to vector<8x64xf32>
    %157 = arith.addf %156, %155 : vector<8x64xf32>
    %158 = arith.mulf %147, %157 : vector<8x64xf32>
    %cst_59 = arith.constant dense<0.000000e+00> : vector<8x32xf32>
    %159 = tpu.matmul %158, %9, %cst_59 {dimension_numbers = #tpu.dot_dimension_numbers<[1], [0], [0], [1], [0, 0, 1, 1], [], []>} : vector<8x64xf32>, vector<64x32xf32>, vector<8x32xf32> -> vector<8x32xf32>
    %160 = vector.broadcast %19 : vector<1x32xf32> to vector<8x32xf32>
    %161 = arith.addf %159, %160 : vector<8x32xf32>
    %162 = arith.addf %122, %161 : vector<8x32xf32>
    %c1 = arith.constant 1 : index
    %c0_60 = arith.constant 0 : index
    %c0_61 = arith.constant 0 : index
    %163 = vector.load %arg2[%c1, %c0_60, %c0_61] : memref<2x32x96xf32, #tpu.memory_space<vmem>>, vector<1x32x96xf32>
    %164 = vector.shape_cast %163 : vector<1x32x96xf32> to vector<32x96xf32>
    %c1_62 = arith.constant 1 : index
    %c0_63 = arith.constant 0 : index
    %c0_64 = arith.constant 0 : index
    %165 = vector.load %arg3[%c1_62, %c0_63, %c0_64] : memref<2x32x32xf32, #tpu.memory_space<vmem>>, vector<1x32x32xf32>
    %166 = vector.shape_cast %165 : vector<1x32x32xf32> to vector<32x32xf32>
    %c1_65 = arith.constant 1 : index
    %c0_66 = arith.constant 0 : index
    %c0_67 = arith.constant 0 : index
    %167 = vector.load %arg4[%c1_65, %c0_66, %c0_67] : memref<2x32x64xf32, #tpu.memory_space<vmem>>, vector<1x32x64xf32>
    %168 = vector.shape_cast %167 : vector<1x32x64xf32> to vector<32x64xf32>
    %c1_68 = arith.constant 1 : index
    %c0_69 = arith.constant 0 : index
    %c0_70 = arith.constant 0 : index
    %169 = vector.load %arg5[%c1_68, %c0_69, %c0_70] : memref<2x64x32xf32, #tpu.memory_space<vmem>>, vector<1x64x32xf32>
    %170 = vector.shape_cast %169 : vector<1x64x32xf32> to vector<64x32xf32>
    %c1_71 = arith.constant 1 : index
    %c0_72 = arith.constant 0 : index
    %c0_73 = arith.constant 0 : index
    %171 = vector.load %arg6[%c1_71, %c0_72, %c0_73] : memref<2x6x32xf32, #tpu.memory_space<vmem>>, vector<1x6x32xf32>
    %172 = vector.shape_cast %171 : vector<1x6x32xf32> to vector<6x32xf32>
    %c1_74 = arith.constant 1 : index
    %c0_75 = arith.constant 0 : index
    %c0_76 = arith.constant 0 : index
    %173 = vector.load %arg7[%c1_74, %c0_75, %c0_76] : memref<2x1x64xf32, #tpu.memory_space<vmem>>, vector<1x1x64xf32>
    %174 = vector.shape_cast %173 : vector<1x1x64xf32> to vector<1x64xf32>
    %175 = vector.extract_strided_slice %172 {offsets = [0, 0], sizes = [1, 32], strides = [1, 1]} : vector<6x32xf32> to vector<1x32xf32>
    %176 = vector.extract_strided_slice %172 {offsets = [1, 0], sizes = [1, 32], strides = [1, 1]} : vector<6x32xf32> to vector<1x32xf32>
    %177 = vector.extract_strided_slice %172 {offsets = [2, 0], sizes = [1, 32], strides = [1, 1]} : vector<6x32xf32> to vector<1x32xf32>
    %178 = vector.extract_strided_slice %172 {offsets = [3, 0], sizes = [1, 32], strides = [1, 1]} : vector<6x32xf32> to vector<1x32xf32>
    %179 = vector.extract_strided_slice %172 {offsets = [4, 0], sizes = [1, 32], strides = [1, 1]} : vector<6x32xf32> to vector<1x32xf32>
    %180 = vector.extract_strided_slice %172 {offsets = [5, 0], sizes = [1, 32], strides = [1, 1]} : vector<6x32xf32> to vector<1x32xf32>
    %cst_77 = arith.constant dense<0.000000e+00> : vector<8xf32>
    %181 = vector.multi_reduction <add>, %162, %cst_77 [1] : vector<8x32xf32> to vector<8xf32>
    %182 = vector.shape_cast %181 : vector<8xf32> to vector<8x1xf32>
    %cst_78 = arith.constant 3.200000e+01 : f32
    %183 = vector.broadcast %cst_78 : f32 to vector<8x1xf32>
    %184 = arith.divf %182, %183 : vector<8x1xf32>
    %185 = vector.broadcast %184 : vector<8x1xf32> to vector<8x32xf32>
    %186 = arith.subf %162, %185 : vector<8x32xf32>
    %187 = arith.mulf %186, %186 : vector<8x32xf32>
    %cst_79 = arith.constant dense<0.000000e+00> : vector<8xf32>
    %188 = vector.multi_reduction <add>, %187, %cst_79 [1] : vector<8x32xf32> to vector<8xf32>
    %189 = vector.shape_cast %188 : vector<8xf32> to vector<8x1xf32>
    %cst_80 = arith.constant 3.200000e+01 : f32
    %190 = vector.broadcast %cst_80 : f32 to vector<8x1xf32>
    %191 = arith.divf %189, %190 : vector<8x1xf32>
    %cst_81 = arith.constant 9.99999974E-6 : f32
    %192 = vector.broadcast %cst_81 : f32 to vector<8x1xf32>
    %193 = arith.addf %191, %192 : vector<8x1xf32>
    %194 = math.rsqrt %193 : vector<8x1xf32>
    %195 = vector.broadcast %194 : vector<8x1xf32> to vector<8x32xf32>
    %196 = arith.mulf %186, %195 : vector<8x32xf32>
    %197 = vector.broadcast %175 : vector<1x32xf32> to vector<8x32xf32>
    %198 = arith.mulf %196, %197 : vector<8x32xf32>
    %199 = vector.broadcast %176 : vector<1x32xf32> to vector<8x32xf32>
    %200 = arith.addf %198, %199 : vector<8x32xf32>
    %cst_82 = arith.constant dense<0.000000e+00> : vector<8x96xf32>
    %201 = tpu.matmul %200, %164, %cst_82 {dimension_numbers = #tpu.dot_dimension_numbers<[1], [0], [0], [1], [0, 0, 1, 1], [], []>} : vector<8x32xf32>, vector<32x96xf32>, vector<8x96xf32> -> vector<8x96xf32>
    %202 = vector.extract_strided_slice %201 {offsets = [0, 0], sizes = [8, 8], strides = [1, 1]} : vector<8x96xf32> to vector<8x8xf32>
    %203 = vector.extract_strided_slice %201 {offsets = [0, 32], sizes = [8, 8], strides = [1, 1]} : vector<8x96xf32> to vector<8x8xf32>
    %204 = vector.extract_strided_slice %201 {offsets = [0, 64], sizes = [8, 8], strides = [1, 1]} : vector<8x96xf32> to vector<8x8xf32>
    %cst_83 = arith.constant dense<0.000000e+00> : vector<8x8xf32>
    %205 = tpu.matmul %202, %203, %cst_83 {dimension_numbers = #tpu.dot_dimension_numbers<[1], [1], [0], [0], [0, 0, 1, 0], [], []>} : vector<8x8xf32>, vector<8x8xf32>, vector<8x8xf32> -> vector<8x8xf32>
    %cst_84 = arith.constant 0.353553385 : f32
    %206 = vector.broadcast %cst_84 : f32 to vector<8x8xf32>
    %207 = arith.mulf %205, %206 : vector<8x8xf32>
    %cst_85 = arith.constant dense<0xFF800000> : vector<8xf32>
    %208 = vector.multi_reduction <maximumf>, %207, %cst_85 [1] : vector<8x8xf32> to vector<8xf32>
    %209 = vector.shape_cast %208 : vector<8xf32> to vector<8x1xf32>
    %210 = vector.broadcast %209 : vector<8x1xf32> to vector<8x8xf32>
    %211 = arith.subf %207, %210 : vector<8x8xf32>
    %212 = math.exp %211 : vector<8x8xf32>
    %cst_86 = arith.constant dense<0.000000e+00> : vector<8xf32>
    %213 = vector.multi_reduction <add>, %212, %cst_86 [1] : vector<8x8xf32> to vector<8xf32>
    %214 = vector.shape_cast %213 : vector<8xf32> to vector<8x1xf32>
    %215 = tpu.reciprocal %214 {approx = true} : vector<8x1xf32> -> vector<8x1xf32>
    %216 = vector.broadcast %215 : vector<8x1xf32> to vector<8x8xf32>
    %217 = arith.mulf %212, %216 : vector<8x8xf32>
    %cst_87 = arith.constant dense<0.000000e+00> : vector<8x8xf32>
    %218 = tpu.matmul %217, %204, %cst_87 {dimension_numbers = #tpu.dot_dimension_numbers<[1], [0], [0], [1], [0, 0, 1, 1], [], []>} : vector<8x8xf32>, vector<8x8xf32>, vector<8x8xf32> -> vector<8x8xf32>
    %219 = vector.extract_strided_slice %166 {offsets = [0, 0], sizes = [8, 32], strides = [1, 1]} : vector<32x32xf32> to vector<8x32xf32>
    %cst_88 = arith.constant dense<0.000000e+00> : vector<8x32xf32>
    %220 = tpu.matmul %218, %219, %cst_88 {dimension_numbers = #tpu.dot_dimension_numbers<[1], [0], [0], [1], [0, 0, 1, 1], [], []>} : vector<8x8xf32>, vector<8x32xf32>, vector<8x32xf32> -> vector<8x32xf32>
    %221 = vector.extract_strided_slice %201 {offsets = [0, 8], sizes = [8, 8], strides = [1, 1]} : vector<8x96xf32> to vector<8x8xf32>
    %222 = vector.extract_strided_slice %201 {offsets = [0, 40], sizes = [8, 8], strides = [1, 1]} : vector<8x96xf32> to vector<8x8xf32>
    %223 = vector.extract_strided_slice %201 {offsets = [0, 72], sizes = [8, 8], strides = [1, 1]} : vector<8x96xf32> to vector<8x8xf32>
    %cst_89 = arith.constant dense<0.000000e+00> : vector<8x8xf32>
    %224 = tpu.matmul %221, %222, %cst_89 {dimension_numbers = #tpu.dot_dimension_numbers<[1], [1], [0], [0], [0, 0, 1, 0], [], []>} : vector<8x8xf32>, vector<8x8xf32>, vector<8x8xf32> -> vector<8x8xf32>
    %cst_90 = arith.constant 0.353553385 : f32
    %225 = vector.broadcast %cst_90 : f32 to vector<8x8xf32>
    %226 = arith.mulf %224, %225 : vector<8x8xf32>
    %cst_91 = arith.constant dense<0xFF800000> : vector<8xf32>
    %227 = vector.multi_reduction <maximumf>, %226, %cst_91 [1] : vector<8x8xf32> to vector<8xf32>
    %228 = vector.shape_cast %227 : vector<8xf32> to vector<8x1xf32>
    %229 = vector.broadcast %228 : vector<8x1xf32> to vector<8x8xf32>
    %230 = arith.subf %226, %229 : vector<8x8xf32>
    %231 = math.exp %230 : vector<8x8xf32>
    %cst_92 = arith.constant dense<0.000000e+00> : vector<8xf32>
    %232 = vector.multi_reduction <add>, %231, %cst_92 [1] : vector<8x8xf32> to vector<8xf32>
    %233 = vector.shape_cast %232 : vector<8xf32> to vector<8x1xf32>
    %234 = tpu.reciprocal %233 {approx = true} : vector<8x1xf32> -> vector<8x1xf32>
    %235 = vector.broadcast %234 : vector<8x1xf32> to vector<8x8xf32>
    %236 = arith.mulf %231, %235 : vector<8x8xf32>
    %cst_93 = arith.constant dense<0.000000e+00> : vector<8x8xf32>
    %237 = tpu.matmul %236, %223, %cst_93 {dimension_numbers = #tpu.dot_dimension_numbers<[1], [0], [0], [1], [0, 0, 1, 1], [], []>} : vector<8x8xf32>, vector<8x8xf32>, vector<8x8xf32> -> vector<8x8xf32>
    %238 = vector.extract_strided_slice %166 {offsets = [8, 0], sizes = [8, 32], strides = [1, 1]} : vector<32x32xf32> to vector<8x32xf32>
    %cst_94 = arith.constant dense<0.000000e+00> : vector<8x32xf32>
    %239 = tpu.matmul %237, %238, %cst_94 {dimension_numbers = #tpu.dot_dimension_numbers<[1], [0], [0], [1], [0, 0, 1, 1], [], []>} : vector<8x8xf32>, vector<8x32xf32>, vector<8x32xf32> -> vector<8x32xf32>
    %240 = arith.addf %220, %239 : vector<8x32xf32>
    %241 = vector.extract_strided_slice %201 {offsets = [0, 16], sizes = [8, 8], strides = [1, 1]} : vector<8x96xf32> to vector<8x8xf32>
    %242 = vector.extract_strided_slice %201 {offsets = [0, 48], sizes = [8, 8], strides = [1, 1]} : vector<8x96xf32> to vector<8x8xf32>
    %243 = vector.extract_strided_slice %201 {offsets = [0, 80], sizes = [8, 8], strides = [1, 1]} : vector<8x96xf32> to vector<8x8xf32>
    %cst_95 = arith.constant dense<0.000000e+00> : vector<8x8xf32>
    %244 = tpu.matmul %241, %242, %cst_95 {dimension_numbers = #tpu.dot_dimension_numbers<[1], [1], [0], [0], [0, 0, 1, 0], [], []>} : vector<8x8xf32>, vector<8x8xf32>, vector<8x8xf32> -> vector<8x8xf32>
    %cst_96 = arith.constant 0.353553385 : f32
    %245 = vector.broadcast %cst_96 : f32 to vector<8x8xf32>
    %246 = arith.mulf %244, %245 : vector<8x8xf32>
    %cst_97 = arith.constant dense<0xFF800000> : vector<8xf32>
    %247 = vector.multi_reduction <maximumf>, %246, %cst_97 [1] : vector<8x8xf32> to vector<8xf32>
    %248 = vector.shape_cast %247 : vector<8xf32> to vector<8x1xf32>
    %249 = vector.broadcast %248 : vector<8x1xf32> to vector<8x8xf32>
    %250 = arith.subf %246, %249 : vector<8x8xf32>
    %251 = math.exp %250 : vector<8x8xf32>
    %cst_98 = arith.constant dense<0.000000e+00> : vector<8xf32>
    %252 = vector.multi_reduction <add>, %251, %cst_98 [1] : vector<8x8xf32> to vector<8xf32>
    %253 = vector.shape_cast %252 : vector<8xf32> to vector<8x1xf32>
    %254 = tpu.reciprocal %253 {approx = true} : vector<8x1xf32> -> vector<8x1xf32>
    %255 = vector.broadcast %254 : vector<8x1xf32> to vector<8x8xf32>
    %256 = arith.mulf %251, %255 : vector<8x8xf32>
    %cst_99 = arith.constant dense<0.000000e+00> : vector<8x8xf32>
    %257 = tpu.matmul %256, %243, %cst_99 {dimension_numbers = #tpu.dot_dimension_numbers<[1], [0], [0], [1], [0, 0, 1, 1], [], []>} : vector<8x8xf32>, vector<8x8xf32>, vector<8x8xf32> -> vector<8x8xf32>
    %258 = vector.extract_strided_slice %166 {offsets = [16, 0], sizes = [8, 32], strides = [1, 1]} : vector<32x32xf32> to vector<8x32xf32>
    %cst_100 = arith.constant dense<0.000000e+00> : vector<8x32xf32>
    %259 = tpu.matmul %257, %258, %cst_100 {dimension_numbers = #tpu.dot_dimension_numbers<[1], [0], [0], [1], [0, 0, 1, 1], [], []>} : vector<8x8xf32>, vector<8x32xf32>, vector<8x32xf32> -> vector<8x32xf32>
    %260 = arith.addf %240, %259 : vector<8x32xf32>
    %261 = vector.extract_strided_slice %201 {offsets = [0, 24], sizes = [8, 8], strides = [1, 1]} : vector<8x96xf32> to vector<8x8xf32>
    %262 = vector.extract_strided_slice %201 {offsets = [0, 56], sizes = [8, 8], strides = [1, 1]} : vector<8x96xf32> to vector<8x8xf32>
    %263 = vector.extract_strided_slice %201 {offsets = [0, 88], sizes = [8, 8], strides = [1, 1]} : vector<8x96xf32> to vector<8x8xf32>
    %cst_101 = arith.constant dense<0.000000e+00> : vector<8x8xf32>
    %264 = tpu.matmul %261, %262, %cst_101 {dimension_numbers = #tpu.dot_dimension_numbers<[1], [1], [0], [0], [0, 0, 1, 0], [], []>} : vector<8x8xf32>, vector<8x8xf32>, vector<8x8xf32> -> vector<8x8xf32>
    %cst_102 = arith.constant 0.353553385 : f32
    %265 = vector.broadcast %cst_102 : f32 to vector<8x8xf32>
    %266 = arith.mulf %264, %265 : vector<8x8xf32>
    %cst_103 = arith.constant dense<0xFF800000> : vector<8xf32>
    %267 = vector.multi_reduction <maximumf>, %266, %cst_103 [1] : vector<8x8xf32> to vector<8xf32>
    %268 = vector.shape_cast %267 : vector<8xf32> to vector<8x1xf32>
    %269 = vector.broadcast %268 : vector<8x1xf32> to vector<8x8xf32>
    %270 = arith.subf %266, %269 : vector<8x8xf32>
    %271 = math.exp %270 : vector<8x8xf32>
    %cst_104 = arith.constant dense<0.000000e+00> : vector<8xf32>
    %272 = vector.multi_reduction <add>, %271, %cst_104 [1] : vector<8x8xf32> to vector<8xf32>
    %273 = vector.shape_cast %272 : vector<8xf32> to vector<8x1xf32>
    %274 = tpu.reciprocal %273 {approx = true} : vector<8x1xf32> -> vector<8x1xf32>
    %275 = vector.broadcast %274 : vector<8x1xf32> to vector<8x8xf32>
    %276 = arith.mulf %271, %275 : vector<8x8xf32>
    %cst_105 = arith.constant dense<0.000000e+00> : vector<8x8xf32>
    %277 = tpu.matmul %276, %263, %cst_105 {dimension_numbers = #tpu.dot_dimension_numbers<[1], [0], [0], [1], [0, 0, 1, 1], [], []>} : vector<8x8xf32>, vector<8x8xf32>, vector<8x8xf32> -> vector<8x8xf32>
    %278 = vector.extract_strided_slice %166 {offsets = [24, 0], sizes = [8, 32], strides = [1, 1]} : vector<32x32xf32> to vector<8x32xf32>
    %cst_106 = arith.constant dense<0.000000e+00> : vector<8x32xf32>
    %279 = tpu.matmul %277, %278, %cst_106 {dimension_numbers = #tpu.dot_dimension_numbers<[1], [0], [0], [1], [0, 0, 1, 1], [], []>} : vector<8x8xf32>, vector<8x32xf32>, vector<8x32xf32> -> vector<8x32xf32>
    %280 = arith.addf %260, %279 : vector<8x32xf32>
    %281 = arith.addf %162, %280 : vector<8x32xf32>
    %282 = vector.broadcast %179 : vector<1x32xf32> to vector<8x32xf32>
    %283 = arith.addf %281, %282 : vector<8x32xf32>
    %cst_107 = arith.constant dense<0.000000e+00> : vector<8xf32>
    %284 = vector.multi_reduction <add>, %283, %cst_107 [1] : vector<8x32xf32> to vector<8xf32>
    %285 = vector.shape_cast %284 : vector<8xf32> to vector<8x1xf32>
    %cst_108 = arith.constant 3.200000e+01 : f32
    %286 = vector.broadcast %cst_108 : f32 to vector<8x1xf32>
    %287 = arith.divf %285, %286 : vector<8x1xf32>
    %288 = vector.broadcast %287 : vector<8x1xf32> to vector<8x32xf32>
    %289 = arith.subf %283, %288 : vector<8x32xf32>
    %290 = arith.mulf %289, %289 : vector<8x32xf32>
    %cst_109 = arith.constant dense<0.000000e+00> : vector<8xf32>
    %291 = vector.multi_reduction <add>, %290, %cst_109 [1] : vector<8x32xf32> to vector<8xf32>
    %292 = vector.shape_cast %291 : vector<8xf32> to vector<8x1xf32>
    %cst_110 = arith.constant 3.200000e+01 : f32
    %293 = vector.broadcast %cst_110 : f32 to vector<8x1xf32>
    %294 = arith.divf %292, %293 : vector<8x1xf32>
    %cst_111 = arith.constant 9.99999974E-6 : f32
    %295 = vector.broadcast %cst_111 : f32 to vector<8x1xf32>
    %296 = arith.addf %294, %295 : vector<8x1xf32>
    %297 = math.rsqrt %296 : vector<8x1xf32>
    %298 = vector.broadcast %297 : vector<8x1xf32> to vector<8x32xf32>
    %299 = arith.mulf %289, %298 : vector<8x32xf32>
    %300 = vector.broadcast %177 : vector<1x32xf32> to vector<8x32xf32>
    %301 = arith.mulf %299, %300 : vector<8x32xf32>
    %302 = vector.broadcast %178 : vector<1x32xf32> to vector<8x32xf32>
    %303 = arith.addf %301, %302 : vector<8x32xf32>
    %cst_112 = arith.constant dense<0.000000e+00> : vector<8x64xf32>
    %304 = tpu.matmul %303, %168, %cst_112 {dimension_numbers = #tpu.dot_dimension_numbers<[1], [0], [0], [1], [0, 0, 1, 1], [], []>} : vector<8x32xf32>, vector<32x64xf32>, vector<8x64xf32> -> vector<8x64xf32>
    %305 = vector.broadcast %174 : vector<1x64xf32> to vector<8x64xf32>
    %306 = arith.addf %304, %305 : vector<8x64xf32>
    %cst_113 = arith.constant 5.000000e-01 : f32
    %307 = vector.broadcast %cst_113 : f32 to vector<8x64xf32>
    %308 = arith.mulf %307, %306 : vector<8x64xf32>
    %cst_114 = arith.constant 4.471500e-02 : f32
    %309 = vector.broadcast %cst_114 : f32 to vector<8x64xf32>
    %310 = arith.mulf %309, %306 : vector<8x64xf32>
    %311 = arith.mulf %310, %306 : vector<8x64xf32>
    %312 = arith.mulf %311, %306 : vector<8x64xf32>
    %313 = arith.addf %306, %312 : vector<8x64xf32>
    %cst_115 = arith.constant 0.797884583 : f32
    %314 = vector.broadcast %cst_115 : f32 to vector<8x64xf32>
    %315 = arith.mulf %314, %313 : vector<8x64xf32>
    %316 = math.tanh %315 : vector<8x64xf32>
    %cst_116 = arith.constant 1.000000e+00 : f32
    %317 = vector.broadcast %cst_116 : f32 to vector<8x64xf32>
    %318 = arith.addf %317, %316 : vector<8x64xf32>
    %319 = arith.mulf %308, %318 : vector<8x64xf32>
    %cst_117 = arith.constant dense<0.000000e+00> : vector<8x32xf32>
    %320 = tpu.matmul %319, %170, %cst_117 {dimension_numbers = #tpu.dot_dimension_numbers<[1], [0], [0], [1], [0, 0, 1, 1], [], []>} : vector<8x64xf32>, vector<64x32xf32>, vector<8x32xf32> -> vector<8x32xf32>
    %321 = vector.broadcast %180 : vector<1x32xf32> to vector<8x32xf32>
    %322 = arith.addf %320, %321 : vector<8x32xf32>
    %323 = arith.addf %283, %322 : vector<8x32xf32>
    %c0_118 = arith.constant 0 : index
    %c0_119 = arith.constant 0 : index
    %c0_120 = arith.constant 0 : index
    %324 = vector.load %arg8[%c0_118, %c0_119, %c0_120] : memref<1x8x32xf32, #tpu.memory_space<vmem>>, vector<1x8x32xf32>
    %325 = vector.shape_cast %324 : vector<1x8x32xf32> to vector<8x32xf32>
    %326 = vector.shape_cast %323 : vector<8x32xf32> to vector<1x8x32xf32>
    tpu.vector_store %arg8[%c0_118, %c0_119, %c0_120], %326 {strides = array<i32>} : memref<1x8x32xf32, #tpu.memory_space<vmem>>, vector<1x8x32xf32>,
    return
  }
  func.func @transform_0(%arg0: i32) -> (i32, i32, i32) {
    %c0_i32 = arith.constant 0 : i32
    %c0_i32_0 = arith.constant 0 : i32
    %c0_i32_1 = arith.constant 0 : i32
    return %arg0, %c0_i32, %c0_i32_0 : i32, i32, i32
  }
  func.func @transform_1(%arg0: i32) -> (i32, i32, i32) {
    %c0_i32 = arith.constant 0 : i32
    %c0_i32_0 = arith.constant 0 : i32
    %c0_i32_1 = arith.constant 0 : i32
    %c0_i32_2 = arith.constant 0 : i32
    return %c0_i32, %c0_i32_0, %c0_i32_1 : i32, i32, i32
  }
  func.func @transform_2(%arg0: i32) -> (i32, i32, i32) {
    %c0_i32 = arith.constant 0 : i32
    %c0_i32_0 = arith.constant 0 : i32
    %c0_i32_1 = arith.constant 0 : i32
    %c0_i32_2 = arith.constant 0 : i32
    return %c0_i32, %c0_i32_0, %c0_i32_1 : i32, i32, i32
  }
  func.func @transform_3(%arg0: i32) -> (i32, i32, i32) {
    %c0_i32 = arith.constant 0 : i32
    %c0_i32_0 = arith.constant 0 : i32
    %c0_i32_1 = arith.constant 0 : i32
    %c0_i32_2 = arith.constant 0 : i32
    return %c0_i32, %c0_i32_0, %c0_i32_1 : i32, i32, i32
  }
  func.func @transform_4(%arg0: i32) -> (i32, i32, i32) {
    %c0_i32 = arith.constant 0 : i32
    %c0_i32_0 = arith.constant 0 : i32
    %c0_i32_1 = arith.constant 0 : i32
    %c0_i32_2 = arith.constant 0 : i32
    return %c0_i32, %c0_i32_0, %c0_i32_1 : i32, i32, i32
  }
  func.func @transform_5(%arg0: i32) -> (i32, i32, i32) {
    %c0_i32 = arith.constant 0 : i32
    %c0_i32_0 = arith.constant 0 : i32
    %c0_i32_1 = arith.constant 0 : i32
    %c0_i32_2 = arith.constant 0 : i32
    return %c0_i32, %c0_i32_0, %c0_i32_1 : i32, i32, i32
  }
  func.func @transform_6(%arg0: i32) -> (i32, i32, i32) {
    %c0_i32 = arith.constant 0 : i32
    %c0_i32_0 = arith.constant 0 : i32
    %c0_i32_1 = arith.constant 0 : i32
    %c0_i32_2 = arith.constant 0 : i32
    return %c0_i32, %c0_i32_0, %c0_i32_1 : i32, i32, i32
  }
  func.func @transform_7(%arg0: i32) -> (i32, i32, i32) {
    %c0_i32 = arith.constant 0 : i32
    %c0_i32_0 = arith.constant 0 : i32
    %c0_i32_1 = arith.constant 0 : i32
    return %arg0, %c0_i32, %c0_i32_0 : i32, i32, i32
  }
}

</mosaic_0001>

<llo_original>
// kernel: transformer_blocks_forward.1
$region0: #{transformer_blocks_forward.1}
  #allocation0 [shape = 'u32[]', space=smem, size = 0x4, offset = 0x4, fixed_abs, tag = 'smem constant byte address 0x4 - core index']
  #allocation1 [shape = 'u32[144,128]{1,0:T(1,128)}', space=vmem, size = 0x12000, scoped, tag = 'internal scratch']
  %s0 = inlined_call_operand.vmem [shape: f32[2,8,32], index: 0, kind: input, shape index: {}]
  %s1 = inlined_call_operand.vmem [shape: f32[2,32,96], index: 1, kind: input, shape index: {}]
  %s2 = inlined_call_operand.vmem [shape: f32[2,32,32], index: 2, kind: input, shape index: {}]
  %s3 = inlined_call_operand.vmem [shape: f32[2,32,64], index: 3, kind: input, shape index: {}]
  %s4 = inlined_call_operand.vmem [shape: f32[2,64,32], index: 4, kind: input, shape index: {}]
  %s5 = inlined_call_operand.vmem [shape: f32[2,6,32], index: 5, kind: input, shape index: {}]
  %s6 = inlined_call_operand.vmem [shape: f32[2,1,64], index: 6, kind: input, shape index: {}]
  %s7 = inlined_call_operand.hbm [shape: f32[2,8,32], index: 7, kind: output, shape index: {}]
  %s8 = sld [smem:[#allocation0]]
  $region61: #{transformer_blocks_forward.1} parent=0
    _
  %s10 = ssub.s32 1, %s8
  %s11 = scalar_select 0, %s10, %s8
  $region1: #{transformer_blocks_forward.1} parent=0
    #allocation2 [shape = 'u8[8192]{0}', space=vmem, size = 0x2000, scoped, tag = 'output window, operand 0']
    #allocation3 [shape = 's32[2]{0}', space=sflag, size = 0x8, scoped, tag = 'scoped memory for transformer_blocks_forward.1']
    %12 = vsyncpa [#allocation3], 0
    %s13 = scalar_lea.sflag [#allocation3], 1
    %14 = vsyncpa %s13, 0
    loop: start=0, step=1, limit=4
    $region2: #{transformer_blocks_forward.1} parent=1 // loop_pre_header
      _
    $region3: #{transformer_blocks_forward.1} parent=1 // loop_header
      %s16 = sphi 0, %s20
      %p17 = scmp.ge.s32.totalorder %s16, 4
      %s26 = sphi 0, %s28
      %s29 = sphi 0, %s26
      %s30 = sphi 0, %s29
      %s46 = sphi 0, %s30
      %s50 = sphi 0, %s50
      %s52 = sphi 0, %s50
      %s53 = sphi 0, %s52
      %s67 = sphi 0, %s53
      %s71 = sphi 0, %s71
      %s73 = sphi 0, %s71
      %s74 = sphi 0, %s73
      %s88 = sphi 0, %s74
      %s92 = sphi 0, %s92
      %s94 = sphi 0, %s92
      %s95 = sphi 0, %s94
      %s109 = sphi 0, %s95
      %s113 = sphi 0, %s113
      %s115 = sphi 0, %s113
      %s116 = sphi 0, %s115
      %s130 = sphi 0, %s116
      %s134 = sphi 0, %s134
      %s136 = sphi 0, %s134
      %s137 = sphi 0, %s136
      %s151 = sphi 0, %s137
      %s155 = sphi 0, %s155
      %s157 = sphi 0, %s155
      %s158 = sphi 0, %s157
      %s172 = sphi 0, %s158
      %s178 = sphi 0, %s180
      %s181 = sphi 0, %s178
      %s182 = sphi 0, %s181
      %s198 = sphi 0, %s182
    $region4: #{transformer_blocks_forward.1} parent=1 // loop_header_branch
      %19 = sbr.rel (%p17) target = $region8
    $region5: #{transformer_blocks_forward.1} parent=1 // loop_body
      %s21 = ssub.s32 %s16, 1
      %s22 = ssub.s32 %s16, 2
      %s23 = sadd.s32 %s16, 1
      %s24 = ssub.s32 %s16, %s23
      %p25 = scmp.eq.s32.totalorder %s24, 0
      %s27 = sadd.s32 %s26, 1
      %s28 = scalar_select %p25, %s26, %s27
      %p31 = pneg %p25
      %p32 = scmp.eq.s32.totalorder %s16, 1
      %p33 = por %p31, %p32
      %p34 = scmp.ne.s32.totalorder %s26, %s29
      %p35 = scmp.eq.s32.totalorder %s16, 0
      %p36 = por %p34, %p35
      %p37 = scmp.ne.s32.totalorder %s26, %s29
      %p38 = scmp.eq.s32.totalorder %s21, 1
      %p39 = por %p37, %p38
      %p40 = scmp.ne.s32.totalorder %s29, %s30
      %p41 = scmp.eq.s32.totalorder %s21, 0
      %p42 = por %p40, %p41
      %p43 = scmp.ne.s32.totalorder %s29, %s30
      %p44 = scmp.eq.s32.totalorder %s22, 1
      %p45 = por %p43, %p44
      %p47 = scmp.ne.s32.totalorder %s30, %s46
      %p48 = scmp.eq.s32.totalorder %s22, 0
      %p49 = por %p47, %p48
      %s51 = sadd.s32 %s50, 1
      %p54 = scmp.eq.s32.totalorder %s16, 1
      %p55 = scmp.ne.s32.totalorder %s50, %s52
      %p56 = scmp.eq.s32.totalorder %s16, 0
      %p57 = por %p55, %p56
      %p58 = scmp.ne.s32.totalorder %s50, %s52
      %p59 = scmp.eq.s32.totalorder %s21, 1
      %p60 = por %p58, %p59
      %p61 = scmp.ne.s32.totalorder %s52, %s53
      %p62 = scmp.eq.s32.totalorder %s21, 0
      %p63 = por %p61, %p62
      %p64 = scmp.ne.s32.totalorder %s52, %s53
      %p65 = scmp.eq.s32.totalorder %s22, 1
      %p66 = por %p64, %p65
      %p68 = scmp.ne.s32.totalorder %s53, %s67
      %p69 = scmp.eq.s32.totalorder %s22, 0
      %p70 = por %p68, %p69
      %s72 = sadd.s32 %s71, 1
      %p75 = scmp.eq.s32.totalorder %s16, 1
      %p76 = scmp.ne.s32.totalorder %s71, %s73
      %p77 = scmp.eq.s32.totalorder %s16, 0
      %p78 = por %p76, %p77
      %p79 = scmp.ne.s32.totalorder %s71, %s73
      %p80 = scmp.eq.s32.totalorder %s21, 1
      %p81 = por %p79, %p80
      %p82 = scmp.ne.s32.totalorder %s73, %s74
      %p83 = scmp.eq.s32.totalorder %s21, 0
      %p84 = por %p82, %p83
      %p85 = scmp.ne.s32.totalorder %s73, %s74
      %p86 = scmp.eq.s32.totalorder %s22, 1
      %p87 = por %p85, %p86
      %p89 = scmp.ne.s32.totalorder %s74, %s88
      %p90 = scmp.eq.s32.totalorder %s22, 0
      %p91 = por %p89, %p90
      %s93 = sadd.s32 %s92, 1
      %p96 = scmp.eq.s32.totalorder %s16, 1
      %p97 = scmp.ne.s32.totalorder %s92, %s94
      %p98 = scmp.eq.s32.totalorder %s16, 0
      %p99 = por %p97, %p98
      %p100 = scmp.ne.s32.totalorder %s92, %s94
      %p101 = scmp.eq.s32.totalorder %s21, 1
      %p102 = por %p100, %p101
      %p103 = scmp.ne.s32.totalorder %s94, %s95
      %p104 = scmp.eq.s32.totalorder %s21, 0
      %p105 = por %p103, %p104
      %p106 = scmp.ne.s32.totalorder %s94, %s95
      %p107 = scmp.eq.s32.totalorder %s22, 1
      %p108 = por %p106, %p107
      %p110 = scmp.ne.s32.totalorder %s95, %s109
      %p111 = scmp.eq.s32.totalorder %s22, 0
      %p112 = por %p110, %p111
      %s114 = sadd.s32 %s113, 1
      %p117 = scmp.eq.s32.totalorder %s16, 1
      %p118 = scmp.ne.s32.totalorder %s113, %s115
      %p119 = scmp.eq.s32.totalorder %s16, 0
      %p120 = por %p118, %p119
      %p121 = scmp.ne.s32.totalorder %s113, %s115
      %p122 = scmp.eq.s32.totalorder %s21, 1
      %p123 = por %p121, %p122
      %p124 = scmp.ne.s32.totalorder %s115, %s116
      %p125 = scmp.eq.s32.totalorder %s21, 0
      %p126 = por %p124, %p125
      %p127 = scmp.ne.s32.totalorder %s115, %s116
      %p128 = scmp.eq.s32.totalorder %s22, 1
      %p129 = por %p127, %p128
      %p131 = scmp.ne.s32.totalorder %s116, %s130
      %p132 = scmp.eq.s32.totalorder %s22, 0
      %p133 = por %p131, %p132
      %s135 = sadd.s32 %s134, 1
      %p138 = scmp.eq.s32.totalorder %s16, 1
      %p139 = scmp.ne.s32.totalorder %s134, %s136
      %p140 = scmp.eq.s32.totalorder %s16, 0
      %p141 = por %p139, %p140
      %p142 = scmp.ne.s32.totalorder %s134, %s136
      %p143 = scmp.eq.s32.totalorder %s21, 1
      %p144 = por %p142, %p143
      %p145 = scmp.ne.s32.totalorder %s136, %s137
      %p146 = scmp.eq.s32.totalorder %s21, 0
      %p147 = por %p145, %p146
      %p148 = scmp.ne.s32.totalorder %s136, %s137
      %p149 = scmp.eq.s32.totalorder %s22, 1
      %p150 = por %p148, %p149
      %p152 = scmp.ne.s32.totalorder %s137, %s151
      %p153 = scmp.eq.s32.totalorder %s22, 0
      %p154 = por %p152, %p153
      %s156 = sadd.s32 %s155, 1
      %p159 = scmp.eq.s32.totalorder %s16, 1
      %p160 = scmp.ne.s32.totalorder %s155, %s157
      %p161 = scmp.eq.s32.totalorder %s16, 0
      %p162 = por %p160, %p161
      %p163 = scmp.ne.s32.totalorder %s155, %s157
      %p164 = scmp.eq.s32.totalorder %s21, 1
      %p165 = por %p163, %p164
      %p166 = scmp.ne.s32.totalorder %s157, %s158
      %p167 = scmp.eq.s32.totalorder %s21, 0
      %p168 = por %p166, %p167
      %p169 = scmp.ne.s32.totalorder %s157, %s158
      %p170 = scmp.eq.s32.totalorder %s22, 1
      %p171 = por %p169, %p170
      %p173 = scmp.ne.s32.totalorder %s158, %s172
      %p174 = scmp.eq.s32.totalorder %s22, 0
      %p175 = por %p173, %p174
      %s176 = ssub.s32 %s16, %s23
      %p177 = scmp.eq.s32.totalorder %s176, 0
      %s179 = sadd.s32 %s178, 1
      %s180 = scalar_select %p177, %s178, %s179
      %p183 = pneg %p177
      %p184 = scmp.eq.s32.totalorder %s16, 1
      %p185 = por %p183, %p184
      %p186 = scmp.ne.s32.totalorder %s178, %s181
      %p187 = scmp.eq.s32.totalorder %s16, 0
      %p188 = por %p186, %p187
      %p189 = scmp.ne.s32.totalorder %s178, %s181
      %p190 = scmp.eq.s32.totalorder %s21, 1
      %p191 = por %p189, %p190
      %p192 = scmp.ne.s32.totalorder %s181, %s182
      %p193 = scmp.eq.s32.totalorder %s21, 0
      %p194 = por %p192, %p193
      %p195 = scmp.ne.s32.totalorder %s181, %s182
      %p196 = scmp.eq.s32.totalorder %s22, 1
      %p197 = por %p195, %p196
      %p199 = scmp.ne.s32.totalorder %s182, %s198
      %p200 = scmp.eq.s32.totalorder %s22, 0
      %p201 = por %p199, %p200
      %p202 = scmp.le.s32.totalorder 1, %s16
      %p203 = scmp.lt.s32.totalorder %s16, 3
      %p204 = pnand %p202, %p203
      %p205 = pneg %p204
      // Predicated region
      $region9: #{transformer_blocks_forward.1} parent=5 // pred_check
        _
      $region10: #{transformer_blocks_forward.1} parent=5 // pred_check_branch
        %207 = sbr.rel (%p204) target = $region12
      $region11: #{transformer_blocks_forward.1} parent=5 // pred_region
        %s208 = ssub.s32 %s16, 1
        // Predicated region
        $region13: #{transformer_blocks_forward.1} parent=11 // pred_check
          %p209 = pneg %p63
        $region14: #{transformer_blocks_forward.1} parent=11 // pred_check_branch
          %211 = sbr.rel (%p209) target = $region16
        $region15: #{transformer_blocks_forward.1} parent=11 // pred_region
          _
        $region16: #{transformer_blocks_forward.1} parent=11 // pred_fallthru
          _
        // Predicated region
        $region17: #{transformer_blocks_forward.1} parent=11 // pred_check
          %p212 = pneg %p84
        $region18: #{transformer_blocks_forward.1} parent=11 // pred_check_branch
          %214 = sbr.rel (%p212) target = $region20
        $region19: #{transformer_blocks_forward.1} parent=11 // pred_region
          _
        $region20: #{transformer_blocks_forward.1} parent=11 // pred_fallthru
          _
        // Predicated region
        $region21: #{transformer_blocks_forward.1} parent=11 // pred_check
          %p215 = pneg %p105
        $region22: #{transformer_blocks_forward.1} parent=11 // pred_check_branch
          %217 = sbr.rel (%p215) target = $region24
        $region23: #{transformer_blocks_forward.1} parent=11 // pred_region
          _
        $region24: #{transformer_blocks_forward.1} parent=11 // pred_fallthru
          _
        // Predicated region
        $region25: #{transformer_blocks_forward.1} parent=11 // pred_check
          %p218 = pneg %p126
        $region26: #{transformer_blocks_forward.1} parent=11 // pred_check_branch
          %220 = sbr.rel (%p218) target = $region28
        $region27: #{transformer_blocks_forward.1} parent=11 // pred_region
          _
        $region28: #{transformer_blocks_forward.1} parent=11 // pred_fallthru
          _
        // Predicated region
        $region29: #{transformer_blocks_forward.1} parent=11 // pred_check
          %p221 = pneg %p147
        $region30: #{transformer_blocks_forward.1} parent=11 // pred_check_branch
          %223 = sbr.rel (%p221) target = $region32
        $region31: #{transformer_blocks_forward.1} parent=11 // pred_region
          _
        $region32: #{transformer_blocks_forward.1} parent=11 // pred_fallthru
          _
        // Predicated region
        $region33: #{transformer_blocks_forward.1} parent=11 // pred_check
          %p224 = pneg %p168
        $region34: #{transformer_blocks_forward.1} parent=11 // pred_check_branch
          %226 = sbr.rel (%p224) target = $region36
        $region35: #{transformer_blocks_forward.1} parent=11 // pred_region
          _
        $region36: #{transformer_blocks_forward.1} parent=11 // pred_fallthru
          _
      $region12: #{transformer_blocks_forward.1} parent=5 // pred_fallthru
        _
      %p227 = scmp.lt.s32.totalorder %s16, 2
      // Predicated region
      $region37: #{transformer_blocks_forward.1} parent=5 // pred_check
        %p228 = pneg %p227
      $region38: #{transformer_blocks_forward.1} parent=5 // pred_check_branch
        %230 = sbr.rel (%p228) target = $region40
      $region39: #{transformer_blocks_forward.1} parent=5 // pred_region
        // Predicated region
        $region41: #{transformer_blocks_forward.1} parent=39 // pred_check
          %p231 = pneg %p36
        $region42: #{transformer_blocks_forward.1} parent=39 // pred_check_branch
          %233 = sbr.rel (%p231) target = $region44
        $region43: #{transformer_blocks_forward.1} parent=39 // pred_region
          %p234 = scmp.lt.s32.totalorder %s16, 1
          %s235 = scalar_select %p234, %s16, 1
          %s236 = smul.addr %s235, 8
          %s237 = scalar_lea.vmem %s0, %s236
        $region44: #{transformer_blocks_forward.1} parent=39 // pred_fallthru
          _
      $region40: #{transformer_blocks_forward.1} parent=5 // pred_fallthru
        _
      %p238 = scmp.le.s32.totalorder 1, %s16
      %p239 = scmp.lt.s32.totalorder %s16, 3
      %p240 = pnand %p238, %p239
      %p241 = pneg %p240
      // Predicated region
      $region45: #{transformer_blocks_forward.1} parent=5 // pred_check
        _
      $region46: #{transformer_blocks_forward.1} parent=5 // pred_check_branch
        %243 = sbr.rel (%p240) target = $region48
      $region47: #{transformer_blocks_forward.1} parent=5 // pred_region
        %s244 = ssub.s32 %s16, 1
        %p245 = scmp.lt.s32.totalorder %s21, 1
        %s246 = scalar_select %p245, %s21, 1
        %s247 = smul.addr %s246, 8
        %s248 = scalar_lea.vmem %s0, %s247
        %p249 = pneg %p42
        %p250 = pneg %p39
        %p251 = pneg %p63
        %p252 = pneg %p60
        %p253 = pneg %p84
        %p254 = pneg %p81
        %p255 = pneg %p105
        %p256 = pneg %p102
        %p257 = pneg %p126
        %p258 = pneg %p123
        %p259 = pneg %p147
        %p260 = pneg %p144
        %p261 = pneg %p168
        %p262 = pneg %p165
        %p263 = pneg %p194
        %p264 = pneg %p191
        %s265 = sand.u32 %s181, 1
        %s266 = scalar_lea.sflag [#allocation3], %s265
        %s267 = sand.u32 %s181, 1
        %s268 = smul.addr %s267, 8
        %s269 = scalar_lea.vmem [#allocation2], %s268
        %p270 = scmp.lt.s32.totalorder %s21, 1
        %s271 = scalar_select %p270, %s21, 1
        %s272 = smul.addr %s271, 8
        %s273 = scalar_lea.vmem %s0, %s272
        %v274 = vld [vmem:[%s273] sm:$0xff]
        %v275 = vld [vmem:[%s1] sm:$0xff]
        %v276 = vld [vmem:[%s1 + $0x8] sm:$0xff]
        %v277 = vld [vmem:[%s1 + $0x10] sm:$0xff]
        %v278 = vld [vmem:[%s1 + $0x18] sm:$0xff]
        %v279 = vld [vmem:[%s2] sm:$0xff]
        %v280 = vld [vmem:[%s2 + $0x8] sm:$0xff]
        %v281 = vld [vmem:[%s2 + $0x10] sm:$0xff]
        %v282 = vld [vmem:[%s2 + $0x18] sm:$0xff]
        %v283 = vld [vmem:[%s3] sm:$0xff]
        %v284 = vld [vmem:[%s3 + $0x8] sm:$0xff]
        %v285 = vld [vmem:[%s3 + $0x10] sm:$0xff]
        %v286 = vld [vmem:[%s3 + $0x18] sm:$0xff]
        %v287 = vld [vmem:[%s4] sm:$0xff]
        %v288 = vld [vmem:[%s4 + $0x8] sm:$0xff]
        %v289 = vld [vmem:[%s4 + $0x10] sm:$0xff]
        %v290 = vld [vmem:[%s4 + $0x18] sm:$0xff]
        %v291 = vld [vmem:[%s4 + $0x20] sm:$0xff]
        %v292 = vld [vmem:[%s4 + $0x28] sm:$0xff]
        %v293 = vld [vmem:[%s4 + $0x30] sm:$0xff]
        %v294 = vld [vmem:[%s4 + $0x38] sm:$0xff]
        %v295 = vld [vmem:[%s5] sm:$0x3f]
        %v296 = vld [vmem:[%s6] sm:$0x1]
        %vm297 = vcmask 261120
        %v298 = vsel %vm297, %v274, 0.0
        %299 = vadd.xlane.f32.xlu0 %v298
        %v300 = vpop.xlane.xlu0 %299
        %v301 = vrcp.pop 32.0
        %v302 = vmul.f32 %v300, %v301
        %v303 = vsub.f32 %v274, %v302
        %v304 = vmul.f32 %v303, %v303
        %v305 = vsel %vm297, %v304, 0.0
        %306 = vadd.xlane.f32.xlu0 %v305
        %v307 = vpop.xlane.xlu0 %306
        %v308 = vmul.f32 %v307, %v301
        %v309 = vadd.f32 %v308, 1e-05
        %v310 = vrsqrt.pop %v309
        %v311 = vmul.f32 %v303, %v310
        %v312 = vlaneseq
        %v313 = vshrl.u32 %v312, 7
        %v314 = vsub.s32 0, %v313
        %v315 = vrot.slane %v295, %v314
        %v316 = vmul.f32 %v311, %v315
        %v317 = vlaneseq
        %v318 = vshrl.u32 %v317, 7
        %v319 = vsub.s32 1, %v318
        %v320 = vrot.slane %v295, %v319
        %v321 = vadd.f32 %v316, %v320
        %v323 = vsel %vm297, %v321, 0
        %325 = vmatprep.subr.mxu0 0.0
        %326 = vmatpush1.msra.mxu0 %v275
        %327 = vmatprep.subr.mxu0 0.0
        %328 = vmatpush1.msra.mxu0 %v276
        %329 = vmatprep.subr.mxu0 0.0
        %330 = vmatpush1.msra.mxu0 %v277
        %331 = vmatprep.subr.mxu0 0.0
        %332 = vmatpush1.msra.mxu0 %v278
        %333 = vmatprep.subr.mxu0 0.0
        %334 = vmatpush1.msra.mxu0 0.0
        %335 = vmatprep.subr.mxu0 0.0
        %336 = vmatpush1.msra.mxu0 0.0
        %337 = vmatprep.subr.mxu0 0.0
        %338 = vmatpush1.msra.mxu0 0.0
        %339 = vmatprep.subr.mxu0 0.0
        %340 = vmatpush1.msra.mxu0 0.0
        %341 = vmatprep.subr.mxu0 0.0
        %342 = vmatpush1.msra.mxu0 0.0
        %343 = vmatprep.subr.mxu0 0.0
        %344 = vmatpush1.msra.mxu0 0.0
        %345 = vmatprep.subr.mxu0 0.0
        %346 = vmatpush1.msra.mxu0 0.0
        %347 = vmatprep.subr.mxu0 0.0
        %348 = vmatpush1.msra.mxu0 0.0
        %349 = vmatprep.subr.mxu0 0.0
        %350 = vmatpush1.msra.mxu0 0.0
        %351 = vmatprep.subr.mxu0 0.0
        %352 = vmatpush1.msra.mxu0 0.0
        %353 = vmatprep.subr.mxu0 0.0
        %354 = vmatpush1.msra.mxu0 0.0
        %355 = vmatprep.subr.mxu0 0.0
        %356 = vmatpush1.msra.mxu0 0.0
        %357 = vmatprep.subr.mxu0 0.0
        %358 = vmatpush1.msra.mxu0 0.0
        %359 = vmatprep.subr.mxu0 0.0
        %360 = vmatpush1.msra.mxu0 0.0
        %361 = vmatprep.subr.mxu0 0.0
        %362 = vmatpush1.msra.mxu0 0.0
        %363 = vmatprep.subr.mxu0 0.0
        %364 = vmatpush1.msra.mxu0 0.0
        %365 = vmatprep.subr.mxu0 0.0
        %366 = vmatpush1.msra.mxu0 0.0
        %367 = vmatprep.subr.mxu0 0.0
        %368 = vmatpush1.msra.mxu0 0.0
        %369 = vmatprep.subr.mxu0 0.0
        %370 = vmatpush1.msra.mxu0 0.0
        %371 = vmatprep.subr.mxu0 0.0
        %372 = vmatpush1.msra.mxu0 0.0
        %373 = vmatprep.subr.mxu0 0.0
        %374 = vmatpush1.msra.mxu0 0.0
        %375 = vmatprep.subr.mxu0 0.0
        %376 = vmatpush1.msra.mxu0 0.0
        %377 = vmatprep.subr.mxu0 0.0
        %378 = vmatpush1.msra.mxu0 0.0
        %379 = vmatprep.subr.mxu0 0.0
        %380 = vmatpush1.msra.mxu0 0.0
        %381 = vmatprep.subr.mxu0 0.0
        %382 = vmatpush1.msra.mxu0 0.0
        %383 = vmatprep.subr.mxu0 0.0
        %384 = vmatpush1.msra.mxu0 0.0
        %385 = vmatprep.subr.mxu0 0.0
        %386 = vmatpush1.msra.mxu0 0.0
        %387 = vmatprep.subr.mxu0 0.0
        %388 = vmatpush1.msra.mxu0 0.0
        %389 = vmatprep.mubr.f32.mxu0 0.0
        %390 = vmatmul.mubr.f32.gmra.mrb[0].mxu0 %v323
        %v391 = vpop.f32.mrb[0].mxu0
        %v392 = vadd.f32 0.0, %v391
        %v393 = vpop.f32.mrb[0].mxu0
        %394 = vdwg.mxu0
        %396 = vrot.lane.b32.xlu0 %v392, 96
        %v397 = vpop.permute.xlu0 %396
        %vm398 = vcmask 64512
        %v399 = vsel %vm398, %v392, 0
        %v401 = vsel %vm398, %v397, 0
        %403 = vmatprep.subr.mxu0 0.0
        %404 = vmatpush1.xpose.msra.mxu0 %v401
        %405 = vmatprep.subr.mxu0 0.0
        %406 = vmatpush1.xpose.msra.mxu0 0.0
        %407 = vmatprep.subr.mxu0 0.0
        %408 = vmatpush1.xpose.msra.mxu0 0.0
        %409 = vmatprep.subr.mxu0 0.0
        %410 = vmatpush1.xpose.msra.mxu0 0.0
        %411 = vmatprep.subr.mxu0 0.0
        %412 = vmatpush1.xpose.msra.mxu0 0.0
        %413 = vmatprep.subr.mxu0 0.0
        %414 = vmatpush1.xpose.msra.mxu0 0.0
        %415 = vmatprep.subr.mxu0 0.0
        %416 = vmatpush1.xpose.msra.mxu0 0.0
        %417 = vmatprep.subr.mxu0 0.0
        %418 = vmatpush1.xpose.msra.mxu0 0.0
        %419 = vmatprep.subr.mxu0 0.0
        %420 = vmatpush1.xpose.msra.mxu0 0.0
        %421 = vmatprep.subr.mxu0 0.0
        %422 = vmatpush1.xpose.msra.mxu0 0.0
        %423 = vmatprep.subr.mxu0 0.0
        %424 = vmatpush1.xpose.msra.mxu0 0.0
        %425 = vmatprep.subr.mxu0 0.0
        %426 = vmatpush1.xpose.msra.mxu0 0.0
        %427 = vmatprep.subr.mxu0 0.0
        %428 = vmatpush1.xpose.msra.mxu0 0.0
        %429 = vmatprep.subr.mxu0 0.0
        %430 = vmatpush1.xpose.msra.mxu0 0.0
        %431 = vmatprep.subr.mxu0 0.0
        %432 = vmatpush1.xpose.msra.mxu0 0.0
        %433 = vmatprep.subr.mxu0 0.0
        %434 = vmatpush1.xpose.msra.mxu0 0.0
        %435 = vmatprep.subr.mxu0 0.0
        %436 = vmatpush1.xpose.msra.mxu0 0.0
        %437 = vmatprep.subr.mxu0 0.0
        %438 = vmatpush1.xpose.msra.mxu0 0.0
        %439 = vmatprep.subr.mxu0 0.0
        %440 = vmatpush1.xpose.msra.mxu0 0.0
        %441 = vmatprep.subr.mxu0 0.0
        %442 = vmatpush1.xpose.msra.mxu0 0.0
        %443 = vmatprep.subr.mxu0 0.0
        %444 = vmatpush1.xpose.msra.mxu0 0.0
        %445 = vmatprep.subr.mxu0 0.0
        %446 = vmatpush1.xpose.msra.mxu0 0.0
        %447 = vmatprep.subr.mxu0 0.0
        %448 = vmatpush1.xpose.msra.mxu0 0.0
        %449 = vmatprep.subr.mxu0 0.0
        %450 = vmatpush1.xpose.msra.mxu0 0.0
        %451 = vmatprep.subr.mxu0 0.0
        %452 = vmatpush1.xpose.msra.mxu0 0.0
        %453 = vmatprep.subr.mxu0 0.0
        %454 = vmatpush1.xpose.msra.mxu0 0.0
        %455 = vmatprep.subr.mxu0 0.0
        %456 = vmatpush1.xpose.msra.mxu0 0.0
        %457 = vmatprep.subr.mxu0 0.0
        %458 = vmatpush1.xpose.msra.mxu0 0.0
        %459 = vmatprep.subr.mxu0 0.0
        %460 = vmatpush1.xpose.msra.mxu0 0.0
        %461 = vmatprep.subr.mxu0 0.0
        %462 = vmatpush1.xpose.msra.mxu0 0.0
        %463 = vmatprep.subr.mxu0 0.0
        %464 = vmatpush1.xpose.msra.mxu0 0.0
        %465 = vmatprep.subr.mxu0 0.0
        %466 = vmatpush1.xpose.msra.mxu0 0.0
        %467 = vmatprep.mubr.f32.mxu0 0.0
        %468 = vmatmul.mubr.f32.gmra.mrb[0].mxu0 %v399
        %v469 = vpop.f32.mrb[0].mxu0
        %v470 = vadd.f32 0.0, %v469
        %v471 = vpop.f32.mrb[0].mxu0
        %472 = vdwg.mxu0
        %v473 = vmul.f32 %v470, 0.35355338
        %v474 = vsel %vm398, %v473, -inf
        %475 = vmax.xlane.f32.xlu0 %v474
        %v476 = vpop.xlane.xlu0 %475
        %v477 = vsub.f32 %v473, %v476
        %v478 = vmul.f32 %v477, 1.442695
        %v479 = vpow.pop %v478
        %v480 = vsel %vm398, %v479, 0.0
        %481 = vadd.xlane.f32.xlu0 %v480
        %v482 = vpop.xlane.xlu0 %481
        %v483 = vrcp.pop %v482
        %v484 = vmul.f32 %v479, %v483
        %485 = vrot.lane.b32.xlu0 %v392, 64
        %v486 = vpop.permute.xlu0 %485
        %v489 = vsel %vm398, %v484, 0
        %491 = vmatprep.subr.mxu0 0.0
        %492 = vmatpush1.msra.mxu0 %v486
        %493 = vmatprep.subr.mxu0 0.0
        %494 = vmatpush1.msra.mxu0 0.0
        %495 = vmatprep.subr.mxu0 0.0
        %496 = vmatpush1.msra.mxu0 0.0
        %497 = vmatprep.subr.mxu0 0.0
        %498 = vmatpush1.msra.mxu0 0.0
        %499 = vmatprep.subr.mxu0 0.0
        %500 = vmatpush1.msra.mxu0 0.0
        %501 = vmatprep.subr.mxu0 0.0
        %502 = vmatpush1.msra.mxu0 0.0
        %503 = vmatprep.subr.mxu0 0.0
        %504 = vmatpush1.msra.mxu0 0.0
        %505 = vmatprep.subr.mxu0 0.0
        %506 = vmatpush1.msra.mxu0 0.0
        %507 = vmatprep.subr.mxu0 0.0
        %508 = vmatpush1.msra.mxu0 0.0
        %509 = vmatprep.subr.mxu0 0.0
        %510 = vmatpush1.msra.mxu0 0.0
        %511 = vmatprep.subr.mxu0 0.0
        %512 = vmatpush1.msra.mxu0 0.0
        %513 = vmatprep.subr.mxu0 0.0
        %514 = vmatpush1.msra.mxu0 0.0
        %515 = vmatprep.subr.mxu0 0.0
        %516 = vmatpush1.msra.mxu0 0.0
        %517 = vmatprep.subr.mxu0 0.0
        %518 = vmatpush1.msra.mxu0 0.0
        %519 = vmatprep.subr.mxu0 0.0
        %520 = vmatpush1.msra.mxu0 0.0
        %521 = vmatprep.subr.mxu0 0.0
        %522 = vmatpush1.msra.mxu0 0.0
        %523 = vmatprep.subr.mxu0 0.0
        %524 = vmatpush1.msra.mxu0 0.0
        %525 = vmatprep.subr.mxu0 0.0
        %526 = vmatpush1.msra.mxu0 0.0
        %527 = vmatprep.subr.mxu0 0.0
        %528 = vmatpush1.msra.mxu0 0.0
        %529 = vmatprep.subr.mxu0 0.0
        %530 = vmatpush1.msra.mxu0 0.0
        %531 = vmatprep.subr.mxu0 0.0
        %532 = vmatpush1.msra.mxu0 0.0
        %533 = vmatprep.subr.mxu0 0.0
        %534 = vmatpush1.msra.mxu0 0.0
        %535 = vmatprep.subr.mxu0 0.0
        %536 = vmatpush1.msra.mxu0 0.0
        %537 = vmatprep.subr.mxu0 0.0
        %538 = vmatpush1.msra.mxu0 0.0
        %539 = vmatprep.subr.mxu0 0.0
        %540 = vmatpush1.msra.mxu0 0.0
        %541 = vmatprep.subr.mxu0 0.0
        %542 = vmatpush1.msra.mxu0 0.0
        %543 = vmatprep.subr.mxu0 0.0
        %544 = vmatpush1.msra.mxu0 0.0
        %545 = vmatprep.subr.mxu0 0.0
        %546 = vmatpush1.msra.mxu0 0.0
        %547 = vmatprep.subr.mxu0 0.0
        %548 = vmatpush1.msra.mxu0 0.0
        %549 = vmatprep.subr.mxu0 0.0
        %550 = vmatpush1.msra.mxu0 0.0
        %551 = vmatprep.subr.mxu0 0.0
        %552 = vmatpush1.msra.mxu0 0.0
        %553 = vmatprep.subr.mxu0 0.0
        %554 = vmatpush1.msra.mxu0 0.0
        %555 = vmatprep.mubr.f32.mxu0 0.0
        %556 = vmatmul.mubr.f32.gmra.mrb[0].mxu0 %v489
        %v557 = vpop.f32.mrb[0].mxu0
        %v558 = vadd.f32 0.0, %v557
        %v559 = vpop.f32.mrb[0].mxu0
        %560 = vdwg.mxu0
        %561 = vrot.lane.b32.xlu0 %v392, 120
        %v562 = vpop.permute.xlu0 %561
        %563 = vrot.lane.b32.xlu0 %v392, 88
        %v564 = vpop.permute.xlu0 %563
        %v565 = vsel %vm398, %v562, 0
        %v567 = vsel %vm398, %v564, 0
        %569 = vmatprep.subr.mxu0 0.0
        %570 = vmatpush1.xpose.msra.mxu0 %v567
        %571 = vmatprep.subr.mxu0 0.0
        %572 = vmatpush1.xpose.msra.mxu0 0.0
        %573 = vmatprep.subr.mxu0 0.0
        %574 = vmatpush1.xpose.msra.mxu0 0.0
        %575 = vmatprep.subr.mxu0 0.0
        %576 = vmatpush1.xpose.msra.mxu0 0.0
        %577 = vmatprep.subr.mxu0 0.0
        %578 = vmatpush1.xpose.msra.mxu0 0.0
        %579 = vmatprep.subr.mxu0 0.0
        %580 = vmatpush1.xpose.msra.mxu0 0.0
        %581 = vmatprep.subr.mxu0 0.0
        %582 = vmatpush1.xpose.msra.mxu0 0.0
        %583 = vmatprep.subr.mxu0 0.0
        %584 = vmatpush1.xpose.msra.mxu0 0.0
        %585 = vmatprep.subr.mxu0 0.0
        %586 = vmatpush1.xpose.msra.mxu0 0.0
        %587 = vmatprep.subr.mxu0 0.0
        %588 = vmatpush1.xpose.msra.mxu0 0.0
        %589 = vmatprep.subr.mxu0 0.0
        %590 = vmatpush1.xpose.msra.mxu0 0.0
        %591 = vmatprep.subr.mxu0 0.0
        %592 = vmatpush1.xpose.msra.mxu0 0.0
        %593 = vmatprep.subr.mxu0 0.0
        %594 = vmatpush1.xpose.msra.mxu0 0.0
        %595 = vmatprep.subr.mxu0 0.0
        %596 = vmatpush1.xpose.msra.mxu0 0.0
        %597 = vmatprep.subr.mxu0 0.0
        %598 = vmatpush1.xpose.msra.mxu0 0.0
        %599 = vmatprep.subr.mxu0 0.0
        %600 = vmatpush1.xpose.msra.mxu0 0.0
        %601 = vmatprep.subr.mxu0 0.0
        %602 = vmatpush1.xpose.msra.mxu0 0.0
        %603 = vmatprep.subr.mxu0 0.0
        %604 = vmatpush1.xpose.msra.mxu0 0.0
        %605 = vmatprep.subr.mxu0 0.0
        %606 = vmatpush1.xpose.msra.mxu0 0.0
        %607 = vmatprep.subr.mxu0 0.0
        %608 = vmatpush1.xpose.msra.mxu0 0.0
        %609 = vmatprep.subr.mxu0 0.0
        %610 = vmatpush1.xpose.msra.mxu0 0.0
        %611 = vmatprep.subr.mxu0 0.0
        %612 = vmatpush1.xpose.msra.mxu0 0.0
        %613 = vmatprep.subr.mxu0 0.0
        %614 = vmatpush1.xpose.msra.mxu0 0.0
        %615 = vmatprep.subr.mxu0 0.0
        %616 = vmatpush1.xpose.msra.mxu0 0.0
        %617 = vmatprep.subr.mxu0 0.0
        %618 = vmatpush1.xpose.msra.mxu0 0.0
        %619 = vmatprep.subr.mxu0 0.0
        %620 = vmatpush1.xpose.msra.mxu0 0.0
        %621 = vmatprep.subr.mxu0 0.0
        %622 = vmatpush1.xpose.msra.mxu0 0.0
        %623 = vmatprep.subr.mxu0 0.0
        %624 = vmatpush1.xpose.msra.mxu0 0.0
        %625 = vmatprep.subr.mxu0 0.0
        %626 = vmatpush1.xpose.msra.mxu0 0.0
        %627 = vmatprep.subr.mxu0 0.0
        %628 = vmatpush1.xpose.msra.mxu0 0.0
        %629 = vmatprep.subr.mxu0 0.0
        %630 = vmatpush1.xpose.msra.mxu0 0.0
        %631 = vmatprep.subr.mxu0 0.0
        %632 = vmatpush1.xpose.msra.mxu0 0.0
        %633 = vmatprep.mubr.f32.mxu0 0.0
        %634 = vmatmul.mubr.f32.gmra.mrb[0].mxu0 %v565
        %v635 = vpop.f32.mrb[0].mxu0
        %v636 = vadd.f32 0.0, %v635
        %v637 = vpop.f32.mrb[0].mxu0
        %638 = vdwg.mxu0
        %v639 = vmul.f32 %v636, 0.35355338
        %v640 = vsel %vm398, %v639, -inf
        %641 = vmax.xlane.f32.xlu0 %v640
        %v642 = vpop.xlane.xlu0 %641
        %v643 = vsub.f32 %v639, %v642
        %v644 = vmul.f32 %v643, 1.442695
        %v645 = vpow.pop %v644
        %v646 = vsel %vm398, %v645, 0.0
        %647 = vadd.xlane.f32.xlu0 %v646
        %v648 = vpop.xlane.xlu0 %647
        %v649 = vrcp.pop %v648
        %v650 = vmul.f32 %v645, %v649
        %651 = vrot.lane.b32.xlu0 %v392, 56
        %v652 = vpop.permute.xlu0 %651
        %v655 = vsel %vm398, %v650, 0
        %657 = vmatprep.subr.mxu0 0.0
        %658 = vmatpush1.msra.mxu0 %v652
        %659 = vmatprep.subr.mxu0 0.0
        %660 = vmatpush1.msra.mxu0 0.0
        %661 = vmatprep.subr.mxu0 0.0
        %662 = vmatpush1.msra.mxu0 0.0
        %663 = vmatprep.subr.mxu0 0.0
        %664 = vmatpush1.msra.mxu0 0.0
        %665 = vmatprep.subr.mxu0 0.0
        %666 = vmatpush1.msra.mxu0 0.0
        %667 = vmatprep.subr.mxu0 0.0
        %668 = vmatpush1.msra.mxu0 0.0
        %669 = vmatprep.subr.mxu0 0.0
        %670 = vmatpush1.msra.mxu0 0.0
        %671 = vmatprep.subr.mxu0 0.0
        %672 = vmatpush1.msra.mxu0 0.0
        %673 = vmatprep.subr.mxu0 0.0
        %674 = vmatpush1.msra.mxu0 0.0
        %675 = vmatprep.subr.mxu0 0.0
        %676 = vmatpush1.msra.mxu0 0.0
        %677 = vmatprep.subr.mxu0 0.0
        %678 = vmatpush1.msra.mxu0 0.0
        %679 = vmatprep.subr.mxu0 0.0
        %680 = vmatpush1.msra.mxu0 0.0
        %681 = vmatprep.subr.mxu0 0.0
        %682 = vmatpush1.msra.mxu0 0.0
        %683 = vmatprep.subr.mxu0 0.0
        %684 = vmatpush1.msra.mxu0 0.0
        %685 = vmatprep.subr.mxu0 0.0
        %686 = vmatpush1.msra.mxu0 0.0
        %687 = vmatprep.subr.mxu0 0.0
        %688 = vmatpush1.msra.mxu0 0.0
        %689 = vmatprep.subr.mxu0 0.0
        %690 = vmatpush1.msra.mxu0 0.0
        %691 = vmatprep.subr.mxu0 0.0
        %692 = vmatpush1.msra.mxu0 0.0
        %693 = vmatprep.subr.mxu0 0.0
        %694 = vmatpush1.msra.mxu0 0.0
        %695 = vmatprep.subr.mxu0 0.0
        %696 = vmatpush1.msra.mxu0 0.0
        %697 = vmatprep.subr.mxu0 0.0
        %698 = vmatpush1.msra.mxu0 0.0
        %699 = vmatprep.subr.mxu0 0.0
        %700 = vmatpush1.msra.mxu0 0.0
        %701 = vmatprep.subr.mxu0 0.0
        %702 = vmatpush1.msra.mxu0 0.0
        %703 = vmatprep.subr.mxu0 0.0
        %704 = vmatpush1.msra.mxu0 0.0
        %705 = vmatprep.subr.mxu0 0.0
        %706 = vmatpush1.msra.mxu0 0.0
        %707 = vmatprep.subr.mxu0 0.0
        %708 = vmatpush1.msra.mxu0 0.0
        %709 = vmatprep.subr.mxu0 0.0
        %710 = vmatpush1.msra.mxu0 0.0
        %711 = vmatprep.subr.mxu0 0.0
        %712 = vmatpush1.msra.mxu0 0.0
        %713 = vmatprep.subr.mxu0 0.0
        %714 = vmatpush1.msra.mxu0 0.0
        %715 = vmatprep.subr.mxu0 0.0
        %716 = vmatpush1.msra.mxu0 0.0
        %717 = vmatprep.subr.mxu0 0.0
        %718 = vmatpush1.msra.mxu0 0.0
        %719 = vmatprep.subr.mxu0 0.0
        %720 = vmatpush1.msra.mxu0 0.0
        %721 = vmatprep.mubr.f32.mxu0 0.0
        %722 = vmatmul.mubr.f32.gmra.mrb[0].mxu0 %v655
        %v723 = vpop.f32.mrb[0].mxu0
        %v724 = vadd.f32 0.0, %v723
        %v725 = vpop.f32.mrb[0].mxu0
        %726 = vdwg.mxu0
        %v728 = vsel %vm398, %v724, 0
        %730 = vmatprep.subr.mxu0 0.0
        %731 = vmatpush1.msra.mxu0 %v280
        %732 = vmatprep.subr.mxu0 0.0
        %733 = vmatpush1.msra.mxu0 0.0
        %734 = vmatprep.subr.mxu0 0.0
        %735 = vmatpush1.msra.mxu0 0.0
        %736 = vmatprep.subr.mxu0 0.0
        %737 = vmatpush1.msra.mxu0 0.0
        %738 = vmatprep.subr.mxu0 0.0
        %739 = vmatpush1.msra.mxu0 0.0
        %740 = vmatprep.subr.mxu0 0.0
        %741 = vmatpush1.msra.mxu0 0.0
        %742 = vmatprep.subr.mxu0 0.0
        %743 = vmatpush1.msra.mxu0 0.0
        %744 = vmatprep.subr.mxu0 0.0
        %745 = vmatpush1.msra.mxu0 0.0
        %746 = vmatprep.subr.mxu0 0.0
        %747 = vmatpush1.msra.mxu0 0.0
        %748 = vmatprep.subr.mxu0 0.0
        %749 = vmatpush1.msra.mxu0 0.0
        %750 = vmatprep.subr.mxu0 0.0
        %751 = vmatpush1.msra.mxu0 0.0
        %752 = vmatprep.subr.mxu0 0.0
        %753 = vmatpush1.msra.mxu0 0.0
        %754 = vmatprep.subr.mxu0 0.0
        %755 = vmatpush1.msra.mxu0 0.0
        %756 = vmatprep.subr.mxu0 0.0
        %757 = vmatpush1.msra.mxu0 0.0
        %758 = vmatprep.subr.mxu0 0.0
        %759 = vmatpush1.msra.mxu0 0.0
        %760 = vmatprep.subr.mxu0 0.0
        %761 = vmatpush1.msra.mxu0 0.0
        %762 = vmatprep.subr.mxu0 0.0
        %763 = vmatpush1.msra.mxu0 0.0
        %764 = vmatprep.subr.mxu0 0.0
        %765 = vmatpush1.msra.mxu0 0.0
        %766 = vmatprep.subr.mxu0 0.0
        %767 = vmatpush1.msra.mxu0 0.0
        %768 = vmatprep.subr.mxu0 0.0
        %769 = vmatpush1.msra.mxu0 0.0
        %770 = vmatprep.subr.mxu0 0.0
        %771 = vmatpush1.msra.mxu0 0.0
        %772 = vmatprep.subr.mxu0 0.0
        %773 = vmatpush1.msra.mxu0 0.0
        %774 = vmatprep.subr.mxu0 0.0
        %775 = vmatpush1.msra.mxu0 0.0
        %776 = vmatprep.subr.mxu0 0.0
        %777 = vmatpush1.msra.mxu0 0.0
        %778 = vmatprep.subr.mxu0 0.0
        %779 = vmatpush1.msra.mxu0 0.0
        %780 = vmatprep.subr.mxu0 0.0
        %781 = vmatpush1.msra.mxu0 0.0
        %782 = vmatprep.subr.mxu0 0.0
        %783 = vmatpush1.msra.mxu0 0.0
        %784 = vmatprep.subr.mxu0 0.0
        %785 = vmatpush1.msra.mxu0 0.0
        %786 = vmatprep.subr.mxu0 0.0
        %787 = vmatpush1.msra.mxu0 0.0
        %788 = vmatprep.subr.mxu0 0.0
        %789 = vmatpush1.msra.mxu0 0.0
        %790 = vmatprep.subr.mxu0 0.0
        %791 = vmatpush1.msra.mxu0 0.0
        %792 = vmatprep.subr.mxu0 0.0
        %793 = vmatpush1.msra.mxu0 0.0
        %794 = vmatprep.mubr.f32.mxu0 0.0
        %795 = vmatmul.mubr.f32.gmra.mrb[0].mxu0 %v728
        %v796 = vpop.f32.mrb[0].mxu0
        %v797 = vadd.f32 0.0, %v796
        %v798 = vpop.f32.mrb[0].mxu0
        %799 = vdwg.mxu0
        %v801 = vsel %vm398, %v558, 0
        %803 = vmatprep.subr.mxu0 0.0
        %804 = vmatpush1.msra.mxu0 %v279
        %805 = vmatprep.subr.mxu0 0.0
        %806 = vmatpush1.msra.mxu0 0.0
        %807 = vmatprep.subr.mxu0 0.0
        %808 = vmatpush1.msra.mxu0 0.0
        %809 = vmatprep.subr.mxu0 0.0
        %810 = vmatpush1.msra.mxu0 0.0
        %811 = vmatprep.subr.mxu0 0.0
        %812 = vmatpush1.msra.mxu0 0.0
        %813 = vmatprep.subr.mxu0 0.0
        %814 = vmatpush1.msra.mxu0 0.0
        %815 = vmatprep.subr.mxu0 0.0
        %816 = vmatpush1.msra.mxu0 0.0
        %817 = vmatprep.subr.mxu0 0.0
        %818 = vmatpush1.msra.mxu0 0.0
        %819 = vmatprep.subr.mxu0 0.0
        %820 = vmatpush1.msra.mxu0 0.0
        %821 = vmatprep.subr.mxu0 0.0
        %822 = vmatpush1.msra.mxu0 0.0
        %823 = vmatprep.subr.mxu0 0.0
        %824 = vmatpush1.msra.mxu0 0.0
        %825 = vmatprep.subr.mxu0 0.0
        %826 = vmatpush1.msra.mxu0 0.0
        %827 = vmatprep.subr.mxu0 0.0
        %828 = vmatpush1.msra.mxu0 0.0
        %829 = vmatprep.subr.mxu0 0.0
        %830 = vmatpush1.msra.mxu0 0.0
        %831 = vmatprep.subr.mxu0 0.0
        %832 = vmatpush1.msra.mxu0 0.0
        %833 = vmatprep.subr.mxu0 0.0
        %834 = vmatpush1.msra.mxu0 0.0
        %835 = vmatprep.subr.mxu0 0.0
        %836 = vmatpush1.msra.mxu0 0.0
        %837 = vmatprep.subr.mxu0 0.0
        %838 = vmatpush1.msra.mxu0 0.0
        %839 = vmatprep.subr.mxu0 0.0
        %840 = vmatpush1.msra.mxu0 0.0
        %841 = vmatprep.subr.mxu0 0.0
        %842 = vmatpush1.msra.mxu0 0.0
        %843 = vmatprep.subr.mxu0 0.0
        %844 = vmatpush1.msra.mxu0 0.0
        %845 = vmatprep.subr.mxu0 0.0
        %846 = vmatpush1.msra.mxu0 0.0
        %847 = vmatprep.subr.mxu0 0.0
        %848 = vmatpush1.msra.mxu0 0.0
        %849 = vmatprep.subr.mxu0 0.0
        %850 = vmatpush1.msra.mxu0 0.0
        %851 = vmatprep.subr.mxu0 0.0
        %852 = vmatpush1.msra.mxu0 0.0
        %853 = vmatprep.subr.mxu0 0.0
        %854 = vmatpush1.msra.mxu0 0.0
        %855 = vmatprep.subr.mxu0 0.0
        %856 = vmatpush1.msra.mxu0 0.0
        %857 = vmatprep.subr.mxu0 0.0
        %858 = vmatpush1.msra.mxu0 0.0
        %859 = vmatprep.subr.mxu0 0.0
        %860 = vmatpush1.msra.mxu0 0.0
        %861 = vmatprep.subr.mxu0 0.0
        %862 = vmatpush1.msra.mxu0 0.0
        %863 = vmatprep.subr.mxu0 0.0
        %864 = vmatpush1.msra.mxu0 0.0
        %865 = vmatprep.subr.mxu0 0.0
        %866 = vmatpush1.msra.mxu0 0.0
        %867 = vmatprep.mubr.f32.mxu0 0.0
        %868 = vmatmul.mubr.f32.gmra.mrb[0].mxu0 %v801
        %v869 = vpop.f32.mrb[0].mxu0
        %v870 = vadd.f32 %v797, %v869
        %v871 = vpop.f32.mrb[0].mxu0
        %872 = vdwg.mxu0
        %873 = vrot.lane.b32.xlu0 %v392, 112
        %v874 = vpop.permute.xlu0 %873
        %875 = vrot.lane.b32.xlu0 %v392, 80
        %v876 = vpop.permute.xlu0 %875
        %v877 = vsel %vm398, %v874, 0
        %v879 = vsel %vm398, %v876, 0
        %881 = vmatprep.subr.mxu0 0.0
        %882 = vmatpush1.xpose.msra.mxu0 %v879
        %883 = vmatprep.subr.mxu0 0.0
        %884 = vmatpush1.xpose.msra.mxu0 0.0
        %885 = vmatprep.subr.mxu0 0.0
        %886 = vmatpush1.xpose.msra.mxu0 0.0
        %887 = vmatprep.subr.mxu0 0.0
        %888 = vmatpush1.xpose.msra.mxu0 0.0
        %889 = vmatprep.subr.mxu0 0.0
        %890 = vmatpush1.xpose.msra.mxu0 0.0
        %891 = vmatprep.subr.mxu0 0.0
        %892 = vmatpush1.xpose.msra.mxu0 0.0
        %893 = vmatprep.subr.mxu0 0.0
        %894 = vmatpush1.xpose.msra.mxu0 0.0
        %895 = vmatprep.subr.mxu0 0.0
        %896 = vmatpush1.xpose.msra.mxu0 0.0
        %897 = vmatprep.subr.mxu0 0.0
        %898 = vmatpush1.xpose.msra.mxu0 0.0
        %899 = vmatprep.subr.mxu0 0.0
        %900 = vmatpush1.xpose.msra.mxu0 0.0
        %901 = vmatprep.subr.mxu0 0.0
        %902 = vmatpush1.xpose.msra.mxu0 0.0
        %903 = vmatprep.subr.mxu0 0.0
        %904 = vmatpush1.xpose.msra.mxu0 0.0
        %905 = vmatprep.subr.mxu0 0.0
        %906 = vmatpush1.xpose.msra.mxu0 0.0
        %907 = vmatprep.subr.mxu0 0.0
        %908 = vmatpush1.xpose.msra.mxu0 0.0
        %909 = vmatprep.subr.mxu0 0.0
        %910 = vmatpush1.xpose.msra.mxu0 0.0
        %911 = vmatprep.subr.mxu0 0.0
        %912 = vmatpush1.xpose.msra.mxu0 0.0
        %913 = vmatprep.subr.mxu0 0.0
        %914 = vmatpush1.xpose.msra.mxu0 0.0
        %915 = vmatprep.subr.mxu0 0.0
        %916 = vmatpush1.xpose.msra.mxu0 0.0
        %917 = vmatprep.subr.mxu0 0.0
        %918 = vmatpush1.xpose.msra.mxu0 0.0
        %919 = vmatprep.subr.mxu0 0.0
        %920 = vmatpush1.xpose.msra.mxu0 0.0
        %921 = vmatprep.subr.mxu0 0.0
        %922 = vmatpush1.xpose.msra.mxu0 0.0
        %923 = vmatprep.subr.mxu0 0.0
        %924 = vmatpush1.xpose.msra.mxu0 0.0
        %925 = vmatprep.subr.mxu0 0.0
        %926 = vmatpush1.xpose.msra.mxu0 0.0
        %927 = vmatprep.subr.mxu0 0.0
        %928 = vmatpush1.xpose.msra.mxu0 0.0
        %929 = vmatprep.subr.mxu0 0.0
        %930 = vmatpush1.xpose.msra.mxu0 0.0
        %931 = vmatprep.subr.mxu0 0.0
        %932 = vmatpush1.xpose.msra.mxu0 0.0
        %933 = vmatprep.subr.mxu0 0.0
        %934 = vmatpush1.xpose.msra.mxu0 0.0
        %935 = vmatprep.subr.mxu0 0.0
        %936 = vmatpush1.xpose.msra.mxu0 0.0
        %937 = vmatprep.subr.mxu0 0.0
        %938 = vmatpush1.xpose.msra.mxu0 0.0
        %939 = vmatprep.subr.mxu0 0.0
        %940 = vmatpush1.xpose.msra.mxu0 0.0
        %941 = vmatprep.subr.mxu0 0.0
        %942 = vmatpush1.xpose.msra.mxu0 0.0
        %943 = vmatprep.subr.mxu0 0.0
        %944 = vmatpush1.xpose.msra.mxu0 0.0
        %945 = vmatprep.mubr.f32.mxu0 0.0
        %946 = vmatmul.mubr.f32.gmra.mrb[0].mxu0 %v877
        %v947 = vpop.f32.mrb[0].mxu0
        %v948 = vadd.f32 0.0, %v947
        %v949 = vpop.f32.mrb[0].mxu0
        %950 = vdwg.mxu0
        %v951 = vmul.f32 %v948, 0.35355338
        %v952 = vsel %vm398, %v951, -inf
        %953 = vmax.xlane.f32.xlu0 %v952
        %v954 = vpop.xlane.xlu0 %953
        %v955 = vsub.f32 %v951, %v954
        %v956 = vmul.f32 %v955, 1.442695
        %v957 = vpow.pop %v956
        %v958 = vsel %vm398, %v957, 0.0
        %959 = vadd.xlane.f32.xlu0 %v958
        %v960 = vpop.xlane.xlu0 %959
        %v961 = vrcp.pop %v960
        %v962 = vmul.f32 %v957, %v961
        %963 = vrot.lane.b32.xlu0 %v392, 48
        %v964 = vpop.permute.xlu0 %963
        %v967 = vsel %vm398, %v962, 0
        %969 = vmatprep.subr.mxu0 0.0
        %970 = vmatpush1.msra.mxu0 %v964
        %971 = vmatprep.subr.mxu0 0.0
        %972 = vmatpush1.msra.mxu0 0.0
        %973 = vmatprep.subr.mxu0 0.0
        %974 = vmatpush1.msra.mxu0 0.0
        %975 = vmatprep.subr.mxu0 0.0
        %976 = vmatpush1.msra.mxu0 0.0
        %977 = vmatprep.subr.mxu0 0.0
        %978 = vmatpush1.msra.mxu0 0.0
        %979 = vmatprep.subr.mxu0 0.0
        %980 = vmatpush1.msra.mxu0 0.0
        %981 = vmatprep.subr.mxu0 0.0
        %982 = vmatpush1.msra.mxu0 0.0
        %983 = vmatprep.subr.mxu0 0.0
        %984 = vmatpush1.msra.mxu0 0.0
        %985 = vmatprep.subr.mxu0 0.0
        %986 = vmatpush1.msra.mxu0 0.0
        %987 = vmatprep.subr.mxu0 0.0
        %988 = vmatpush1.msra.mxu0 0.0
        %989 = vmatprep.subr.mxu0 0.0
        %990 = vmatpush1.msra.mxu0 0.0
        %991 = vmatprep.subr.mxu0 0.0
        %992 = vmatpush1.msra.mxu0 0.0
        %993 = vmatprep.subr.mxu0 0.0
        %994 = vmatpush1.msra.mxu0 0.0
        %995 = vmatprep.subr.mxu0 0.0
        %996 = vmatpush1.msra.mxu0 0.0
        %997 = vmatprep.subr.mxu0 0.0
        %998 = vmatpush1.msra.mxu0 0.0
        %999 = vmatprep.subr.mxu0 0.0
        %1000 = vmatpush1.msra.mxu0 0.0
        %1001 = vmatprep.subr.mxu0 0.0
        %1002 = vmatpush1.msra.mxu0 0.0
        %1003 = vmatprep.subr.mxu0 0.0
        %1004 = vmatpush1.msra.mxu0 0.0
        %1005 = vmatprep.subr.mxu0 0.0
        %1006 = vmatpush1.msra.mxu0 0.0
        %1007 = vmatprep.subr.mxu0 0.0
        %1008 = vmatpush1.msra.mxu0 0.0
        %1009 = vmatprep.subr.mxu0 0.0
        %1010 = vmatpush1.msra.mxu0 0.0
        %1011 = vmatprep.subr.mxu0 0.0
        %1012 = vmatpush1.msra.mxu0 0.0
        %1013 = vmatprep.subr.mxu0 0.0
        %1014 = vmatpush1.msra.mxu0 0.0
        %1015 = vmatprep.subr.mxu0 0.0
        %1016 = vmatpush1.msra.mxu0 0.0
        %1017 = vmatprep.subr.mxu0 0.0
        %1018 = vmatpush1.msra.mxu0 0.0
        %1019 = vmatprep.subr.mxu0 0.0
        %1020 = vmatpush1.msra.mxu0 0.0
        %1021 = vmatprep.subr.mxu0 0.0
        %1022 = vmatpush1.msra.mxu0 0.0
        %1023 = vmatprep.subr.mxu0 0.0
        %1024 = vmatpush1.msra.mxu0 0.0
        %1025 = vmatprep.subr.mxu0 0.0
        %1026 = vmatpush1.msra.mxu0 0.0
        %1027 = vmatprep.subr.mxu0 0.0
        %1028 = vmatpush1.msra.mxu0 0.0
        %1029 = vmatprep.subr.mxu0 0.0
        %1030 = vmatpush1.msra.mxu0 0.0
        %1031 = vmatprep.subr.mxu0 0.0
        %1032 = vmatpush1.msra.mxu0 0.0
        %1033 = vmatprep.mubr.f32.mxu0 0.0
        %1034 = vmatmul.mubr.f32.gmra.mrb[0].mxu0 %v967
        %v1035 = vpop.f32.mrb[0].mxu0
        %v1036 = vadd.f32 0.0, %v1035
        %v1037 = vpop.f32.mrb[0].mxu0
        %1038 = vdwg.mxu0
        %v1040 = vsel %vm398, %v1036, 0
        %1042 = vmatprep.subr.mxu0 0.0
        %1043 = vmatpush1.msra.mxu0 %v281
        %1044 = vmatprep.subr.mxu0 0.0
        %1045 = vmatpush1.msra.mxu0 0.0
        %1046 = vmatprep.subr.mxu0 0.0
        %1047 = vmatpush1.msra.mxu0 0.0
        %1048 = vmatprep.subr.mxu0 0.0
        %1049 = vmatpush1.msra.mxu0 0.0
        %1050 = vmatprep.subr.mxu0 0.0
        %1051 = vmatpush1.msra.mxu0 0.0
        %1052 = vmatprep.subr.mxu0 0.0
        %1053 = vmatpush1.msra.mxu0 0.0
        %1054 = vmatprep.subr.mxu0 0.0
        %1055 = vmatpush1.msra.mxu0 0.0
        %1056 = vmatprep.subr.mxu0 0.0
        %1057 = vmatpush1.msra.mxu0 0.0
        %1058 = vmatprep.subr.mxu0 0.0
        %1059 = vmatpush1.msra.mxu0 0.0
        %1060 = vmatprep.subr.mxu0 0.0
        %1061 = vmatpush1.msra.mxu0 0.0
        %1062 = vmatprep.subr.mxu0 0.0
        %1063 = vmatpush1.msra.mxu0 0.0
        %1064 = vmatprep.subr.mxu0 0.0
        %1065 = vmatpush1.msra.mxu0 0.0
        %1066 = vmatprep.subr.mxu0 0.0
        %1067 = vmatpush1.msra.mxu0 0.0
        %1068 = vmatprep.subr.mxu0 0.0
        %1069 = vmatpush1.msra.mxu0 0.0
        %1070 = vmatprep.subr.mxu0 0.0
        %1071 = vmatpush1.msra.mxu0 0.0
        %1072 = vmatprep.subr.mxu0 0.0
        %1073 = vmatpush1.msra.mxu0 0.0
        %1074 = vmatprep.subr.mxu0 0.0
        %1075 = vmatpush1.msra.mxu0 0.0
        %1076 = vmatprep.subr.mxu0 0.0
        %1077 = vmatpush1.msra.mxu0 0.0
        %1078 = vmatprep.subr.mxu0 0.0
        %1079 = vmatpush1.msra.mxu0 0.0
        %1080 = vmatprep.subr.mxu0 0.0
        %1081 = vmatpush1.msra.mxu0 0.0
        %1082 = vmatprep.subr.mxu0 0.0
        %1083 = vmatpush1.msra.mxu0 0.0
        %1084 = vmatprep.subr.mxu0 0.0
        %1085 = vmatpush1.msra.mxu0 0.0
        %1086 = vmatprep.subr.mxu0 0.0
        %1087 = vmatpush1.msra.mxu0 0.0
        %1088 = vmatprep.subr.mxu0 0.0
        %1089 = vmatpush1.msra.mxu0 0.0
        %1090 = vmatprep.subr.mxu0 0.0
        %1091 = vmatpush1.msra.mxu0 0.0
        %1092 = vmatprep.subr.mxu0 0.0
        %1093 = vmatpush1.msra.mxu0 0.0
        %1094 = vmatprep.subr.mxu0 0.0
        %1095 = vmatpush1.msra.mxu0 0.0
        %1096 = vmatprep.subr.mxu0 0.0
        %1097 = vmatpush1.msra.mxu0 0.0
        %1098 = vmatprep.subr.mxu0 0.0
        %1099 = vmatpush1.msra.mxu0 0.0
        %1100 = vmatprep.subr.mxu0 0.0
        %1101 = vmatpush1.msra.mxu0 0.0
        %1102 = vmatprep.subr.mxu0 0.0
        %1103 = vmatpush1.msra.mxu0 0.0
        %1104 = vmatprep.subr.mxu0 0.0
        %1105 = vmatpush1.msra.mxu0 0.0
        %1106 = vmatprep.mubr.f32.mxu0 0.0
        %1107 = vmatmul.mubr.f32.gmra.mrb[0].mxu0 %v1040
        %v1108 = vpop.f32.mrb[0].mxu0
        %v1109 = vadd.f32 0.0, %v1108
        %v1110 = vpop.f32.mrb[0].mxu0
        %1111 = vdwg.mxu0
        %v1112 = vadd.f32 %v870, %v1109
        %1113 = vrot.lane.b32.xlu0 %v392, 104
        %v1114 = vpop.permute.xlu0 %1113
        %1115 = vrot.lane.b32.xlu0 %v392, 72
        %v1116 = vpop.permute.xlu0 %1115
        %v1117 = vsel %vm398, %v1114, 0
        %v1119 = vsel %vm398, %v1116, 0
        %1121 = vmatprep.subr.mxu0 0.0
        %1122 = vmatpush1.xpose.msra.mxu0 %v1119
        %1123 = vmatprep.subr.mxu0 0.0
        %1124 = vmatpush1.xpose.msra.mxu0 0.0
        %1125 = vmatprep.subr.mxu0 0.0
        %1126 = vmatpush1.xpose.msra.mxu0 0.0
        %1127 = vmatprep.subr.mxu0 0.0
        %1128 = vmatpush1.xpose.msra.mxu0 0.0
        %1129 = vmatprep.subr.mxu0 0.0
        %1130 = vmatpush1.xpose.msra.mxu0 0.0
        %1131 = vmatprep.subr.mxu0 0.0
        %1132 = vmatpush1.xpose.msra.mxu0 0.0
        %1133 = vmatprep.subr.mxu0 0.0
        %1134 = vmatpush1.xpose.msra.mxu0 0.0
        %1135 = vmatprep.subr.mxu0 0.0
        %1136 = vmatpush1.xpose.msra.mxu0 0.0
        %1137 = vmatprep.subr.mxu0 0.0
        %1138 = vmatpush1.xpose.msra.mxu0 0.0
        %1139 = vmatprep.subr.mxu0 0.0
        %1140 = vmatpush1.xpose.msra.mxu0 0.0
        %1141 = vmatprep.subr.mxu0 0.0
        %1142 = vmatpush1.xpose.msra.mxu0 0.0
        %1143 = vmatprep.subr.mxu0 0.0
        %1144 = vmatpush1.xpose.msra.mxu0 0.0
        %1145 = vmatprep.subr.mxu0 0.0
        %1146 = vmatpush1.xpose.msra.mxu0 0.0
        %1147 = vmatprep.subr.mxu0 0.0
        %1148 = vmatpush1.xpose.msra.mxu0 0.0
        %1149 = vmatprep.subr.mxu0 0.0
        %1150 = vmatpush1.xpose.msra.mxu0 0.0
        %1151 = vmatprep.subr.mxu0 0.0
        %1152 = vmatpush1.xpose.msra.mxu0 0.0
        %1153 = vmatprep.subr.mxu0 0.0
        %1154 = vmatpush1.xpose.msra.mxu0 0.0
        %1155 = vmatprep.subr.mxu0 0.0
        %1156 = vmatpush1.xpose.msra.mxu0 0.0
        %1157 = vmatprep.subr.mxu0 0.0
        %1158 = vmatpush1.xpose.msra.mxu0 0.0
        %1159 = vmatprep.subr.mxu0 0.0
        %1160 = vmatpush1.xpose.msra.mxu0 0.0
        %1161 = vmatprep.subr.mxu0 0.0
        %1162 = vmatpush1.xpose.msra.mxu0 0.0
        %1163 = vmatprep.subr.mxu0 0.0
        %1164 = vmatpush1.xpose.msra.mxu0 0.0
        %1165 = vmatprep.subr.mxu0 0.0
        %1166 = vmatpush1.xpose.msra.mxu0 0.0
        %1167 = vmatprep.subr.mxu0 0.0
        %1168 = vmatpush1.xpose.msra.mxu0 0.0
        %1169 = vmatprep.subr.mxu0 0.0
        %1170 = vmatpush1.xpose.msra.mxu0 0.0
        %1171 = vmatprep.subr.mxu0 0.0
        %1172 = vmatpush1.xpose.msra.mxu0 0.0
        %1173 = vmatprep.subr.mxu0 0.0
        %1174 = vmatpush1.xpose.msra.mxu0 0.0
        %1175 = vmatprep.subr.mxu0 0.0
        %1176 = vmatpush1.xpose.msra.mxu0 0.0
        %1177 = vmatprep.subr.mxu0 0.0
        %1178 = vmatpush1.xpose.msra.mxu0 0.0
        %1179 = vmatprep.subr.mxu0 0.0
        %1180 = vmatpush1.xpose.msra.mxu0 0.0
        %1181 = vmatprep.subr.mxu0 0.0
        %1182 = vmatpush1.xpose.msra.mxu0 0.0
        %1183 = vmatprep.subr.mxu0 0.0
        %1184 = vmatpush1.xpose.msra.mxu0 0.0
        %1185 = vmatprep.mubr.f32.mxu0 0.0
        %1186 = vmatmul.mubr.f32.gmra.mrb[0].mxu0 %v1117
        %v1187 = vpop.f32.mrb[0].mxu0
        %v1188 = vadd.f32 0.0, %v1187
        %v1189 = vpop.f32.mrb[0].mxu0
        %1190 = vdwg.mxu0
        %v1191 = vmul.f32 %v1188, 0.35355338
        %v1192 = vsel %vm398, %v1191, -inf
        %1193 = vmax.xlane.f32.xlu0 %v1192
        %v1194 = vpop.xlane.xlu0 %1193
        %v1195 = vsub.f32 %v1191, %v1194
        %v1196 = vmul.f32 %v1195, 1.442695
        %v1197 = vpow.pop %v1196
        %v1198 = vsel %vm398, %v1197, 0.0
        %1199 = vadd.xlane.f32.xlu0 %v1198
        %v1200 = vpop.xlane.xlu0 %1199
        %v1201 = vrcp.pop %v1200
        %v1202 = vmul.f32 %v1197, %v1201
        %1203 = vrot.lane.b32.xlu0 %v392, 40
        %v1204 = vpop.permute.xlu0 %1203
        %v1207 = vsel %vm398, %v1202, 0
        %1209 = vmatprep.subr.mxu0 0.0
        %1210 = vmatpush1.msra.mxu0 %v1204
        %1211 = vmatprep.subr.mxu0 0.0
        %1212 = vmatpush1.msra.mxu0 0.0
        %1213 = vmatprep.subr.mxu0 0.0
        %1214 = vmatpush1.msra.mxu0 0.0
        %1215 = vmatprep.subr.mxu0 0.0
        %1216 = vmatpush1.msra.mxu0 0.0
        %1217 = vmatprep.subr.mxu0 0.0
        %1218 = vmatpush1.msra.mxu0 0.0
        %1219 = vmatprep.subr.mxu0 0.0
        %1220 = vmatpush1.msra.mxu0 0.0
        %1221 = vmatprep.subr.mxu0 0.0
        %1222 = vmatpush1.msra.mxu0 0.0
        %1223 = vmatprep.subr.mxu0 0.0
        %1224 = vmatpush1.msra.mxu0 0.0
        %1225 = vmatprep.subr.mxu0 0.0
        %1226 = vmatpush1.msra.mxu0 0.0
        %1227 = vmatprep.subr.mxu0 0.0
        %1228 = vmatpush1.msra.mxu0 0.0
        %1229 = vmatprep.subr.mxu0 0.0
        %1230 = vmatpush1.msra.mxu0 0.0
        %1231 = vmatprep.subr.mxu0 0.0
        %1232 = vmatpush1.msra.mxu0 0.0
        %1233 = vmatprep.subr.mxu0 0.0
        %1234 = vmatpush1.msra.mxu0 0.0
        %1235 = vmatprep.subr.mxu0 0.0
        %1236 = vmatpush1.msra.mxu0 0.0
        %1237 = vmatprep.subr.mxu0 0.0
        %1238 = vmatpush1.msra.mxu0 0.0
        %1239 = vmatprep.subr.mxu0 0.0
        %1240 = vmatpush1.msra.mxu0 0.0
        %1241 = vmatprep.subr.mxu0 0.0
        %1242 = vmatpush1.msra.mxu0 0.0
        %1243 = vmatprep.subr.mxu0 0.0
        %1244 = vmatpush1.msra.mxu0 0.0
        %1245 = vmatprep.subr.mxu0 0.0
        %1246 = vmatpush1.msra.mxu0 0.0
        %1247 = vmatprep.subr.mxu0 0.0
        %1248 = vmatpush1.msra.mxu0 0.0
        %1249 = vmatprep.subr.mxu0 0.0
        %1250 = vmatpush1.msra.mxu0 0.0
        %1251 = vmatprep.subr.mxu0 0.0
        %1252 = vmatpush1.msra.mxu0 0.0
        %1253 = vmatprep.subr.mxu0 0.0
        %1254 = vmatpush1.msra.mxu0 0.0
        %1255 = vmatprep.subr.mxu0 0.0
        %1256 = vmatpush1.msra.mxu0 0.0
        %1257 = vmatprep.subr.mxu0 0.0
        %1258 = vmatpush1.msra.mxu0 0.0
        %1259 = vmatprep.subr.mxu0 0.0
        %1260 = vmatpush1.msra.mxu0 0.0
        %1261 = vmatprep.subr.mxu0 0.0
        %1262 = vmatpush1.msra.mxu0 0.0
        %1263 = vmatprep.subr.mxu0 0.0
        %1264 = vmatpush1.msra.mxu0 0.0
        %1265 = vmatprep.subr.mxu0 0.0
        %1266 = vmatpush1.msra.mxu0 0.0
        %1267 = vmatprep.subr.mxu0 0.0
        %1268 = vmatpush1.msra.mxu0 0.0
        %1269 = vmatprep.subr.mxu0 0.0
        %1270 = vmatpush1.msra.mxu0 0.0
        %1271 = vmatprep.subr.mxu0 0.0
        %1272 = vmatpush1.msra.mxu0 0.0
        %1273 = vmatprep.mubr.f32.mxu0 0.0
        %1274 = vmatmul.mubr.f32.gmra.mrb[0].mxu0 %v1207
        %v1275 = vpop.f32.mrb[0].mxu0
        %v1276 = vadd.f32 0.0, %v1275
        %v1277 = vpop.f32.mrb[0].mxu0
        %1278 = vdwg.mxu0
        %v1280 = vsel %vm398, %v1276, 0
        %1282 = vmatprep.subr.mxu0 0.0
        %1283 = vmatpush1.msra.mxu0 %v282
        %1284 = vmatprep.subr.mxu0 0.0
        %1285 = vmatpush1.msra.mxu0 0.0
        %1286 = vmatprep.subr.mxu0 0.0
        %1287 = vmatpush1.msra.mxu0 0.0
        %1288 = vmatprep.subr.mxu0 0.0
        %1289 = vmatpush1.msra.mxu0 0.0
        %1290 = vmatprep.subr.mxu0 0.0
        %1291 = vmatpush1.msra.mxu0 0.0
        %1292 = vmatprep.subr.mxu0 0.0
        %1293 = vmatpush1.msra.mxu0 0.0
        %1294 = vmatprep.subr.mxu0 0.0
        %1295 = vmatpush1.msra.mxu0 0.0
        %1296 = vmatprep.subr.mxu0 0.0
        %1297 = vmatpush1.msra.mxu0 0.0
        %1298 = vmatprep.subr.mxu0 0.0
        %1299 = vmatpush1.msra.mxu0 0.0
        %1300 = vmatprep.subr.mxu0 0.0
        %1301 = vmatpush1.msra.mxu0 0.0
        %1302 = vmatprep.subr.mxu0 0.0
        %1303 = vmatpush1.msra.mxu0 0.0
        %1304 = vmatprep.subr.mxu0 0.0
        %1305 = vmatpush1.msra.mxu0 0.0
        %1306 = vmatprep.subr.mxu0 0.0
        %1307 = vmatpush1.msra.mxu0 0.0
        %1308 = vmatprep.subr.mxu0 0.0
        %1309 = vmatpush1.msra.mxu0 0.0
        %1310 = vmatprep.subr.mxu0 0.0
        %1311 = vmatpush1.msra.mxu0 0.0
        %1312 = vmatprep.subr.mxu0 0.0
        %1313 = vmatpush1.msra.mxu0 0.0
        %1314 = vmatprep.subr.mxu0 0.0
        %1315 = vmatpush1.msra.mxu0 0.0
        %1316 = vmatprep.subr.mxu0 0.0
        %1317 = vmatpush1.msra.mxu0 0.0
        %1318 = vmatprep.subr.mxu0 0.0
        %1319 = vmatpush1.msra.mxu0 0.0
        %1320 = vmatprep.subr.mxu0 0.0
        %1321 = vmatpush1.msra.mxu0 0.0
        %1322 = vmatprep.subr.mxu0 0.0
        %1323 = vmatpush1.msra.mxu0 0.0
        %1324 = vmatprep.subr.mxu0 0.0
        %1325 = vmatpush1.msra.mxu0 0.0
        %1326 = vmatprep.subr.mxu0 0.0
        %1327 = vmatpush1.msra.mxu0 0.0
        %1328 = vmatprep.subr.mxu0 0.0
        %1329 = vmatpush1.msra.mxu0 0.0
        %1330 = vmatprep.subr.mxu0 0.0
        %1331 = vmatpush1.msra.mxu0 0.0
        %1332 = vmatprep.subr.mxu0 0.0
        %1333 = vmatpush1.msra.mxu0 0.0
        %1334 = vmatprep.subr.mxu0 0.0
        %1335 = vmatpush1.msra.mxu0 0.0
        %1336 = vmatprep.subr.mxu0 0.0
        %1337 = vmatpush1.msra.mxu0 0.0
        %1338 = vmatprep.subr.mxu0 0.0
        %1339 = vmatpush1.msra.mxu0 0.0
        %1340 = vmatprep.subr.mxu0 0.0
        %1341 = vmatpush1.msra.mxu0 0.0
        %1342 = vmatprep.subr.mxu0 0.0
        %1343 = vmatpush1.msra.mxu0 0.0
        %1344 = vmatprep.subr.mxu0 0.0
        %1345 = vmatpush1.msra.mxu0 0.0
        %1346 = vmatprep.mubr.f32.mxu0 0.0
        %1347 = vmatmul.mubr.f32.gmra.mrb[0].mxu0 %v1280
        %v1348 = vpop.f32.mrb[0].mxu0
        %v1349 = vadd.f32 0.0, %v1348
        %v1350 = vpop.f32.mrb[0].mxu0
        %1351 = vdwg.mxu0
        %v1352 = vadd.f32 %v1112, %v1349
        %v1353 = vadd.f32 %v274, %v1352
        %v1354 = vlaneseq
        %v1355 = vshrl.u32 %v1354, 7
        %v1356 = vsub.s32 4, %v1355
        %v1357 = vrot.slane %v295, %v1356
        %v1358 = vadd.f32 %v1353, %v1357
        %v1359 = vsel %vm297, %v1358, 0.0
        %1360 = vadd.xlane.f32.xlu0 %v1359
        %v1361 = vpop.xlane.xlu0 %1360
        %v1362 = vmul.f32 %v1361, %v301
        %v1363 = vsub.f32 %v1358, %v1362
        %v1364 = vmul.f32 %v1363, %v1363
        %v1365 = vsel %vm297, %v1364, 0.0
        %1366 = vadd.xlane.f32.xlu0 %v1365
        %v1367 = vpop.xlane.xlu0 %1366
        %v1368 = vmul.f32 %v1367, %v301
        %v1369 = vadd.f32 %v1368, 1e-05
        %v1370 = vrsqrt.pop %v1369
        %v1371 = vmul.f32 %v1363, %v1370
        %v1372 = vlaneseq
        %v1373 = vshrl.u32 %v1372, 7
        %v1374 = vsub.s32 2, %v1373
        %v1375 = vrot.slane %v295, %v1374
        %v1376 = vmul.f32 %v1371, %v1375
        %v1377 = vlaneseq
        %v1378 = vshrl.u32 %v1377, 7
        %v1379 = vsub.s32 3, %v1378
        %v1380 = vrot.slane %v295, %v1379
        %v1381 = vadd.f32 %v1376, %v1380
        %v1383 = vlaneseq
        %v1384 = vshrl.u32 %v1383, 7
        %v1385 = vsub.s32 0, %v1384
        %v1386 = vrot.slane %v296, %v1385
        %v1389 = vsel %vm297, %v1381, 0
        %1391 = vmatprep.subr.mxu0 0.0
        %1392 = vmatpush1.msra.mxu0 %v283
        %1393 = vmatprep.subr.mxu0 0.0
        %1394 = vmatpush1.msra.mxu0 %v284
        %1395 = vmatprep.subr.mxu0 0.0
        %1396 = vmatpush1.msra.mxu0 %v285
        %1397 = vmatprep.subr.mxu0 0.0
        %1398 = vmatpush1.msra.mxu0 %v286
        %1399 = vmatprep.subr.mxu0 0.0
        %1400 = vmatpush1.msra.mxu0 0.0
        %1401 = vmatprep.subr.mxu0 0.0
        %1402 = vmatpush1.msra.mxu0 0.0
        %1403 = vmatprep.subr.mxu0 0.0
        %1404 = vmatpush1.msra.mxu0 0.0
        %1405 = vmatprep.subr.mxu0 0.0
        %1406 = vmatpush1.msra.mxu0 0.0
        %1407 = vmatprep.subr.mxu0 0.0
        %1408 = vmatpush1.msra.mxu0 0.0
        %1409 = vmatprep.subr.mxu0 0.0
        %1410 = vmatpush1.msra.mxu0 0.0
        %1411 = vmatprep.subr.mxu0 0.0
        %1412 = vmatpush1.msra.mxu0 0.0
        %1413 = vmatprep.subr.mxu0 0.0
        %1414 = vmatpush1.msra.mxu0 0.0
        %1415 = vmatprep.subr.mxu0 0.0
        %1416 = vmatpush1.msra.mxu0 0.0
        %1417 = vmatprep.subr.mxu0 0.0
        %1418 = vmatpush1.msra.mxu0 0.0
        %1419 = vmatprep.subr.mxu0 0.0
        %1420 = vmatpush1.msra.mxu0 0.0
        %1421 = vmatprep.subr.mxu0 0.0
        %1422 = vmatpush1.msra.mxu0 0.0
        %1423 = vmatprep.subr.mxu0 0.0
        %1424 = vmatpush1.msra.mxu0 0.0
        %1425 = vmatprep.subr.mxu0 0.0
        %1426 = vmatpush1.msra.mxu0 0.0
        %1427 = vmatprep.subr.mxu0 0.0
        %1428 = vmatpush1.msra.mxu0 0.0
        %1429 = vmatprep.subr.mxu0 0.0
        %1430 = vmatpush1.msra.mxu0 0.0
        %1431 = vmatprep.subr.mxu0 0.0
        %1432 = vmatpush1.msra.mxu0 0.0
        %1433 = vmatprep.subr.mxu0 0.0
        %1434 = vmatpush1.msra.mxu0 0.0
        %1435 = vmatprep.subr.mxu0 0.0
        %1436 = vmatpush1.msra.mxu0 0.0
        %1437 = vmatprep.subr.mxu0 0.0
        %1438 = vmatpush1.msra.mxu0 0.0
        %1439 = vmatprep.subr.mxu0 0.0
        %1440 = vmatpush1.msra.mxu0 0.0
        %1441 = vmatprep.subr.mxu0 0.0
        %1442 = vmatpush1.msra.mxu0 0.0
        %1443 = vmatprep.subr.mxu0 0.0
        %1444 = vmatpush1.msra.mxu0 0.0
        %1445 = vmatprep.subr.mxu0 0.0
        %1446 = vmatpush1.msra.mxu0 0.0
        %1447 = vmatprep.subr.mxu0 0.0
        %1448 = vmatpush1.msra.mxu0 0.0
        %1449 = vmatprep.subr.mxu0 0.0
        %1450 = vmatpush1.msra.mxu0 0.0
        %1451 = vmatprep.subr.mxu0 0.0
        %1452 = vmatpush1.msra.mxu0 0.0
        %1453 = vmatprep.subr.mxu0 0.0
        %1454 = vmatpush1.msra.mxu0 0.0
        %1455 = vmatprep.mubr.f32.mxu0 0.0
        %1456 = vmatmul.mubr.f32.gmra.mrb[0].mxu0 %v1389
        %v1457 = vpop.f32.mrb[0].mxu0
        %v1458 = vadd.f32 %v1386, %v1457
        %v1459 = vpop.f32.mrb[0].mxu0
        %1460 = vdwg.mxu0
        %v1461 = vmul.f32 %v1458, 0.5
        %v1462 = vmul.f32 %v1458, 0.044715
        %v1463 = vmul.f32 %v1462, %v1458
        %v1464 = vmul.f32 %v1463, %v1458
        %v1465 = vadd.f32 %v1458, %v1464
        %v1466 = vmul.f32 %v1465, 0.7978846
        %v1467 = vtanh.pop %v1466
        %v1468 = vadd.f32 %v1467, 1.0
        %v1469 = vmul.f32 %v1461, %v1468
        %v1470 = vlaneseq
        %v1471 = vshrl.u32 %v1470, 7
        %v1472 = vsub.s32 5, %v1471
        %v1473 = vrot.slane %v295, %v1472
        %vm1474 = vcmask 523264
        %v1476 = vsel %vm1474, %v1469, 0
        %1478 = vmatprep.subr.mxu0 0.0
        %1479 = vmatpush1.msra.mxu0 %v287
        %1480 = vmatprep.subr.mxu0 0.0
        %1481 = vmatpush1.msra.mxu0 %v288
        %1482 = vmatprep.subr.mxu0 0.0
        %1483 = vmatpush1.msra.mxu0 %v289
        %1484 = vmatprep.subr.mxu0 0.0
        %1485 = vmatpush1.msra.mxu0 %v290
        %1486 = vmatprep.subr.mxu0 0.0
        %1487 = vmatpush1.msra.mxu0 %v291
        %1488 = vmatprep.subr.mxu0 0.0
        %1489 = vmatpush1.msra.mxu0 %v292
        %1490 = vmatprep.subr.mxu0 0.0
        %1491 = vmatpush1.msra.mxu0 %v293
        %1492 = vmatprep.subr.mxu0 0.0
        %1493 = vmatpush1.msra.mxu0 %v294
        %1494 = vmatprep.subr.mxu0 0.0
        %1495 = vmatpush1.msra.mxu0 0.0
        %1496 = vmatprep.subr.mxu0 0.0
        %1497 = vmatpush1.msra.mxu0 0.0
        %1498 = vmatprep.subr.mxu0 0.0
        %1499 = vmatpush1.msra.mxu0 0.0
        %1500 = vmatprep.subr.mxu0 0.0
        %1501 = vmatpush1.msra.mxu0 0.0
        %1502 = vmatprep.subr.mxu0 0.0
        %1503 = vmatpush1.msra.mxu0 0.0
        %1504 = vmatprep.subr.mxu0 0.0
        %1505 = vmatpush1.msra.mxu0 0.0
        %1506 = vmatprep.subr.mxu0 0.0
        %1507 = vmatpush1.msra.mxu0 0.0
        %1508 = vmatprep.subr.mxu0 0.0
        %1509 = vmatpush1.msra.mxu0 0.0
        %1510 = vmatprep.subr.mxu0 0.0
        %1511 = vmatpush1.msra.mxu0 0.0
        %1512 = vmatprep.subr.mxu0 0.0
        %1513 = vmatpush1.msra.mxu0 0.0
        %1514 = vmatprep.subr.mxu0 0.0
        %1515 = vmatpush1.msra.mxu0 0.0
        %1516 = vmatprep.subr.mxu0 0.0
        %1517 = vmatpush1.msra.mxu0 0.0
        %1518 = vmatprep.subr.mxu0 0.0
        %1519 = vmatpush1.msra.mxu0 0.0
        %1520 = vmatprep.subr.mxu0 0.0
        %1521 = vmatpush1.msra.mxu0 0.0
        %1522 = vmatprep.subr.mxu0 0.0
        %1523 = vmatpush1.msra.mxu0 0.0
        %1524 = vmatprep.subr.mxu0 0.0
        %1525 = vmatpush1.msra.mxu0 0.0
        %1526 = vmatprep.subr.mxu0 0.0
        %1527 = vmatpush1.msra.mxu0 0.0
        %1528 = vmatprep.subr.mxu0 0.0
        %1529 = vmatpush1.msra.mxu0 0.0
        %1530 = vmatprep.subr.mxu0 0.0
        %1531 = vmatpush1.msra.mxu0 0.0
        %1532 = vmatprep.subr.mxu0 0.0
        %1533 = vmatpush1.msra.mxu0 0.0
        %1534 = vmatprep.subr.mxu0 0.0
        %1535 = vmatpush1.msra.mxu0 0.0
        %1536 = vmatprep.subr.mxu0 0.0
        %1537 = vmatpush1.msra.mxu0 0.0
        %1538 = vmatprep.subr.mxu0 0.0
        %1539 = vmatpush1.msra.mxu0 0.0
        %1540 = vmatprep.subr.mxu0 0.0
        %1541 = vmatpush1.msra.mxu0 0.0
        %1542 = vmatprep.mubr.f32.mxu0 0.0
        %1543 = vmatmul.mubr.f32.gmra.mrb[0].mxu0 %v1476
        %v1544 = vpop.f32.mrb[0].mxu0
        %v1545 = vadd.f32 %v1473, %v1544
        %v1546 = vpop.f32.mrb[0].mxu0
        %1547 = vdwg.mxu0
        %v1548 = vadd.f32 %v1358, %v1545
        %s1549 = scalar_lea.vmem %s1, 32
        %v1550 = vld [vmem:[%s1549] sm:$0xff]
        %v1551 = vld [vmem:[%s1549 + $0x8] sm:$0xff]
        %v1552 = vld [vmem:[%s1549 + $0x10] sm:$0xff]
        %v1553 = vld [vmem:[%s1549 + $0x18] sm:$0xff]
        %s1554 = scalar_lea.vmem %s2, 32
        %v1555 = vld [vmem:[%s1554] sm:$0xff]
        %v1556 = vld [vmem:[%s1554 + $0x8] sm:$0xff]
        %v1557 = vld [vmem:[%s1554 + $0x10] sm:$0xff]
        %v1558 = vld [vmem:[%s1554 + $0x18] sm:$0xff]
        %s1559 = scalar_lea.vmem %s3, 32
        %v1560 = vld [vmem:[%s1559] sm:$0xff]
        %v1561 = vld [vmem:[%s1559 + $0x8] sm:$0xff]
        %v1562 = vld [vmem:[%s1559 + $0x10] sm:$0xff]
        %v1563 = vld [vmem:[%s1559 + $0x18] sm:$0xff]
        %s1564 = scalar_lea.vmem %s4, 64
        %v1565 = vld [vmem:[%s1564] sm:$0xff]
        %v1566 = vld [vmem:[%s1564 + $0x8] sm:$0xff]
        %v1567 = vld [vmem:[%s1564 + $0x10] sm:$0xff]
        %v1568 = vld [vmem:[%s1564 + $0x18] sm:$0xff]
        %v1569 = vld [vmem:[%s1564 + $0x20] sm:$0xff]
        %v1570 = vld [vmem:[%s1564 + $0x28] sm:$0xff]
        %v1571 = vld [vmem:[%s1564 + $0x30] sm:$0xff]
        %v1572 = vld [vmem:[%s1564 + $0x38] sm:$0xff]
        %s1573 = scalar_lea.vmem %s5, 8
        %v1574 = vld [vmem:[%s1573] sm:$0x3f]
        %s1575 = scalar_lea.vmem %s6, 1
        %v1576 = vld [vmem:[%s1575] sm:$0x1]
        %v1577 = vsel %vm297, %v1548, 0.0
        %1578 = vadd.xlane.f32.xlu0 %v1577
        %v1579 = vpop.xlane.xlu0 %1578
        %v1580 = vmul.f32 %v1579, %v301
        %v1581 = vsub.f32 %v1548, %v1580
        %v1582 = vmul.f32 %v1581, %v1581
        %v1583 = vsel %vm297, %v1582, 0.0
        %1584 = vadd.xlane.f32.xlu0 %v1583
        %v1585 = vpop.xlane.xlu0 %1584
        %v1586 = vmul.f32 %v1585, %v301
        %v1587 = vadd.f32 %v1586, 1e-05
        %v1588 = vrsqrt.pop %v1587
        %v1589 = vmul.f32 %v1581, %v1588
        %v1590 = vlaneseq
        %v1591 = vshrl.u32 %v1590, 7
        %v1592 = vsub.s32 0, %v1591
        %v1593 = vrot.slane %v1574, %v1592
        %v1594 = vmul.f32 %v1589, %v1593
        %v1595 = vlaneseq
        %v1596 = vshrl.u32 %v1595, 7
        %v1597 = vsub.s32 1, %v1596
        %v1598 = vrot.slane %v1574, %v1597
        %v1599 = vadd.f32 %v1594, %v1598
        %v1601 = vsel %vm297, %v1599, 0
        %1603 = vmatprep.subr.mxu0 0.0
        %1604 = vmatpush1.msra.mxu0 %v1550
        %1605 = vmatprep.subr.mxu0 0.0
        %1606 = vmatpush1.msra.mxu0 %v1551
        %1607 = vmatprep.subr.mxu0 0.0
        %1608 = vmatpush1.msra.mxu0 %v1552
        %1609 = vmatprep.subr.mxu0 0.0
        %1610 = vmatpush1.msra.mxu0 %v1553
        %1611 = vmatprep.subr.mxu0 0.0
        %1612 = vmatpush1.msra.mxu0 0.0
        %1613 = vmatprep.subr.mxu0 0.0
        %1614 = vmatpush1.msra.mxu0 0.0
        %1615 = vmatprep.subr.mxu0 0.0
        %1616 = vmatpush1.msra.mxu0 0.0
        %1617 = vmatprep.subr.mxu0 0.0
        %1618 = vmatpush1.msra.mxu0 0.0
        %1619 = vmatprep.subr.mxu0 0.0
        %1620 = vmatpush1.msra.mxu0 0.0
        %1621 = vmatprep.subr.mxu0 0.0
        %1622 = vmatpush1.msra.mxu0 0.0
        %1623 = vmatprep.subr.mxu0 0.0
        %1624 = vmatpush1.msra.mxu0 0.0
        %1625 = vmatprep.subr.mxu0 0.0
        %1626 = vmatpush1.msra.mxu0 0.0
        %1627 = vmatprep.subr.mxu0 0.0
        %1628 = vmatpush1.msra.mxu0 0.0
        %1629 = vmatprep.subr.mxu0 0.0
        %1630 = vmatpush1.msra.mxu0 0.0
        %1631 = vmatprep.subr.mxu0 0.0
        %1632 = vmatpush1.msra.mxu0 0.0
        %1633 = vmatprep.subr.mxu0 0.0
        %1634 = vmatpush1.msra.mxu0 0.0
        %1635 = vmatprep.subr.mxu0 0.0
        %1636 = vmatpush1.msra.mxu0 0.0
        %1637 = vmatprep.subr.mxu0 0.0
        %1638 = vmatpush1.msra.mxu0 0.0
        %1639 = vmatprep.subr.mxu0 0.0
        %1640 = vmatpush1.msra.mxu0 0.0
        %1641 = vmatprep.subr.mxu0 0.0
        %1642 = vmatpush1.msra.mxu0 0.0
        %1643 = vmatprep.subr.mxu0 0.0
        %1644 = vmatpush1.msra.mxu0 0.0
        %1645 = vmatprep.subr.mxu0 0.0
        %1646 = vmatpush1.msra.mxu0 0.0
        %1647 = vmatprep.subr.mxu0 0.0
        %1648 = vmatpush1.msra.mxu0 0.0
        %1649 = vmatprep.subr.mxu0 0.0
        %1650 = vmatpush1.msra.mxu0 0.0
        %1651 = vmatprep.subr.mxu0 0.0
        %1652 = vmatpush1.msra.mxu0 0.0
        %1653 = vmatprep.subr.mxu0 0.0
        %1654 = vmatpush1.msra.mxu0 0.0
        %1655 = vmatprep.subr.mxu0 0.0
        %1656 = vmatpush1.msra.mxu0 0.0
        %1657 = vmatprep.subr.mxu0 0.0
        %1658 = vmatpush1.msra.mxu0 0.0
        %1659 = vmatprep.subr.mxu0 0.0
        %1660 = vmatpush1.msra.mxu0 0.0
        %1661 = vmatprep.subr.mxu0 0.0
        %1662 = vmatpush1.msra.mxu0 0.0
        %1663 = vmatprep.subr.mxu0 0.0
        %1664 = vmatpush1.msra.mxu0 0.0
        %1665 = vmatprep.subr.mxu0 0.0
        %1666 = vmatpush1.msra.mxu0 0.0
        %1667 = vmatprep.mubr.f32.mxu0 0.0
        %1668 = vmatmul.mubr.f32.gmra.mrb[0].mxu0 %v1601
        %v1669 = vpop.f32.mrb[0].mxu0
        %v1670 = vadd.f32 0.0, %v1669
        %v1671 = vpop.f32.mrb[0].mxu0
        %1672 = vdwg.mxu0
        %1674 = vrot.lane.b32.xlu0 %v1670, 96
        %v1675 = vpop.permute.xlu0 %1674
        %v1676 = vsel %vm398, %v1670, 0
        %v1678 = vsel %vm398, %v1675, 0
        %1680 = vmatprep.subr.mxu0 0.0
        %1681 = vmatpush1.xpose.msra.mxu0 %v1678
        %1682 = vmatprep.subr.mxu0 0.0
        %1683 = vmatpush1.xpose.msra.mxu0 0.0
        %1684 = vmatprep.subr.mxu0 0.0
        %1685 = vmatpush1.xpose.msra.mxu0 0.0
        %1686 = vmatprep.subr.mxu0 0.0
        %1687 = vmatpush1.xpose.msra.mxu0 0.0
        %1688 = vmatprep.subr.mxu0 0.0
        %1689 = vmatpush1.xpose.msra.mxu0 0.0
        %1690 = vmatprep.subr.mxu0 0.0
        %1691 = vmatpush1.xpose.msra.mxu0 0.0
        %1692 = vmatprep.subr.mxu0 0.0
        %1693 = vmatpush1.xpose.msra.mxu0 0.0
        %1694 = vmatprep.subr.mxu0 0.0
        %1695 = vmatpush1.xpose.msra.mxu0 0.0
        %1696 = vmatprep.subr.mxu0 0.0
        %1697 = vmatpush1.xpose.msra.mxu0 0.0
        %1698 = vmatprep.subr.mxu0 0.0
        %1699 = vmatpush1.xpose.msra.mxu0 0.0
        %1700 = vmatprep.subr.mxu0 0.0
        %1701 = vmatpush1.xpose.msra.mxu0 0.0
        %1702 = vmatprep.subr.mxu0 0.0
        %1703 = vmatpush1.xpose.msra.mxu0 0.0
        %1704 = vmatprep.subr.mxu0 0.0
        %1705 = vmatpush1.xpose.msra.mxu0 0.0
        %1706 = vmatprep.subr.mxu0 0.0
        %1707 = vmatpush1.xpose.msra.mxu0 0.0
        %1708 = vmatprep.subr.mxu0 0.0
        %1709 = vmatpush1.xpose.msra.mxu0 0.0
        %1710 = vmatprep.subr.mxu0 0.0
        %1711 = vmatpush1.xpose.msra.mxu0 0.0
        %1712 = vmatprep.subr.mxu0 0.0
        %1713 = vmatpush1.xpose.msra.mxu0 0.0
        %1714 = vmatprep.subr.mxu0 0.0
        %1715 = vmatpush1.xpose.msra.mxu0 0.0
        %1716 = vmatprep.subr.mxu0 0.0
        %1717 = vmatpush1.xpose.msra.mxu0 0.0
        %1718 = vmatprep.subr.mxu0 0.0
        %1719 = vmatpush1.xpose.msra.mxu0 0.0
        %1720 = vmatprep.subr.mxu0 0.0
        %1721 = vmatpush1.xpose.msra.mxu0 0.0
        %1722 = vmatprep.subr.mxu0 0.0
        %1723 = vmatpush1.xpose.msra.mxu0 0.0
        %1724 = vmatprep.subr.mxu0 0.0
        %1725 = vmatpush1.xpose.msra.mxu0 0.0
        %1726 = vmatprep.subr.mxu0 0.0
        %1727 = vmatpush1.xpose.msra.mxu0 0.0
        %1728 = vmatprep.subr.mxu0 0.0
        %1729 = vmatpush1.xpose.msra.mxu0 0.0
        %1730 = vmatprep.subr.mxu0 0.0
        %1731 = vmatpush1.xpose.msra.mxu0 0.0
        %1732 = vmatprep.subr.mxu0 0.0
        %1733 = vmatpush1.xpose.msra.mxu0 0.0
        %1734 = vmatprep.subr.mxu0 0.0
        %1735 = vmatpush1.xpose.msra.mxu0 0.0
        %1736 = vmatprep.subr.mxu0 0.0
        %1737 = vmatpush1.xpose.msra.mxu0 0.0
        %1738 = vmatprep.subr.mxu0 0.0
        %1739 = vmatpush1.xpose.msra.mxu0 0.0
        %1740 = vmatprep.subr.mxu0 0.0
        %1741 = vmatpush1.xpose.msra.mxu0 0.0
        %1742 = vmatprep.subr.mxu0 0.0
        %1743 = vmatpush1.xpose.msra.mxu0 0.0
        %1744 = vmatprep.mubr.f32.mxu0 0.0
        %1745 = vmatmul.mubr.f32.gmra.mrb[0].mxu0 %v1676
        %v1746 = vpop.f32.mrb[0].mxu0
        %v1747 = vadd.f32 0.0, %v1746
        %v1748 = vpop.f32.mrb[0].mxu0
        %1749 = vdwg.mxu0
        %v1750 = vmul.f32 %v1747, 0.35355338
        %v1751 = vsel %vm398, %v1750, -inf
        %1752 = vmax.xlane.f32.xlu0 %v1751
        %v1753 = vpop.xlane.xlu0 %1752
        %v1754 = vsub.f32 %v1750, %v1753
        %v1755 = vmul.f32 %v1754, 1.442695
        %v1756 = vpow.pop %v1755
        %v1757 = vsel %vm398, %v1756, 0.0
        %1758 = vadd.xlane.f32.xlu0 %v1757
        %v1759 = vpop.xlane.xlu0 %1758
        %v1760 = vrcp.pop %v1759
        %v1761 = vmul.f32 %v1756, %v1760
        %1762 = vrot.lane.b32.xlu0 %v1670, 64
        %v1763 = vpop.permute.xlu0 %1762
        %v1766 = vsel %vm398, %v1761, 0
        %1768 = vmatprep.subr.mxu0 0.0
        %1769 = vmatpush1.msra.mxu0 %v1763
        %1770 = vmatprep.subr.mxu0 0.0
        %1771 = vmatpush1.msra.mxu0 0.0
        %1772 = vmatprep.subr.mxu0 0.0
        %1773 = vmatpush1.msra.mxu0 0.0
        %1774 = vmatprep.subr.mxu0 0.0
        %1775 = vmatpush1.msra.mxu0 0.0
        %1776 = vmatprep.subr.mxu0 0.0
        %1777 = vmatpush1.msra.mxu0 0.0
        %1778 = vmatprep.subr.mxu0 0.0
        %1779 = vmatpush1.msra.mxu0 0.0
        %1780 = vmatprep.subr.mxu0 0.0
        %1781 = vmatpush1.msra.mxu0 0.0
        %1782 = vmatprep.subr.mxu0 0.0
        %1783 = vmatpush1.msra.mxu0 0.0
        %1784 = vmatprep.subr.mxu0 0.0
        %1785 = vmatpush1.msra.mxu0 0.0
        %1786 = vmatprep.subr.mxu0 0.0
        %1787 = vmatpush1.msra.mxu0 0.0
        %1788 = vmatprep.subr.mxu0 0.0
        %1789 = vmatpush1.msra.mxu0 0.0
        %1790 = vmatprep.subr.mxu0 0.0
        %1791 = vmatpush1.msra.mxu0 0.0
        %1792 = vmatprep.subr.mxu0 0.0
        %1793 = vmatpush1.msra.mxu0 0.0
        %1794 = vmatprep.subr.mxu0 0.0
        %1795 = vmatpush1.msra.mxu0 0.0
        %1796 = vmatprep.subr.mxu0 0.0
        %1797 = vmatpush1.msra.mxu0 0.0
        %1798 = vmatprep.subr.mxu0 0.0
        %1799 = vmatpush1.msra.mxu0 0.0
        %1800 = vmatprep.subr.mxu0 0.0
        %1801 = vmatpush1.msra.mxu0 0.0
        %1802 = vmatprep.subr.mxu0 0.0
        %1803 = vmatpush1.msra.mxu0 0.0
        %1804 = vmatprep.subr.mxu0 0.0
        %1805 = vmatpush1.msra.mxu0 0.0
        %1806 = vmatprep.subr.mxu0 0.0
        %1807 = vmatpush1.msra.mxu0 0.0
        %1808 = vmatprep.subr.mxu0 0.0
        %1809 = vmatpush1.msra.mxu0 0.0
        %1810 = vmatprep.subr.mxu0 0.0
        %1811 = vmatpush1.msra.mxu0 0.0
        %1812 = vmatprep.subr.mxu0 0.0
        %1813 = vmatpush1.msra.mxu0 0.0
        %1814 = vmatprep.subr.mxu0 0.0
        %1815 = vmatpush1.msra.mxu0 0.0
        %1816 = vmatprep.subr.mxu0 0.0
        %1817 = vmatpush1.msra.mxu0 0.0
        %1818 = vmatprep.subr.mxu0 0.0
        %1819 = vmatpush1.msra.mxu0 0.0
        %1820 = vmatprep.subr.mxu0 0.0
        %1821 = vmatpush1.msra.mxu0 0.0
        %1822 = vmatprep.subr.mxu0 0.0
        %1823 = vmatpush1.msra.mxu0 0.0
        %1824 = vmatprep.subr.mxu0 0.0
        %1825 = vmatpush1.msra.mxu0 0.0
        %1826 = vmatprep.subr.mxu0 0.0
        %1827 = vmatpush1.msra.mxu0 0.0
        %1828 = vmatprep.subr.mxu0 0.0
        %1829 = vmatpush1.msra.mxu0 0.0
        %1830 = vmatprep.subr.mxu0 0.0
        %1831 = vmatpush1.msra.mxu0 0.0
        %1832 = vmatprep.mubr.f32.mxu0 0.0
        %1833 = vmatmul.mubr.f32.gmra.mrb[0].mxu0 %v1766
        %v1834 = vpop.f32.mrb[0].mxu0
        %v1835 = vadd.f32 0.0, %v1834
        %v1836 = vpop.f32.mrb[0].mxu0
        %1837 = vdwg.mxu0
        %1838 = vrot.lane.b32.xlu0 %v1670, 120
        %v1839 = vpop.permute.xlu0 %1838
        %1840 = vrot.lane.b32.xlu0 %v1670, 88
        %v1841 = vpop.permute.xlu0 %1840
        %v1842 = vsel %vm398, %v1839, 0
        %v1844 = vsel %vm398, %v1841, 0
        %1846 = vmatprep.subr.mxu0 0.0
        %1847 = vmatpush1.xpose.msra.mxu0 %v1844
        %1848 = vmatprep.subr.mxu0 0.0
        %1849 = vmatpush1.xpose.msra.mxu0 0.0
        %1850 = vmatprep.subr.mxu0 0.0
        %1851 = vmatpush1.xpose.msra.mxu0 0.0
        %1852 = vmatprep.subr.mxu0 0.0
        %1853 = vmatpush1.xpose.msra.mxu0 0.0
        %1854 = vmatprep.subr.mxu0 0.0
        %1855 = vmatpush1.xpose.msra.mxu0 0.0
        %1856 = vmatprep.subr.mxu0 0.0
        %1857 = vmatpush1.xpose.msra.mxu0 0.0
        %1858 = vmatprep.subr.mxu0 0.0
        %1859 = vmatpush1.xpose.msra.mxu0 0.0
        %1860 = vmatprep.subr.mxu0 0.0
        %1861 = vmatpush1.xpose.msra.mxu0 0.0
        %1862 = vmatprep.subr.mxu0 0.0
        %1863 = vmatpush1.xpose.msra.mxu0 0.0
        %1864 = vmatprep.subr.mxu0 0.0
        %1865 = vmatpush1.xpose.msra.mxu0 0.0
        %1866 = vmatprep.subr.mxu0 0.0
        %1867 = vmatpush1.xpose.msra.mxu0 0.0
        %1868 = vmatprep.subr.mxu0 0.0
        %1869 = vmatpush1.xpose.msra.mxu0 0.0
        %1870 = vmatprep.subr.mxu0 0.0
        %1871 = vmatpush1.xpose.msra.mxu0 0.0
        %1872 = vmatprep.subr.mxu0 0.0
        %1873 = vmatpush1.xpose.msra.mxu0 0.0
        %1874 = vmatprep.subr.mxu0 0.0
        %1875 = vmatpush1.xpose.msra.mxu0 0.0
        %1876 = vmatprep.subr.mxu0 0.0
        %1877 = vmatpush1.xpose.msra.mxu0 0.0
        %1878 = vmatprep.subr.mxu0 0.0
        %1879 = vmatpush1.xpose.msra.mxu0 0.0
        %1880 = vmatprep.subr.mxu0 0.0
        %1881 = vmatpush1.xpose.msra.mxu0 0.0
        %1882 = vmatprep.subr.mxu0 0.0
        %1883 = vmatpush1.xpose.msra.mxu0 0.0
        %1884 = vmatprep.subr.mxu0 0.0
        %1885 = vmatpush1.xpose.msra.mxu0 0.0
        %1886 = vmatprep.subr.mxu0 0.0
        %1887 = vmatpush1.xpose.msra.mxu0 0.0
        %1888 = vmatprep.subr.mxu0 0.0
        %1889 = vmatpush1.xpose.msra.mxu0 0.0
        %1890 = vmatprep.subr.mxu0 0.0
        %1891 = vmatpush1.xpose.msra.mxu0 0.0
        %1892 = vmatprep.subr.mxu0 0.0
        %1893 = vmatpush1.xpose.msra.mxu0 0.0
        %1894 = vmatprep.subr.mxu0 0.0
        %1895 = vmatpush1.xpose.msra.mxu0 0.0
        %1896 = vmatprep.subr.mxu0 0.0
        %1897 = vmatpush1.xpose.msra.mxu0 0.0
        %1898 = vmatprep.subr.mxu0 0.0
        %1899 = vmatpush1.xpose.msra.mxu0 0.0
        %1900 = vmatprep.subr.mxu0 0.0
        %1901 = vmatpush1.xpose.msra.mxu0 0.0
        %1902 = vmatprep.subr.mxu0 0.0
        %1903 = vmatpush1.xpose.msra.mxu0 0.0
        %1904 = vmatprep.subr.mxu0 0.0
        %1905 = vmatpush1.xpose.msra.mxu0 0.0
        %1906 = vmatprep.subr.mxu0 0.0
        %1907 = vmatpush1.xpose.msra.mxu0 0.0
        %1908 = vmatprep.subr.mxu0 0.0
        %1909 = vmatpush1.xpose.msra.mxu0 0.0
        %1910 = vmatprep.mubr.f32.mxu0 0.0
        %1911 = vmatmul.mubr.f32.gmra.mrb[0].mxu0 %v1842
        %v1912 = vpop.f32.mrb[0].mxu0
        %v1913 = vadd.f32 0.0, %v1912
        %v1914 = vpop.f32.mrb[0].mxu0
        %1915 = vdwg.mxu0
        %v1916 = vmul.f32 %v1913, 0.35355338
        %v1917 = vsel %vm398, %v1916, -inf
        %1918 = vmax.xlane.f32.xlu0 %v1917
        %v1919 = vpop.xlane.xlu0 %1918
        %v1920 = vsub.f32 %v1916, %v1919
        %v1921 = vmul.f32 %v1920, 1.442695
        %v1922 = vpow.pop %v1921
        %v1923 = vsel %vm398, %v1922, 0.0
        %1924 = vadd.xlane.f32.xlu0 %v1923
        %v1925 = vpop.xlane.xlu0 %1924
        %v1926 = vrcp.pop %v1925
        %v1927 = vmul.f32 %v1922, %v1926
        %1928 = vrot.lane.b32.xlu0 %v1670, 56
        %v1929 = vpop.permute.xlu0 %1928
        %v1932 = vsel %vm398, %v1927, 0
        %1934 = vmatprep.subr.mxu0 0.0
        %1935 = vmatpush1.msra.mxu0 %v1929
        %1936 = vmatprep.subr.mxu0 0.0
        %1937 = vmatpush1.msra.mxu0 0.0
        %1938 = vmatprep.subr.mxu0 0.0
        %1939 = vmatpush1.msra.mxu0 0.0
        %1940 = vmatprep.subr.mxu0 0.0
        %1941 = vmatpush1.msra.mxu0 0.0
        %1942 = vmatprep.subr.mxu0 0.0
        %1943 = vmatpush1.msra.mxu0 0.0
        %1944 = vmatprep.subr.mxu0 0.0
        %1945 = vmatpush1.msra.mxu0 0.0
        %1946 = vmatprep.subr.mxu0 0.0
        %1947 = vmatpush1.msra.mxu0 0.0
        %1948 = vmatprep.subr.mxu0 0.0
        %1949 = vmatpush1.msra.mxu0 0.0
        %1950 = vmatprep.subr.mxu0 0.0
        %1951 = vmatpush1.msra.mxu0 0.0
        %1952 = vmatprep.subr.mxu0 0.0
        %1953 = vmatpush1.msra.mxu0 0.0
        %1954 = vmatprep.subr.mxu0 0.0
        %1955 = vmatpush1.msra.mxu0 0.0
        %1956 = vmatprep.subr.mxu0 0.0
        %1957 = vmatpush1.msra.mxu0 0.0
        %1958 = vmatprep.subr.mxu0 0.0
        %1959 = vmatpush1.msra.mxu0 0.0
        %1960 = vmatprep.subr.mxu0 0.0
        %1961 = vmatpush1.msra.mxu0 0.0
        %1962 = vmatprep.subr.mxu0 0.0
        %1963 = vmatpush1.msra.mxu0 0.0
        %1964 = vmatprep.subr.mxu0 0.0
        %1965 = vmatpush1.msra.mxu0 0.0
        %1966 = vmatprep.subr.mxu0 0.0
        %1967 = vmatpush1.msra.mxu0 0.0
        %1968 = vmatprep.subr.mxu0 0.0
        %1969 = vmatpush1.msra.mxu0 0.0
        %1970 = vmatprep.subr.mxu0 0.0
        %1971 = vmatpush1.msra.mxu0 0.0
        %1972 = vmatprep.subr.mxu0 0.0
        %1973 = vmatpush1.msra.mxu0 0.0
        %1974 = vmatprep.subr.mxu0 0.0
        %1975 = vmatpush1.msra.mxu0 0.0
        %1976 = vmatprep.subr.mxu0 0.0
        %1977 = vmatpush1.msra.mxu0 0.0
        %1978 = vmatprep.subr.mxu0 0.0
        %1979 = vmatpush1.msra.mxu0 0.0
        %1980 = vmatprep.subr.mxu0 0.0
        %1981 = vmatpush1.msra.mxu0 0.0
        %1982 = vmatprep.subr.mxu0 0.0
        %1983 = vmatpush1.msra.mxu0 0.0
        %1984 = vmatprep.subr.mxu0 0.0
        %1985 = vmatpush1.msra.mxu0 0.0
        %1986 = vmatprep.subr.mxu0 0.0
        %1987 = vmatpush1.msra.mxu0 0.0
        %1988 = vmatprep.subr.mxu0 0.0
        %1989 = vmatpush1.msra.mxu0 0.0
        %1990 = vmatprep.subr.mxu0 0.0
        %1991 = vmatpush1.msra.mxu0 0.0
        %1992 = vmatprep.subr.mxu0 0.0
        %1993 = vmatpush1.msra.mxu0 0.0
        %1994 = vmatprep.subr.mxu0 0.0
        %1995 = vmatpush1.msra.mxu0 0.0
        %1996 = vmatprep.subr.mxu0 0.0
        %1997 = vmatpush1.msra.mxu0 0.0
        %1998 = vmatprep.mubr.f32.mxu0 0.0
        %1999 = vmatmul.mubr.f32.gmra.mrb[0].mxu0 %v1932
        %v2000 = vpop.f32.mrb[0].mxu0
        %v2001 = vadd.f32 0.0, %v2000
        %v2002 = vpop.f32.mrb[0].mxu0
        %2003 = vdwg.mxu0
        %v2005 = vsel %vm398, %v2001, 0
        %2007 = vmatprep.subr.mxu0 0.0
        %2008 = vmatpush1.msra.mxu0 %v1556
        %2009 = vmatprep.subr.mxu0 0.0
        %2010 = vmatpush1.msra.mxu0 0.0
        %2011 = vmatprep.subr.mxu0 0.0
        %2012 = vmatpush1.msra.mxu0 0.0
        %2013 = vmatprep.subr.mxu0 0.0
        %2014 = vmatpush1.msra.mxu0 0.0
        %2015 = vmatprep.subr.mxu0 0.0
        %2016 = vmatpush1.msra.mxu0 0.0
        %2017 = vmatprep.subr.mxu0 0.0
        %2018 = vmatpush1.msra.mxu0 0.0
        %2019 = vmatprep.subr.mxu0 0.0
        %2020 = vmatpush1.msra.mxu0 0.0
        %2021 = vmatprep.subr.mxu0 0.0
        %2022 = vmatpush1.msra.mxu0 0.0
        %2023 = vmatprep.subr.mxu0 0.0
        %2024 = vmatpush1.msra.mxu0 0.0
        %2025 = vmatprep.subr.mxu0 0.0
        %2026 = vmatpush1.msra.mxu0 0.0
        %2027 = vmatprep.subr.mxu0 0.0
        %2028 = vmatpush1.msra.mxu0 0.0
        %2029 = vmatprep.subr.mxu0 0.0
        %2030 = vmatpush1.msra.mxu0 0.0
        %2031 = vmatprep.subr.mxu0 0.0
        %2032 = vmatpush1.msra.mxu0 0.0
        %2033 = vmatprep.subr.mxu0 0.0
        %2034 = vmatpush1.msra.mxu0 0.0
        %2035 = vmatprep.subr.mxu0 0.0
        %2036 = vmatpush1.msra.mxu0 0.0
        %2037 = vmatprep.subr.mxu0 0.0
        %2038 = vmatpush1.msra.mxu0 0.0
        %2039 = vmatprep.subr.mxu0 0.0
        %2040 = vmatpush1.msra.mxu0 0.0
        %2041 = vmatprep.subr.mxu0 0.0
        %2042 = vmatpush1.msra.mxu0 0.0
        %2043 = vmatprep.subr.mxu0 0.0
        %2044 = vmatpush1.msra.mxu0 0.0
        %2045 = vmatprep.subr.mxu0 0.0
        %2046 = vmatpush1.msra.mxu0 0.0
        %2047 = vmatprep.subr.mxu0 0.0
        %2048 = vmatpush1.msra.mxu0 0.0
        %2049 = vmatprep.subr.mxu0 0.0
        %2050 = vmatpush1.msra.mxu0 0.0
        %2051 = vmatprep.subr.mxu0 0.0
        %2052 = vmatpush1.msra.mxu0 0.0
        %2053 = vmatprep.subr.mxu0 0.0
        %2054 = vmatpush1.msra.mxu0 0.0
        %2055 = vmatprep.subr.mxu0 0.0
        %2056 = vmatpush1.msra.mxu0 0.0
        %2057 = vmatprep.subr.mxu0 0.0
        %2058 = vmatpush1.msra.mxu0 0.0
        %2059 = vmatprep.subr.mxu0 0.0
        %2060 = vmatpush1.msra.mxu0 0.0
        %2061 = vmatprep.subr.mxu0 0.0
        %2062 = vmatpush1.msra.mxu0 0.0
        %2063 = vmatprep.subr.mxu0 0.0
        %2064 = vmatpush1.msra.mxu0 0.0
        %2065 = vmatprep.subr.mxu0 0.0
        %2066 = vmatpush1.msra.mxu0 0.0
        %2067 = vmatprep.subr.mxu0 0.0
        %2068 = vmatpush1.msra.mxu0 0.0
        %2069 = vmatprep.subr.mxu0 0.0
        %2070 = vmatpush1.msra.mxu0 0.0
        %2071 = vmatprep.mubr.f32.mxu0 0.0
        %2072 = vmatmul.mubr.f32.gmra.mrb[0].mxu0 %v2005
        %v2073 = vpop.f32.mrb[0].mxu0
        %v2074 = vadd.f32 0.0, %v2073
        %v2075 = vpop.f32.mrb[0].mxu0
        %2076 = vdwg.mxu0
        %v2078 = vsel %vm398, %v1835, 0
        %2080 = vmatprep.subr.mxu0 0.0
        %2081 = vmatpush1.msra.mxu0 %v1555
        %2082 = vmatprep.subr.mxu0 0.0
        %2083 = vmatpush1.msra.mxu0 0.0
        %2084 = vmatprep.subr.mxu0 0.0
        %2085 = vmatpush1.msra.mxu0 0.0
        %2086 = vmatprep.subr.mxu0 0.0
        %2087 = vmatpush1.msra.mxu0 0.0
        %2088 = vmatprep.subr.mxu0 0.0
        %2089 = vmatpush1.msra.mxu0 0.0
        %2090 = vmatprep.subr.mxu0 0.0
        %2091 = vmatpush1.msra.mxu0 0.0
        %2092 = vmatprep.subr.mxu0 0.0
        %2093 = vmatpush1.msra.mxu0 0.0
        %2094 = vmatprep.subr.mxu0 0.0
        %2095 = vmatpush1.msra.mxu0 0.0
        %2096 = vmatprep.subr.mxu0 0.0
        %2097 = vmatpush1.msra.mxu0 0.0
        %2098 = vmatprep.subr.mxu0 0.0
        %2099 = vmatpush1.msra.mxu0 0.0
        %2100 = vmatprep.subr.mxu0 0.0
        %2101 = vmatpush1.msra.mxu0 0.0
        %2102 = vmatprep.subr.mxu0 0.0
        %2103 = vmatpush1.msra.mxu0 0.0
        %2104 = vmatprep.subr.mxu0 0.0
        %2105 = vmatpush1.msra.mxu0 0.0
        %2106 = vmatprep.subr.mxu0 0.0
        %2107 = vmatpush1.msra.mxu0 0.0
        %2108 = vmatprep.subr.mxu0 0.0
        %2109 = vmatpush1.msra.mxu0 0.0
        %2110 = vmatprep.subr.mxu0 0.0
        %2111 = vmatpush1.msra.mxu0 0.0
        %2112 = vmatprep.subr.mxu0 0.0
        %2113 = vmatpush1.msra.mxu0 0.0
        %2114 = vmatprep.subr.mxu0 0.0
        %2115 = vmatpush1.msra.mxu0 0.0
        %2116 = vmatprep.subr.mxu0 0.0
        %2117 = vmatpush1.msra.mxu0 0.0
        %2118 = vmatprep.subr.mxu0 0.0
        %2119 = vmatpush1.msra.mxu0 0.0
        %2120 = vmatprep.subr.mxu0 0.0
        %2121 = vmatpush1.msra.mxu0 0.0
        %2122 = vmatprep.subr.mxu0 0.0
        %2123 = vmatpush1.msra.mxu0 0.0
        %2124 = vmatprep.subr.mxu0 0.0
        %2125 = vmatpush1.msra.mxu0 0.0
        %2126 = vmatprep.subr.mxu0 0.0
        %2127 = vmatpush1.msra.mxu0 0.0
        %2128 = vmatprep.subr.mxu0 0.0
        %2129 = vmatpush1.msra.mxu0 0.0
        %2130 = vmatprep.subr.mxu0 0.0
        %2131 = vmatpush1.msra.mxu0 0.0
        %2132 = vmatprep.subr.mxu0 0.0
        %2133 = vmatpush1.msra.mxu0 0.0
        %2134 = vmatprep.subr.mxu0 0.0
        %2135 = vmatpush1.msra.mxu0 0.0
        %2136 = vmatprep.subr.mxu0 0.0
        %2137 = vmatpush1.msra.mxu0 0.0
        %2138 = vmatprep.subr.mxu0 0.0
        %2139 = vmatpush1.msra.mxu0 0.0
        %2140 = vmatprep.subr.mxu0 0.0
        %2141 = vmatpush1.msra.mxu0 0.0
        %2142 = vmatprep.subr.mxu0 0.0
        %2143 = vmatpush1.msra.mxu0 0.0
        %2144 = vmatprep.mubr.f32.mxu0 0.0
        %2145 = vmatmul.mubr.f32.gmra.mrb[0].mxu0 %v2078
        %v2146 = vpop.f32.mrb[0].mxu0
        %v2147 = vadd.f32 %v2074, %v2146
        %v2148 = vpop.f32.mrb[0].mxu0
        %2149 = vdwg.mxu0
        %2150 = vrot.lane.b32.xlu0 %v1670, 112
        %v2151 = vpop.permute.xlu0 %2150
        %2152 = vrot.lane.b32.xlu0 %v1670, 80
        %v2153 = vpop.permute.xlu0 %2152
        %v2154 = vsel %vm398, %v2151, 0
        %v2156 = vsel %vm398, %v2153, 0
        %2158 = vmatprep.subr.mxu0 0.0
        %2159 = vmatpush1.xpose.msra.mxu0 %v2156
        %2160 = vmatprep.subr.mxu0 0.0
        %2161 = vmatpush1.xpose.msra.mxu0 0.0
        %2162 = vmatprep.subr.mxu0 0.0
        %2163 = vmatpush1.xpose.msra.mxu0 0.0
        %2164 = vmatprep.subr.mxu0 0.0
        %2165 = vmatpush1.xpose.msra.mxu0 0.0
        %2166 = vmatprep.subr.mxu0 0.0
        %2167 = vmatpush1.xpose.msra.mxu0 0.0
        %2168 = vmatprep.subr.mxu0 0.0
        %2169 = vmatpush1.xpose.msra.mxu0 0.0
        %2170 = vmatprep.subr.mxu0 0.0
        %2171 = vmatpush1.xpose.msra.mxu0 0.0
        %2172 = vmatprep.subr.mxu0 0.0
        %2173 = vmatpush1.xpose.msra.mxu0 0.0
        %2174 = vmatprep.subr.mxu0 0.0
        %2175 = vmatpush1.xpose.msra.mxu0 0.0
        %2176 = vmatprep.subr.mxu0 0.0
        %2177 = vmatpush1.xpose.msra.mxu0 0.0
        %2178 = vmatprep.subr.mxu0 0.0
        %2179 = vmatpush1.xpose.msra.mxu0 0.0
        %2180 = vmatprep.subr.mxu0 0.0
        %2181 = vmatpush1.xpose.msra.mxu0 0.0
        %2182 = vmatprep.subr.mxu0 0.0
        %2183 = vmatpush1.xpose.msra.mxu0 0.0
        %2184 = vmatprep.subr.mxu0 0.0
        %2185 = vmatpush1.xpose.msra.mxu0 0.0
        %2186 = vmatprep.subr.mxu0 0.0
        %2187 = vmatpush1.xpose.msra.mxu0 0.0
        %2188 = vmatprep.subr.mxu0 0.0
        %2189 = vmatpush1.xpose.msra.mxu0 0.0
        %2190 = vmatprep.subr.mxu0 0.0
        %2191 = vmatpush1.xpose.msra.mxu0 0.0
        %2192 = vmatprep.subr.mxu0 0.0
        %2193 = vmatpush1.xpose.msra.mxu0 0.0
        %2194 = vmatprep.subr.mxu0 0.0
        %2195 = vmatpush1.xpose.msra.mxu0 0.0
        %2196 = vmatprep.subr.mxu0 0.0
        %2197 = vmatpush1.xpose.msra.mxu0 0.0
        %2198 = vmatprep.subr.mxu0 0.0
        %2199 = vmatpush1.xpose.msra.mxu0 0.0
        %2200 = vmatprep.subr.mxu0 0.0
        %2201 = vmatpush1.xpose.msra.mxu0 0.0
        %2202 = vmatprep.subr.mxu0 0.0
        %2203 = vmatpush1.xpose.msra.mxu0 0.0
        %2204 = vmatprep.subr.mxu0 0.0
        %2205 = vmatpush1.xpose.msra.mxu0 0.0
        %2206 = vmatprep.subr.mxu0 0.0
        %2207 = vmatpush1.xpose.msra.mxu0 0.0
        %2208 = vmatprep.subr.mxu0 0.0
        %2209 = vmatpush1.xpose.msra.mxu0 0.0
        %2210 = vmatprep.subr.mxu0 0.0
        %2211 = vmatpush1.xpose.msra.mxu0 0.0
        %2212 = vmatprep.subr.mxu0 0.0
        %2213 = vmatpush1.xpose.msra.mxu0 0.0
        %2214 = vmatprep.subr.mxu0 0.0
        %2215 = vmatpush1.xpose.msra.mxu0 0.0
        %2216 = vmatprep.subr.mxu0 0.0
        %2217 = vmatpush1.xpose.msra.mxu0 0.0
        %2218 = vmatprep.subr.mxu0 0.0
        %2219 = vmatpush1.xpose.msra.mxu0 0.0
        %2220 = vmatprep.subr.mxu0 0.0
        %2221 = vmatpush1.xpose.msra.mxu0 0.0
        %2222 = vmatprep.mubr.f32.mxu0 0.0
        %2223 = vmatmul.mubr.f32.gmra.mrb[0].mxu0 %v2154
        %v2224 = vpop.f32.mrb[0].mxu0
        %v2225 = vadd.f32 0.0, %v2224
        %v2226 = vpop.f32.mrb[0].mxu0
        %2227 = vdwg.mxu0
        %v2228 = vmul.f32 %v2225, 0.35355338
        %v2229 = vsel %vm398, %v2228, -inf
        %2230 = vmax.xlane.f32.xlu0 %v2229
        %v2231 = vpop.xlane.xlu0 %2230
        %v2232 = vsub.f32 %v2228, %v2231
        %v2233 = vmul.f32 %v2232, 1.442695
        %v2234 = vpow.pop %v2233
        %v2235 = vsel %vm398, %v2234, 0.0
        %2236 = vadd.xlane.f32.xlu0 %v2235
        %v2237 = vpop.xlane.xlu0 %2236
        %v2238 = vrcp.pop %v2237
        %v2239 = vmul.f32 %v2234, %v2238
        %2240 = vrot.lane.b32.xlu0 %v1670, 48
        %v2241 = vpop.permute.xlu0 %2240
        %v2244 = vsel %vm398, %v2239, 0
        %2246 = vmatprep.subr.mxu0 0.0
        %2247 = vmatpush1.msra.mxu0 %v2241
        %2248 = vmatprep.subr.mxu0 0.0
        %2249 = vmatpush1.msra.mxu0 0.0
        %2250 = vmatprep.subr.mxu0 0.0
        %2251 = vmatpush1.msra.mxu0 0.0
        %2252 = vmatprep.subr.mxu0 0.0
        %2253 = vmatpush1.msra.mxu0 0.0
        %2254 = vmatprep.subr.mxu0 0.0
        %2255 = vmatpush1.msra.mxu0 0.0
        %2256 = vmatprep.subr.mxu0 0.0
        %2257 = vmatpush1.msra.mxu0 0.0
        %2258 = vmatprep.subr.mxu0 0.0
        %2259 = vmatpush1.msra.mxu0 0.0
        %2260 = vmatprep.subr.mxu0 0.0
        %2261 = vmatpush1.msra.mxu0 0.0
        %2262 = vmatprep.subr.mxu0 0.0
        %2263 = vmatpush1.msra.mxu0 0.0
        %2264 = vmatprep.subr.mxu0 0.0
        %2265 = vmatpush1.msra.mxu0 0.0
        %2266 = vmatprep.subr.mxu0 0.0
        %2267 = vmatpush1.msra.mxu0 0.0
        %2268 = vmatprep.subr.mxu0 0.0
        %2269 = vmatpush1.msra.mxu0 0.0
        %2270 = vmatprep.subr.mxu0 0.0
        %2271 = vmatpush1.msra.mxu0 0.0
        %2272 = vmatprep.subr.mxu0 0.0
        %2273 = vmatpush1.msra.mxu0 0.0
        %2274 = vmatprep.subr.mxu0 0.0
        %2275 = vmatpush1.msra.mxu0 0.0
        %2276 = vmatprep.subr.mxu0 0.0
        %2277 = vmatpush1.msra.mxu0 0.0
        %2278 = vmatprep.subr.mxu0 0.0
        %2279 = vmatpush1.msra.mxu0 0.0
        %2280 = vmatprep.subr.mxu0 0.0
        %2281 = vmatpush1.msra.mxu0 0.0
        %2282 = vmatprep.subr.mxu0 0.0
        %2283 = vmatpush1.msra.mxu0 0.0
        %2284 = vmatprep.subr.mxu0 0.0
        %2285 = vmatpush1.msra.mxu0 0.0
        %2286 = vmatprep.subr.mxu0 0.0
        %2287 = vmatpush1.msra.mxu0 0.0
        %2288 = vmatprep.subr.mxu0 0.0
        %2289 = vmatpush1.msra.mxu0 0.0
        %2290 = vmatprep.subr.mxu0 0.0
        %2291 = vmatpush1.msra.mxu0 0.0
        %2292 = vmatprep.subr.mxu0 0.0
        %2293 = vmatpush1.msra.mxu0 0.0
        %2294 = vmatprep.subr.mxu0 0.0
        %2295 = vmatpush1.msra.mxu0 0.0
        %2296 = vmatprep.subr.mxu0 0.0
        %2297 = vmatpush1.msra.mxu0 0.0
        %2298 = vmatprep.subr.mxu0 0.0
        %2299 = vmatpush1.msra.mxu0 0.0
        %2300 = vmatprep.subr.mxu0 0.0
        %2301 = vmatpush1.msra.mxu0 0.0
        %2302 = vmatprep.subr.mxu0 0.0
        %2303 = vmatpush1.msra.mxu0 0.0
        %2304 = vmatprep.subr.mxu0 0.0
        %2305 = vmatpush1.msra.mxu0 0.0
        %2306 = vmatprep.subr.mxu0 0.0
        %2307 = vmatpush1.msra.mxu0 0.0
        %2308 = vmatprep.subr.mxu0 0.0
        %2309 = vmatpush1.msra.mxu0 0.0
        %2310 = vmatprep.mubr.f32.mxu0 0.0
        %2311 = vmatmul.mubr.f32.gmra.mrb[0].mxu0 %v2244
        %v2312 = vpop.f32.mrb[0].mxu0
        %v2313 = vadd.f32 0.0, %v2312
        %v2314 = vpop.f32.mrb[0].mxu0
        %2315 = vdwg.mxu0
        %v2317 = vsel %vm398, %v2313, 0
        %2319 = vmatprep.subr.mxu0 0.0
        %2320 = vmatpush1.msra.mxu0 %v1557
        %2321 = vmatprep.subr.mxu0 0.0
        %2322 = vmatpush1.msra.mxu0 0.0
        %2323 = vmatprep.subr.mxu0 0.0
        %2324 = vmatpush1.msra.mxu0 0.0
        %2325 = vmatprep.subr.mxu0 0.0
        %2326 = vmatpush1.msra.mxu0 0.0
        %2327 = vmatprep.subr.mxu0 0.0
        %2328 = vmatpush1.msra.mxu0 0.0
        %2329 = vmatprep.subr.mxu0 0.0
        %2330 = vmatpush1.msra.mxu0 0.0
        %2331 = vmatprep.subr.mxu0 0.0
        %2332 = vmatpush1.msra.mxu0 0.0
        %2333 = vmatprep.subr.mxu0 0.0
        %2334 = vmatpush1.msra.mxu0 0.0
        %2335 = vmatprep.subr.mxu0 0.0
        %2336 = vmatpush1.msra.mxu0 0.0
        %2337 = vmatprep.subr.mxu0 0.0
        %2338 = vmatpush1.msra.mxu0 0.0
        %2339 = vmatprep.subr.mxu0 0.0
        %2340 = vmatpush1.msra.mxu0 0.0
        %2341 = vmatprep.subr.mxu0 0.0
        %2342 = vmatpush1.msra.mxu0 0.0
        %2343 = vmatprep.subr.mxu0 0.0
        %2344 = vmatpush1.msra.mxu0 0.0
        %2345 = vmatprep.subr.mxu0 0.0
        %2346 = vmatpush1.msra.mxu0 0.0
        %2347 = vmatprep.subr.mxu0 0.0
        %2348 = vmatpush1.msra.mxu0 0.0
        %2349 = vmatprep.subr.mxu0 0.0
        %2350 = vmatpush1.msra.mxu0 0.0
        %2351 = vmatprep.subr.mxu0 0.0
        %2352 = vmatpush1.msra.mxu0 0.0
        %2353 = vmatprep.subr.mxu0 0.0
        %2354 = vmatpush1.msra.mxu0 0.0
        %2355 = vmatprep.subr.mxu0 0.0
        %2356 = vmatpush1.msra.mxu0 0.0
        %2357 = vmatprep.subr.mxu0 0.0
        %2358 = vmatpush1.msra.mxu0 0.0
        %2359 = vmatprep.subr.mxu0 0.0
        %2360 = vmatpush1.msra.mxu0 0.0
        %2361 = vmatprep.subr.mxu0 0.0
        %2362 = vmatpush1.msra.mxu0 0.0
        %2363 = vmatprep.subr.mxu0 0.0
        %2364 = vmatpush1.msra.mxu0 0.0
        %2365 = vmatprep.subr.mxu0 0.0
        %2366 = vmatpush1.msra.mxu0 0.0
        %2367 = vmatprep.subr.mxu0 0.0
        %2368 = vmatpush1.msra.mxu0 0.0
        %2369 = vmatprep.subr.mxu0 0.0
        %2370 = vmatpush1.msra.mxu0 0.0
        %2371 = vmatprep.subr.mxu0 0.0
        %2372 = vmatpush1.msra.mxu0 0.0
        %2373 = vmatprep.subr.mxu0 0.0
        %2374 = vmatpush1.msra.mxu0 0.0
        %2375 = vmatprep.subr.mxu0 0.0
        %2376 = vmatpush1.msra.mxu0 0.0
        %2377 = vmatprep.subr.mxu0 0.0
        %2378 = vmatpush1.msra.mxu0 0.0
        %2379 = vmatprep.subr.mxu0 0.0
        %2380 = vmatpush1.msra.mxu0 0.0
        %2381 = vmatprep.subr.mxu0 0.0
        %2382 = vmatpush1.msra.mxu0 0.0
        %2383 = vmatprep.mubr.f32.mxu0 0.0
        %2384 = vmatmul.mubr.f32.gmra.mrb[0].mxu0 %v2317
        %v2385 = vpop.f32.mrb[0].mxu0
        %v2386 = vadd.f32 0.0, %v2385
        %v2387 = vpop.f32.mrb[0].mxu0
        %2388 = vdwg.mxu0
        %v2389 = vadd.f32 %v2147, %v2386
        %2390 = vrot.lane.b32.xlu0 %v1670, 104
        %v2391 = vpop.permute.xlu0 %2390
        %2392 = vrot.lane.b32.xlu0 %v1670, 72
        %v2393 = vpop.permute.xlu0 %2392
        %v2394 = vsel %vm398, %v2391, 0
        %v2396 = vsel %vm398, %v2393, 0
        %2398 = vmatprep.subr.mxu0 0.0
        %2399 = vmatpush1.xpose.msra.mxu0 %v2396
        %2400 = vmatprep.subr.mxu0 0.0
        %2401 = vmatpush1.xpose.msra.mxu0 0.0
        %2402 = vmatprep.subr.mxu0 0.0
        %2403 = vmatpush1.xpose.msra.mxu0 0.0
        %2404 = vmatprep.subr.mxu0 0.0
        %2405 = vmatpush1.xpose.msra.mxu0 0.0
        %2406 = vmatprep.subr.mxu0 0.0
        %2407 = vmatpush1.xpose.msra.mxu0 0.0
        %2408 = vmatprep.subr.mxu0 0.0
        %2409 = vmatpush1.xpose.msra.mxu0 0.0
        %2410 = vmatprep.subr.mxu0 0.0
        %2411 = vmatpush1.xpose.msra.mxu0 0.0
        %2412 = vmatprep.subr.mxu0 0.0
        %2413 = vmatpush1.xpose.msra.mxu0 0.0
        %2414 = vmatprep.subr.mxu0 0.0
        %2415 = vmatpush1.xpose.msra.mxu0 0.0
        %2416 = vmatprep.subr.mxu0 0.0
        %2417 = vmatpush1.xpose.msra.mxu0 0.0
        %2418 = vmatprep.subr.mxu0 0.0
        %2419 = vmatpush1.xpose.msra.mxu0 0.0
        %2420 = vmatprep.subr.mxu0 0.0
        %2421 = vmatpush1.xpose.msra.mxu0 0.0
        %2422 = vmatprep.subr.mxu0 0.0
        %2423 = vmatpush1.xpose.msra.mxu0 0.0
        %2424 = vmatprep.subr.mxu0 0.0
        %2425 = vmatpush1.xpose.msra.mxu0 0.0
        %2426 = vmatprep.subr.mxu0 0.0
        %2427 = vmatpush1.xpose.msra.mxu0 0.0
        %2428 = vmatprep.subr.mxu0 0.0
        %2429 = vmatpush1.xpose.msra.mxu0 0.0
        %2430 = vmatprep.subr.mxu0 0.0
        %2431 = vmatpush1.xpose.msra.mxu0 0.0
        %2432 = vmatprep.subr.mxu0 0.0
        %2433 = vmatpush1.xpose.msra.mxu0 0.0
        %2434 = vmatprep.subr.mxu0 0.0
        %2435 = vmatpush1.xpose.msra.mxu0 0.0
        %2436 = vmatprep.subr.mxu0 0.0
        %2437 = vmatpush1.xpose.msra.mxu0 0.0
        %2438 = vmatprep.subr.mxu0 0.0
        %2439 = vmatpush1.xpose.msra.mxu0 0.0
        %2440 = vmatprep.subr.mxu0 0.0
        %2441 = vmatpush1.xpose.msra.mxu0 0.0
        %2442 = vmatprep.subr.mxu0 0.0
        %2443 = vmatpush1.xpose.msra.mxu0 0.0
        %2444 = vmatprep.subr.mxu0 0.0
        %2445 = vmatpush1.xpose.msra.mxu0 0.0
        %2446 = vmatprep.subr.mxu0 0.0
        %2447 = vmatpush1.xpose.msra.mxu0 0.0
        %2448 = vmatprep.subr.mxu0 0.0
        %2449 = vmatpush1.xpose.msra.mxu0 0.0
        %2450 = vmatprep.subr.mxu0 0.0
        %2451 = vmatpush1.xpose.msra.mxu0 0.0
        %2452 = vmatprep.subr.mxu0 0.0
        %2453 = vmatpush1.xpose.msra.mxu0 0.0
        %2454 = vmatprep.subr.mxu0 0.0
        %2455 = vmatpush1.xpose.msra.mxu0 0.0
        %2456 = vmatprep.subr.mxu0 0.0
        %2457 = vmatpush1.xpose.msra.mxu0 0.0
        %2458 = vmatprep.subr.mxu0 0.0
        %2459 = vmatpush1.xpose.msra.mxu0 0.0
        %2460 = vmatprep.subr.mxu0 0.0
        %2461 = vmatpush1.xpose.msra.mxu0 0.0
        %2462 = vmatprep.mubr.f32.mxu0 0.0
        %2463 = vmatmul.mubr.f32.gmra.mrb[0].mxu0 %v2394
        %v2464 = vpop.f32.mrb[0].mxu0
        %v2465 = vadd.f32 0.0, %v2464
        %v2466 = vpop.f32.mrb[0].mxu0
        %2467 = vdwg.mxu0
        %v2468 = vmul.f32 %v2465, 0.35355338
        %v2469 = vsel %vm398, %v2468, -inf
        %2470 = vmax.xlane.f32.xlu0 %v2469
        %v2471 = vpop.xlane.xlu0 %2470
        %v2472 = vsub.f32 %v2468, %v2471
        %v2473 = vmul.f32 %v2472, 1.442695
        %v2474 = vpow.pop %v2473
        %v2475 = vsel %vm398, %v2474, 0.0
        %2476 = vadd.xlane.f32.xlu0 %v2475
        %v2477 = vpop.xlane.xlu0 %2476
        %v2478 = vrcp.pop %v2477
        %v2479 = vmul.f32 %v2474, %v2478
        %2480 = vrot.lane.b32.xlu0 %v1670, 40
        %v2481 = vpop.permute.xlu0 %2480
        %v2484 = vsel %vm398, %v2479, 0
        %2486 = vmatprep.subr.mxu0 0.0
        %2487 = vmatpush1.msra.mxu0 %v2481
        %2488 = vmatprep.subr.mxu0 0.0
        %2489 = vmatpush1.msra.mxu0 0.0
        %2490 = vmatprep.subr.mxu0 0.0
        %2491 = vmatpush1.msra.mxu0 0.0
        %2492 = vmatprep.subr.mxu0 0.0
        %2493 = vmatpush1.msra.mxu0 0.0
        %2494 = vmatprep.subr.mxu0 0.0
        %2495 = vmatpush1.msra.mxu0 0.0
        %2496 = vmatprep.subr.mxu0 0.0
        %2497 = vmatpush1.msra.mxu0 0.0
        %2498 = vmatprep.subr.mxu0 0.0
        %2499 = vmatpush1.msra.mxu0 0.0
        %2500 = vmatprep.subr.mxu0 0.0
        %2501 = vmatpush1.msra.mxu0 0.0
        %2502 = vmatprep.subr.mxu0 0.0
        %2503 = vmatpush1.msra.mxu0 0.0
        %2504 = vmatprep.subr.mxu0 0.0
        %2505 = vmatpush1.msra.mxu0 0.0
        %2506 = vmatprep.subr.mxu0 0.0
        %2507 = vmatpush1.msra.mxu0 0.0
        %2508 = vmatprep.subr.mxu0 0.0
        %2509 = vmatpush1.msra.mxu0 0.0
        %2510 = vmatprep.subr.mxu0 0.0
        %2511 = vmatpush1.msra.mxu0 0.0
        %2512 = vmatprep.subr.mxu0 0.0
        %2513 = vmatpush1.msra.mxu0 0.0
        %2514 = vmatprep.subr.mxu0 0.0
        %2515 = vmatpush1.msra.mxu0 0.0
        %2516 = vmatprep.subr.mxu0 0.0
        %2517 = vmatpush1.msra.mxu0 0.0
        %2518 = vmatprep.subr.mxu0 0.0
        %2519 = vmatpush1.msra.mxu0 0.0
        %2520 = vmatprep.subr.mxu0 0.0
        %2521 = vmatpush1.msra.mxu0 0.0
        %2522 = vmatprep.subr.mxu0 0.0
        %2523 = vmatpush1.msra.mxu0 0.0
        %2524 = vmatprep.subr.mxu0 0.0
        %2525 = vmatpush1.msra.mxu0 0.0
        %2526 = vmatprep.subr.mxu0 0.0
        %2527 = vmatpush1.msra.mxu0 0.0
        %2528 = vmatprep.subr.mxu0 0.0
        %2529 = vmatpush1.msra.mxu0 0.0
        %2530 = vmatprep.subr.mxu0 0.0
        %2531 = vmatpush1.msra.mxu0 0.0
        %2532 = vmatprep.subr.mxu0 0.0
        %2533 = vmatpush1.msra.mxu0 0.0
        %2534 = vmatprep.subr.mxu0 0.0
        %2535 = vmatpush1.msra.mxu0 0.0
        %2536 = vmatprep.subr.mxu0 0.0
        %2537 = vmatpush1.msra.mxu0 0.0
        %2538 = vmatprep.subr.mxu0 0.0
        %2539 = vmatpush1.msra.mxu0 0.0
        %2540 = vmatprep.subr.mxu0 0.0
        %2541 = vmatpush1.msra.mxu0 0.0
        %2542 = vmatprep.subr.mxu0 0.0
        %2543 = vmatpush1.msra.mxu0 0.0
        %2544 = vmatprep.subr.mxu0 0.0
        %2545 = vmatpush1.msra.mxu0 0.0
        %2546 = vmatprep.subr.mxu0 0.0
        %2547 = vmatpush1.msra.mxu0 0.0
        %2548 = vmatprep.subr.mxu0 0.0
        %2549 = vmatpush1.msra.mxu0 0.0
        %2550 = vmatprep.mubr.f32.mxu0 0.0
        %2551 = vmatmul.mubr.f32.gmra.mrb[0].mxu0 %v2484
        %v2552 = vpop.f32.mrb[0].mxu0
        %v2553 = vadd.f32 0.0, %v2552
        %v2554 = vpop.f32.mrb[0].mxu0
        %2555 = vdwg.mxu0
        %v2557 = vsel %vm398, %v2553, 0
        %2559 = vmatprep.subr.mxu0 0.0
        %2560 = vmatpush1.msra.mxu0 %v1558
        %2561 = vmatprep.subr.mxu0 0.0
        %2562 = vmatpush1.msra.mxu0 0.0
        %2563 = vmatprep.subr.mxu0 0.0
        %2564 = vmatpush1.msra.mxu0 0.0
        %2565 = vmatprep.subr.mxu0 0.0
        %2566 = vmatpush1.msra.mxu0 0.0
        %2567 = vmatprep.subr.mxu0 0.0
        %2568 = vmatpush1.msra.mxu0 0.0
        %2569 = vmatprep.subr.mxu0 0.0
        %2570 = vmatpush1.msra.mxu0 0.0
        %2571 = vmatprep.subr.mxu0 0.0
        %2572 = vmatpush1.msra.mxu0 0.0
        %2573 = vmatprep.subr.mxu0 0.0
        %2574 = vmatpush1.msra.mxu0 0.0
        %2575 = vmatprep.subr.mxu0 0.0
        %2576 = vmatpush1.msra.mxu0 0.0
        %2577 = vmatprep.subr.mxu0 0.0
        %2578 = vmatpush1.msra.mxu0 0.0
        %2579 = vmatprep.subr.mxu0 0.0
        %2580 = vmatpush1.msra.mxu0 0.0
        %2581 = vmatprep.subr.mxu0 0.0
        %2582 = vmatpush1.msra.mxu0 0.0
        %2583 = vmatprep.subr.mxu0 0.0
        %2584 = vmatpush1.msra.mxu0 0.0
        %2585 = vmatprep.subr.mxu0 0.0
        %2586 = vmatpush1.msra.mxu0 0.0
        %2587 = vmatprep.subr.mxu0 0.0
        %2588 = vmatpush1.msra.mxu0 0.0
        %2589 = vmatprep.subr.mxu0 0.0
        %2590 = vmatpush1.msra.mxu0 0.0
        %2591 = vmatprep.subr.mxu0 0.0
        %2592 = vmatpush1.msra.mxu0 0.0
        %2593 = vmatprep.subr.mxu0 0.0
        %2594 = vmatpush1.msra.mxu0 0.0
        %2595 = vmatprep.subr.mxu0 0.0
        %2596 = vmatpush1.msra.mxu0 0.0
        %2597 = vmatprep.subr.mxu0 0.0
        %2598 = vmatpush1.msra.mxu0 0.0
        %2599 = vmatprep.subr.mxu0 0.0
        %2600 = vmatpush1.msra.mxu0 0.0
        %2601 = vmatprep.subr.mxu0 0.0
        %2602 = vmatpush1.msra.mxu0 0.0
        %2603 = vmatprep.subr.mxu0 0.0
        %2604 = vmatpush1.msra.mxu0 0.0
        %2605 = vmatprep.subr.mxu0 0.0
        %2606 = vmatpush1.msra.mxu0 0.0
        %2607 = vmatprep.subr.mxu0 0.0
        %2608 = vmatpush1.msra.mxu0 0.0
        %2609 = vmatprep.subr.mxu0 0.0
        %2610 = vmatpush1.msra.mxu0 0.0
        %2611 = vmatprep.subr.mxu0 0.0
        %2612 = vmatpush1.msra.mxu0 0.0
        %2613 = vmatprep.subr.mxu0 0.0
        %2614 = vmatpush1.msra.mxu0 0.0
        %2615 = vmatprep.subr.mxu0 0.0
        %2616 = vmatpush1.msra.mxu0 0.0
        %2617 = vmatprep.subr.mxu0 0.0
        %2618 = vmatpush1.msra.mxu0 0.0
        %2619 = vmatprep.subr.mxu0 0.0
        %2620 = vmatpush1.msra.mxu0 0.0
        %2621 = vmatprep.subr.mxu0 0.0
        %2622 = vmatpush1.msra.mxu0 0.0
        %2623 = vmatprep.mubr.f32.mxu0 0.0
        %2624 = vmatmul.mubr.f32.gmra.mrb[0].mxu0 %v2557
        %v2625 = vpop.f32.mrb[0].mxu0
        %v2626 = vadd.f32 0.0, %v2625
        %v2627 = vpop.f32.mrb[0].mxu0
        %2628 = vdwg.mxu0
        %v2629 = vadd.f32 %v2389, %v2626
        %v2630 = vadd.f32 %v1548, %v2629
        %v2631 = vlaneseq
        %v2632 = vshrl.u32 %v2631, 7
        %v2633 = vsub.s32 4, %v2632
        %v2634 = vrot.slane %v1574, %v2633
        %v2635 = vadd.f32 %v2630, %v2634
        %v2636 = vsel %vm297, %v2635, 0.0
        %2637 = vadd.xlane.f32.xlu0 %v2636
        %v2638 = vpop.xlane.xlu0 %2637
        %v2639 = vmul.f32 %v2638, %v301
        %v2640 = vsub.f32 %v2635, %v2639
        %v2641 = vmul.f32 %v2640, %v2640
        %v2642 = vsel %vm297, %v2641, 0.0
        %2643 = vadd.xlane.f32.xlu0 %v2642
        %v2644 = vpop.xlane.xlu0 %2643
        %v2645 = vmul.f32 %v2644, %v301
        %v2646 = vadd.f32 %v2645, 1e-05
        %v2647 = vrsqrt.pop %v2646
        %v2648 = vmul.f32 %v2640, %v2647
        %v2649 = vlaneseq
        %v2650 = vshrl.u32 %v2649, 7
        %v2651 = vsub.s32 2, %v2650
        %v2652 = vrot.slane %v1574, %v2651
        %v2653 = vmul.f32 %v2648, %v2652
        %v2654 = vlaneseq
        %v2655 = vshrl.u32 %v2654, 7
        %v2656 = vsub.s32 3, %v2655
        %v2657 = vrot.slane %v1574, %v2656
        %v2658 = vadd.f32 %v2653, %v2657
        %v2660 = vlaneseq
        %v2661 = vshrl.u32 %v2660, 7
        %v2662 = vsub.s32 0, %v2661
        %v2663 = vrot.slane %v1576, %v2662
        %v2666 = vsel %vm297, %v2658, 0
        %2668 = vmatprep.subr.mxu0 0.0
        %2669 = vmatpush1.msra.mxu0 %v1560
        %2670 = vmatprep.subr.mxu0 0.0
        %2671 = vmatpush1.msra.mxu0 %v1561
        %2672 = vmatprep.subr.mxu0 0.0
        %2673 = vmatpush1.msra.mxu0 %v1562
        %2674 = vmatprep.subr.mxu0 0.0
        %2675 = vmatpush1.msra.mxu0 %v1563
        %2676 = vmatprep.subr.mxu0 0.0
        %2677 = vmatpush1.msra.mxu0 0.0
        %2678 = vmatprep.subr.mxu0 0.0
        %2679 = vmatpush1.msra.mxu0 0.0
        %2680 = vmatprep.subr.mxu0 0.0
        %2681 = vmatpush1.msra.mxu0 0.0
        %2682 = vmatprep.subr.mxu0 0.0
        %2683 = vmatpush1.msra.mxu0 0.0
        %2684 = vmatprep.subr.mxu0 0.0
        %2685 = vmatpush1.msra.mxu0 0.0
        %2686 = vmatprep.subr.mxu0 0.0
        %2687 = vmatpush1.msra.mxu0 0.0
        %2688 = vmatprep.subr.mxu0 0.0
        %2689 = vmatpush1.msra.mxu0 0.0
        %2690 = vmatprep.subr.mxu0 0.0
        %2691 = vmatpush1.msra.mxu0 0.0
        %2692 = vmatprep.subr.mxu0 0.0
        %2693 = vmatpush1.msra.mxu0 0.0
        %2694 = vmatprep.subr.mxu0 0.0
        %2695 = vmatpush1.msra.mxu0 0.0
        %2696 = vmatprep.subr.mxu0 0.0
        %2697 = vmatpush1.msra.mxu0 0.0
        %2698 = vmatprep.subr.mxu0 0.0
        %2699 = vmatpush1.msra.mxu0 0.0
        %2700 = vmatprep.subr.mxu0 0.0
        %2701 = vmatpush1.msra.mxu0 0.0
        %2702 = vmatprep.subr.mxu0 0.0
        %2703 = vmatpush1.msra.mxu0 0.0
        %2704 = vmatprep.subr.mxu0 0.0
        %2705 = vmatpush1.msra.mxu0 0.0
        %2706 = vmatprep.subr.mxu0 0.0
        %2707 = vmatpush1.msra.mxu0 0.0
        %2708 = vmatprep.subr.mxu0 0.0
        %2709 = vmatpush1.msra.mxu0 0.0
        %2710 = vmatprep.subr.mxu0 0.0
        %2711 = vmatpush1.msra.mxu0 0.0
        %2712 = vmatprep.subr.mxu0 0.0
        %2713 = vmatpush1.msra.mxu0 0.0
        %2714 = vmatprep.subr.mxu0 0.0
        %2715 = vmatpush1.msra.mxu0 0.0
        %2716 = vmatprep.subr.mxu0 0.0
        %2717 = vmatpush1.msra.mxu0 0.0
        %2718 = vmatprep.subr.mxu0 0.0
        %2719 = vmatpush1.msra.mxu0 0.0
        %2720 = vmatprep.subr.mxu0 0.0
        %2721 = vmatpush1.msra.mxu0 0.0
        %2722 = vmatprep.subr.mxu0 0.0
        %2723 = vmatpush1.msra.mxu0 0.0
        %2724 = vmatprep.subr.mxu0 0.0
        %2725 = vmatpush1.msra.mxu0 0.0
        %2726 = vmatprep.subr.mxu0 0.0
        %2727 = vmatpush1.msra.mxu0 0.0
        %2728 = vmatprep.subr.mxu0 0.0
        %2729 = vmatpush1.msra.mxu0 0.0
        %2730 = vmatprep.subr.mxu0 0.0
        %2731 = vmatpush1.msra.mxu0 0.0
        %2732 = vmatprep.mubr.f32.mxu0 0.0
        %2733 = vmatmul.mubr.f32.gmra.mrb[0].mxu0 %v2666
        %v2734 = vpop.f32.mrb[0].mxu0
        %v2735 = vadd.f32 %v2663, %v2734
        %v2736 = vpop.f32.mrb[0].mxu0
        %2737 = vdwg.mxu0
        %v2738 = vmul.f32 %v2735, 0.5
        %v2739 = vmul.f32 %v2735, 0.044715
        %v2740 = vmul.f32 %v2739, %v2735
        %v2741 = vmul.f32 %v2740, %v2735
        %v2742 = vadd.f32 %v2735, %v2741
        %v2743 = vmul.f32 %v2742, 0.7978846
        %v2744 = vtanh.pop %v2743
        %v2745 = vadd.f32 %v2744, 1.0
        %v2746 = vmul.f32 %v2738, %v2745
        %v2747 = vlaneseq
        %v2748 = vshrl.u32 %v2747, 7
        %v2749 = vsub.s32 5, %v2748
        %v2750 = vrot.slane %v1574, %v2749
        %v2752 = vsel %vm1474, %v2746, 0
        %2754 = vmatprep.subr.mxu0 0.0
        %2755 = vmatpush1.msra.mxu0 %v1565
        %2756 = vmatprep.subr.mxu0 0.0
        %2757 = vmatpush1.msra.mxu0 %v1566
        %2758 = vmatprep.subr.mxu0 0.0
        %2759 = vmatpush1.msra.mxu0 %v1567
        %2760 = vmatprep.subr.mxu0 0.0
        %2761 = vmatpush1.msra.mxu0 %v1568
        %2762 = vmatprep.subr.mxu0 0.0
        %2763 = vmatpush1.msra.mxu0 %v1569
        %2764 = vmatprep.subr.mxu0 0.0
        %2765 = vmatpush1.msra.mxu0 %v1570
        %2766 = vmatprep.subr.mxu0 0.0
        %2767 = vmatpush1.msra.mxu0 %v1571
        %2768 = vmatprep.subr.mxu0 0.0
        %2769 = vmatpush1.msra.mxu0 %v1572
        %2770 = vmatprep.subr.mxu0 0.0
        %2771 = vmatpush1.msra.mxu0 0.0
        %2772 = vmatprep.subr.mxu0 0.0
        %2773 = vmatpush1.msra.mxu0 0.0
        %2774 = vmatprep.subr.mxu0 0.0
        %2775 = vmatpush1.msra.mxu0 0.0
        %2776 = vmatprep.subr.mxu0 0.0
        %2777 = vmatpush1.msra.mxu0 0.0
        %2778 = vmatprep.subr.mxu0 0.0
        %2779 = vmatpush1.msra.mxu0 0.0
        %2780 = vmatprep.subr.mxu0 0.0
        %2781 = vmatpush1.msra.mxu0 0.0
        %2782 = vmatprep.subr.mxu0 0.0
        %2783 = vmatpush1.msra.mxu0 0.0
        %2784 = vmatprep.subr.mxu0 0.0
        %2785 = vmatpush1.msra.mxu0 0.0
        %2786 = vmatprep.subr.mxu0 0.0
        %2787 = vmatpush1.msra.mxu0 0.0
        %2788 = vmatprep.subr.mxu0 0.0
        %2789 = vmatpush1.msra.mxu0 0.0
        %2790 = vmatprep.subr.mxu0 0.0
        %2791 = vmatpush1.msra.mxu0 0.0
        %2792 = vmatprep.subr.mxu0 0.0
        %2793 = vmatpush1.msra.mxu0 0.0
        %2794 = vmatprep.subr.mxu0 0.0
        %2795 = vmatpush1.msra.mxu0 0.0
        %2796 = vmatprep.subr.mxu0 0.0
        %2797 = vmatpush1.msra.mxu0 0.0
        %2798 = vmatprep.subr.mxu0 0.0
        %2799 = vmatpush1.msra.mxu0 0.0
        %2800 = vmatprep.subr.mxu0 0.0
        %2801 = vmatpush1.msra.mxu0 0.0
        %2802 = vmatprep.subr.mxu0 0.0
        %2803 = vmatpush1.msra.mxu0 0.0
        %2804 = vmatprep.subr.mxu0 0.0
        %2805 = vmatpush1.msra.mxu0 0.0
        %2806 = vmatprep.subr.mxu0 0.0
        %2807 = vmatpush1.msra.mxu0 0.0
        %2808 = vmatprep.subr.mxu0 0.0
        %2809 = vmatpush1.msra.mxu0 0.0
        %2810 = vmatprep.subr.mxu0 0.0
        %2811 = vmatpush1.msra.mxu0 0.0
        %2812 = vmatprep.subr.mxu0 0.0
        %2813 = vmatpush1.msra.mxu0 0.0
        %2814 = vmatprep.subr.mxu0 0.0
        %2815 = vmatpush1.msra.mxu0 0.0
        %2816 = vmatprep.subr.mxu0 0.0
        %2817 = vmatpush1.msra.mxu0 0.0
        %2818 = vmatprep.mubr.f32.mxu0 0.0
        %2819 = vmatmul.mubr.f32.gmra.mrb[0].mxu0 %v2752
        %v2820 = vpop.f32.mrb[0].mxu0
        %v2821 = vadd.f32 %v2750, %v2820
        %v2822 = vpop.f32.mrb[0].mxu0
        %2823 = vdwg.mxu0
        %v2824 = vadd.f32 %v2635, %v2821
        %2825 = vst.msk [vmem:[%s269] sm:$0xff] %vm297, %v2824
        %s2826 = sand.u32 %s181, 1
        %s2827 = scalar_lea.sflag [#allocation3], %s2826
        %s2828 = sand.u32 %s181, 1
        %s2829 = smul.addr %s2828, 8
        %s2830 = scalar_lea.vmem [#allocation2], %s2829
        // Predicated region
        $region49: #{transformer_blocks_forward.1} parent=47 // pred_check
          %p2831 = pneg %p191
        $region50: #{transformer_blocks_forward.1} parent=47 // pred_check_branch
          %2833 = sbr.rel (%p2831) target = $region52
        $region51: #{transformer_blocks_forward.1} parent=47 // pred_region
          %s2835 = ssub.s32 128, 128
          %2836 = vsyncadd %s2827, %s2835
          %s2837 = smul.addr %s21, 128
          %s2838 = scalar_lea.hbm %s7, %s2837
          %s2840 = sshll.u32 %s2830, 4
          %s2841 = int_to_ptr.vmem [resolvable:$true] %s2840
          %2843 = dma.vmem_to_hbm [thread:$0]  %s2841, 128, %s2838, %s2827
        $region52: #{transformer_blocks_forward.1} parent=47 // pred_fallthru
          _
      $region48: #{transformer_blocks_forward.1} parent=5 // pred_fallthru
        _
      %p2844 = scmp.le.s32.totalorder 2, %s16
      // Predicated region
      $region53: #{transformer_blocks_forward.1} parent=5 // pred_check
        %p2845 = pneg %p2844
      $region54: #{transformer_blocks_forward.1} parent=5 // pred_check_branch
        %2847 = sbr.rel (%p2845) target = $region56
      $region55: #{transformer_blocks_forward.1} parent=5 // pred_region
        %s2848 = ssub.s32 %s16, 2
        // Predicated region
        $region57: #{transformer_blocks_forward.1} parent=55 // pred_check
          %p2849 = pneg %p197
        $region58: #{transformer_blocks_forward.1} parent=55 // pred_check_branch
          %2851 = sbr.rel (%p2849) target = $region60
        $region59: #{transformer_blocks_forward.1} parent=55 // pred_region
          %s2852 = sand.u32 %s182, 1
          %s2853 = scalar_lea.sflag [#allocation3], %s2852
          %s2854 = sand.u32 %s182, 1
          %s2855 = smul.addr %s2854, 8
          %s2856 = scalar_lea.vmem [#allocation2], %s2855
          %2857 = dma.done %s2853, 128
        $region60: #{transformer_blocks_forward.1} parent=55 // pred_fallthru
          _
      $region56: #{transformer_blocks_forward.1} parent=5 // pred_fallthru
        _
    $region6: #{transformer_blocks_forward.1} parent=1 // loop_footer
      %s20 = sadd.s32 1, %s16
    $region7: #{transformer_blocks_forward.1} parent=1 // loop_footer_branch
      %15 = sbr.rel target = $region3
    $region8: #{transformer_blocks_forward.1} parent=1 // loop_exit
      _
    %2858 = vsyncpa [#allocation3], 1
    %s2859 = scalar_lea.sflag [#allocation3], 1
    %2860 = vsyncpa %s2859, 1

</llo_original>
